<compile_context>
chip_gen: v6e
topology: v6e:2x2x1
jax: 0.10.0
libtpu: 0.0.40
codegen_flags: <defaults>
</compile_context>

<pallas_src>
import jax
import jax.numpy as jnp
from jax.experimental import pallas as pl
from jax.experimental.pallas import tpu as pltpu


def stnkd_kernel(x_ref,                       # (BB, TN, K)   bf16, channels-last
                 w1_ref, c1_ref,              # (K, 64)    bf16, (1, 64)   f32
                 w2_ref, c2_ref,              # (64, 128)  bf16, (1, 128)  f32
                 w3_ref, c3_ref,              # (128,1024) bf16, (1, 1024) f32
                 wf1_ref, c4_ref,             # (1024,512) bf16, (1, 512)  f32
                 wf2_ref, c5_ref,             # (512, 256) bf16, (1, 256)  f32
                 wf3_ref, b3_ref,             # (256, k*k) bf16, (1, k*k)  f32 (bias+iden)
                 o_ref,                       # (BB, 1, k*k) f32
                 gmax_ref):                   # scratch: (BB, 1024) f32 running max
    n = pl.program_id(1)
    n_last = pl.num_programs(1) - 1
    BB, TN, K = x_ref.shape

    @pl.when(n == 0)
    def _init():
        gmax_ref[...] = jnp.full(gmax_ref.shape, -jnp.inf, gmax_ref.dtype)

    # ---- conv1/conv2 (1x1 convs == matmuls) on flattened rows ----
    # bf16 MXU inputs, f32 accumulation; BN scales folded into the weights.
    x = x_ref[...].reshape(BB * TN, K)                                   # bf16
    h = jnp.dot(x, w1_ref[...], preferred_element_type=jnp.float32)
    h = jnp.maximum(h + c1_ref[...], 0.0)                                # (BB*TN, 64)   f32
    h = jnp.dot(h.astype(jnp.bfloat16), w2_ref[...],
                preferred_element_type=jnp.float32)
    h = jnp.maximum(h + c2_ref[...], 0.0)                                # (BB*TN, 128)  f32

    # ---- conv3: bias + ReLU deferred past the max (relu(x+c) is monotone) ----
    h = jnp.dot(h.astype(jnp.bfloat16), w3_ref[...],
                preferred_element_type=jnp.float32)                      # (BB*TN, 1024) f32

    # ---- torch.max(x, 2): fused running max over the points axis ----
    tile_max = jnp.max(h.reshape(BB, TN, 1024), axis=1)                  # (BB, 1024) f32
    gmax_ref[...] = jnp.maximum(gmax_ref[...], tile_max)

    # ---- FC head + output, only once all point tiles are pooled ----
    @pl.when(n == n_last)
    def _head():
        # Deferred conv3 bias + ReLU, applied once on the pooled tensor.
        g = jnp.maximum(gmax_ref[...] + c3_ref[...], 0.0).astype(jnp.bfloat16)
        f = jnp.dot(g, wf1_ref[...], preferred_element_type=jnp.float32)
        f = jnp.maximum(f + c4_ref[...], 0.0)                            # (BB, 512)
        f = jnp.dot(f.astype(jnp.bfloat16), wf2_ref[...],
                    preferred_element_type=jnp.float32)
        f = jnp.maximum(f + c5_ref[...], 0.0)                            # (BB, 256)
        out = jnp.dot(f.astype(jnp.bfloat16), wf3_ref[...],
                      preferred_element_type=jnp.float32)
        o_ref[...] = (out + b3_ref[...]).reshape(o_ref.shape)            # (BB, 1, k*k)


def fold_params(params, k):
    """Fold eval-mode BN scales into matmul weights (bf16) and the identity into
    the fc3 bias. Biases stay f32."""
    (w1, a1, c1, w2, a2, c2, w3, a3, c3,
     wf1, a4, c4, wf2, a5, c5, wf3, bf3) = params
    bf16 = jnp.bfloat16
    iden = jnp.eye(k, dtype=jnp.float32).reshape(1, k * k)
    return ((w1 * a1).astype(bf16), c1,
            (w2 * a2).astype(bf16), c2,
            (w3 * a3).astype(bf16), c3,
            (wf1 * a4).astype(bf16), c4,
            (wf2 * a5).astype(bf16), c5,
            wf3.astype(bf16), bf3 + iden)


def stnkd_forward(x_bcn, params, k, *, block_b=None, block_n=None):
    """x_bcn: (B, k, N) float32 in PyTorch Conv1d layout. Returns (B, k, k)."""
    B, C, N = x_bcn.shape
    assert C == k

    # channels-first -> channels-last + bf16 cast in a single host pass.
    # TODO(synk): move this transpose into the kernel to save one HBM round trip.
    x = jnp.transpose(x_bcn, (0, 2, 1)).astype(jnp.bfloat16)             # (B, N, k)

    folded = fold_params(params, k)

    # Batch tile: keep >= 2 batch grid steps whenever B >= 2 so the "parallel"
    # axis can shard across both TensorCores on v7x (single-TC parts unaffected).
    if block_b is not None:
        BB = block_b
    else:
        target = max(1, min(8, B // 2)) if B >= 2 else 1
        BB = max(d for d in range(1, target + 1) if B % d == 0)
    assert B % BB == 0

    # Points tile: bound the (BB*TN, 1024) f32 conv3 tile (~4 KiB per row) so it
    # stays comfortably inside scoped VMEM on every generation; allow a bigger
    # tile on 128-MiB parts (v5e/v6e) to amortize per-step overhead.
    try:
        vmem_cap = int(pltpu.get_tpu_info().vmem_capacity_bytes)
    except Exception:
        vmem_cap = 64 << 20
    max_rows = 4096 if vmem_cap > (64 << 20) else 2048     # 16 MB / 8 MB conv3 tile
    if block_n is not None:
        TN = block_n
    else:
        tn_cap = max(128, ((max_rows // BB) // 128) * 128)
        TN = min(tn_cap, ((N + 127) // 128) * 128)

    # Pad the points axis to a multiple of TN by replicating the last point;
    # replicated points cannot change the max-pool, so no in-kernel masking.
    N_pad = ((N + TN - 1) // TN) * TN
    if N_pad != N:
        x = jnp.pad(x, ((0, 0), (0, N_pad - N), (0, 0)), mode='edge')

    grid = (B // BB, N_pad // TN)

    # Weight/bias blocks never change index -> single-buffer them (saves VMEM).
    def const_spec(arr):
        return pl.BlockSpec(arr.shape, lambda b, n: (0,) * arr.ndim,
                            pipeline_mode=pl.Buffered(1))

    out = pl.pallas_call(
        stnkd_kernel,
        out_shape=jax.ShapeDtypeStruct((B, 1, k * k), jnp.float32),
        grid_spec=pltpu.PrefetchScalarGridSpec(
            num_scalar_prefetch=0,
            grid=grid,
            in_specs=[pl.BlockSpec((BB, TN, k), lambda b, n: (b, n, 0))] +
                     [const_spec(a) for a in folded],
            out_specs=pl.BlockSpec((BB, 1, k * k), lambda b, n: (b, 0, 0)),
            scratch_shapes=[pltpu.VMEM((BB, 1024), jnp.float32)],
        ),
        compiler_params=pltpu.CompilerParams(
            dimension_semantics=("parallel", "arbitrary"),
            vmem_limit_bytes=48 << 20),
    )(x, *folded)

    return out.reshape(B, k, k)


def make_params(key, k):
    """Deterministic synthetic parameters.

    Matmul weights are stored (in, out) (transpose of torch's (out, in)).
    a_i / c_i are the exact fold of eval-mode BatchNorm (gamma, beta, running
    mean/var) together with the preceding conv/linear bias.
    """
    ks = jax.random.split(key, 16)
    n = lambda kk, shape, s: (s * jax.random.normal(kk, shape)).astype(jnp.float32)
    w1 = n(ks[0], (k, 64), 0.05)
    a1 = (1.0 + n(ks[1], (1, 64), 0.1))
    c1 = n(ks[2], (1, 64), 0.1)
    w2 = n(ks[3], (64, 128), 0.05)
    a2 = (1.0 + n(ks[4], (1, 128), 0.1))
    c2 = n(ks[5], (1, 128), 0.1)
    w3 = n(ks[6], (128, 1024), 0.05)
    a3 = (1.0 + n(ks[7], (1, 1024), 0.1))
    c3 = n(ks[8], (1, 1024), 0.1)
    wf1 = n(ks[9], (1024, 512), 0.03)
    a4 = (1.0 + n(ks[10], (1, 512), 0.1))
    c4 = n(ks[11], (1, 512), 0.1)
    wf2 = n(ks[12], (512, 256), 0.03)
    a5 = (1.0 + n(ks[13], (1, 256), 0.1))
    c5 = n(ks[14], (1, 256), 0.1)
    wf3 = n(ks[15], (256, k * k), 0.02)
    bf3 = jnp.zeros((1, k * k), jnp.float32)
    return (w1, a1, c1, w2, a2, c2, w3, a3, c3,
            wf1, a4, c4, wf2, a5, c5, wf3, bf3)


def stnkd_reference(x_bcn, params, k):
    """Pure-JAX f32 reference mirroring the PyTorch forward (BN in eval mode)."""
    (w1, a1, c1, w2, a2, c2, w3, a3, c3,
     wf1, a4, c4, wf2, a5, c5, wf3, bf3) = params
    B = x_bcn.shape[0]
    x = jnp.transpose(x_bcn, (0, 2, 1)).astype(jnp.float32)              # (B, N, k)
    h = jnp.maximum(jnp.einsum('bnc,cd->bnd', x, w1) * a1 + c1, 0.0)
    h = jnp.maximum(jnp.einsum('bnc,cd->bnd', h, w2) * a2 + c2, 0.0)
    h = jnp.maximum(jnp.einsum('bnc,cd->bnd', h, w3) * a3 + c3, 0.0)
    g = jnp.max(h, axis=1)                                               # (B, 1024)
    f = jnp.maximum(g @ wf1 * a4 + c4, 0.0)
    f = jnp.maximum(f @ wf2 * a5 + c5, 0.0)
    out = f @ wf3 + bf3
    out = out + jnp.eye(k, dtype=jnp.float32).reshape(1, k * k)
    return out.reshape(B, k, k)


if __name__ == "__main__":
    # Small shapes: batch=4, transform dim k=16, N=200 points (exercises the
    # N-padding path and a >=2-step batch grid).
    B, K, N = 4, 16, 200
    key = jax.random.PRNGKey(0)
    kx, kp = jax.random.split(key)
    x = jax.random.normal(kx, (B, K, N), dtype=jnp.float32)              # torch (B, k, N)
    params = make_params(kp, K)

    out = stnkd_forward(x, params, K)
    out = jax.block_until_ready(out)

    ref = stnkd_reference(x, params, K)
    assert out.shape == (B, K, K)
    # bf16 MXU inputs with f32 accumulation -> loosened tolerance vs f32 reference.
    assert jnp.allclose(out, ref, atol=3e-2, rtol=3e-2), "mismatch vs reference"
    print("KERNEL_OK")
</pallas_src>

<mosaic_0001>
module attributes {stable_mosaic.version = 11 : i64} {
  func.func @stnkd_kernel(%arg0: i32, %arg1: i32, %arg2: memref<2x256x16xbf16, #tpu.memory_space<vmem>>, %arg3: memref<16x64xbf16, #tpu.memory_space<vmem>>, %arg4: memref<1x64xf32, #tpu.memory_space<vmem>>, %arg5: memref<64x128xbf16, #tpu.memory_space<vmem>>, %arg6: memref<1x128xf32, #tpu.memory_space<vmem>>, %arg7: memref<128x1024xbf16, #tpu.memory_space<vmem>>, %arg8: memref<1x1024xf32, #tpu.memory_space<vmem>>, %arg9: memref<1024x512xbf16, #tpu.memory_space<vmem>>, %arg10: memref<1x512xf32, #tpu.memory_space<vmem>>, %arg11: memref<512x256xbf16, #tpu.memory_space<vmem>>, %arg12: memref<1x256xf32, #tpu.memory_space<vmem>>, %arg13: memref<256x256xbf16, #tpu.memory_space<vmem>>, %arg14: memref<1x256xf32, #tpu.memory_space<vmem>>, %arg15: memref<2x1x256xf32, #tpu.memory_space<vmem>>, %arg16: memref<2x1024xf32, #tpu.memory_space<vmem>>) attributes {dimension_semantics = [#tpu.dimension_semantics<parallel>, #tpu.dimension_semantics<arbitrary>], iteration_bounds = array<i64: 2, 1>, scalar_prefetch = 0 : i64, scratch_operands = 1 : i64, tpu.core_type = #tpu.core_type<tc>, window_params = [{transform_indices = @transform_0, window_bounds = array<i64: 2, 256, 16>}, {pipeline_mode = #tpu.pipeline_mode<synchronous>, transform_indices = @transform_1, window_bounds = array<i64: 16, 64>}, {pipeline_mode = #tpu.pipeline_mode<synchronous>, transform_indices = @transform_2, window_bounds = array<i64: 1, 64>}, {pipeline_mode = #tpu.pipeline_mode<synchronous>, transform_indices = @transform_3, window_bounds = array<i64: 64, 128>}, {pipeline_mode = #tpu.pipeline_mode<synchronous>, transform_indices = @transform_4, window_bounds = array<i64: 1, 128>}, {pipeline_mode = #tpu.pipeline_mode<synchronous>, transform_indices = @transform_5, window_bounds = array<i64: 128, 1024>}, {pipeline_mode = #tpu.pipeline_mode<synchronous>, transform_indices = @transform_6, window_bounds = array<i64: 1, 1024>}, {pipeline_mode = #tpu.pipeline_mode<synchronous>, transform_indices = @transform_7, window_bounds = array<i64: 1024, 512>}, {pipeline_mode = #tpu.pipeline_mode<synchronous>, transform_indices = @transform_8, window_bounds = array<i64: 1, 512>}, {pipeline_mode = #tpu.pipeline_mode<synchronous>, transform_indices = @transform_9, window_bounds = array<i64: 512, 256>}, {pipeline_mode = #tpu.pipeline_mode<synchronous>, transform_indices = @transform_10, window_bounds = array<i64: 1, 256>}, {pipeline_mode = #tpu.pipeline_mode<synchronous>, transform_indices = @transform_11, window_bounds = array<i64: 256, 256>}, {pipeline_mode = #tpu.pipeline_mode<synchronous>, transform_indices = @transform_12, window_bounds = array<i64: 1, 256>}, {transform_indices = @transform_13, window_bounds = array<i64: 2, 1, 256>}]} {
    %c0_i32 = arith.constant 0 : i32
    %0 = arith.cmpi eq, %arg1, %c0_i32 : i32
    %1 = arith.extui %0 : i1 to i32
    %c0_i32_0 = arith.constant 0 : i32
    %2 = arith.cmpi ne, %1, %c0_i32_0 : i32
    scf.if %2 {
      %cst_24 = arith.constant 0xFF800000 : f32
      %31 = vector.broadcast %cst_24 : f32 to vector<2x1024xf32>
      %c0_25 = arith.constant 0 : index
      %c0_26 = arith.constant 0 : index
      %32 = vector.load %arg16[%c0_25, %c0_26] : memref<2x1024xf32, #tpu.memory_space<vmem>>, vector<2x1024xf32>
      tpu.vector_store %arg16[%c0_25, %c0_26], %31 {strides = array<i32>} : memref<2x1024xf32, #tpu.memory_space<vmem>>, vector<2x1024xf32>,
    } else {
    }
    %c0 = arith.constant 0 : index
    %c0_1 = arith.constant 0 : index
    %c0_2 = arith.constant 0 : index
    %3 = vector.load %arg2[%c0, %c0_1, %c0_2] : memref<2x256x16xbf16, #tpu.memory_space<vmem>>, vector<2x256x16xbf16>
    %4 = vector.shape_cast %3 : vector<2x256x16xbf16> to vector<512x16xbf16>
    %c0_3 = arith.constant 0 : index
    %c0_4 = arith.constant 0 : index
    %5 = vector.load %arg3[%c0_3, %c0_4] : memref<16x64xbf16, #tpu.memory_space<vmem>>, vector<16x64xbf16>
    %cst = arith.constant dense<0.000000e+00> : vector<512x64xf32>
    %6 = tpu.matmul %4, %5, %cst {dimension_numbers = #tpu.dot_dimension_numbers<[1], [0], [0], [1], [0, 0, 1, 1], [], []>} : vector<512x16xbf16>, vector<16x64xbf16>, vector<512x64xf32> -> vector<512x64xf32>
    %c0_5 = arith.constant 0 : index
    %c0_6 = arith.constant 0 : index
    %7 = vector.load %arg4[%c0_5, %c0_6] : memref<1x64xf32, #tpu.memory_space<vmem>>, vector<1x64xf32>
    %8 = vector.broadcast %7 : vector<1x64xf32> to vector<512x64xf32>
    %9 = arith.addf %6, %8 : vector<512x64xf32>
    %cst_7 = arith.constant 0.000000e+00 : f32
    %10 = vector.broadcast %cst_7 : f32 to vector<512x64xf32>
    %11 = arith.maximumf %9, %10 : vector<512x64xf32>
    %12 = arith.truncf %11 : vector<512x64xf32> to vector<512x64xbf16>
    %c0_8 = arith.constant 0 : index
    %c0_9 = arith.constant 0 : index
    %13 = vector.load %arg5[%c0_8, %c0_9] : memref<64x128xbf16, #tpu.memory_space<vmem>>, vector<64x128xbf16>
    %cst_10 = arith.constant dense<0.000000e+00> : vector<512x128xf32>
    %14 = tpu.matmul %12, %13, %cst_10 {dimension_numbers = #tpu.dot_dimension_numbers<[1], [0], [0], [1], [0, 0, 1, 1], [], []>} : vector<512x64xbf16>, vector<64x128xbf16>, vector<512x128xf32> -> vector<512x128xf32>
    %c0_11 = arith.constant 0 : index
    %c0_12 = arith.constant 0 : index
    %15 = vector.load %arg6[%c0_11, %c0_12] : memref<1x128xf32, #tpu.memory_space<vmem>>, vector<1x128xf32>
    %16 = vector.broadcast %15 : vector<1x128xf32> to vector<512x128xf32>
    %17 = arith.addf %14, %16 : vector<512x128xf32>
    %cst_13 = arith.constant 0.000000e+00 : f32
    %18 = vector.broadcast %cst_13 : f32 to vector<512x128xf32>
    %19 = arith.maximumf %17, %18 : vector<512x128xf32>
    %20 = arith.truncf %19 : vector<512x128xf32> to vector<512x128xbf16>
    %c0_14 = arith.constant 0 : index
    %c0_15 = arith.constant 0 : index
    %21 = vector.load %arg7[%c0_14, %c0_15] : memref<128x1024xbf16, #tpu.memory_space<vmem>>, vector<128x1024xbf16>
    %cst_16 = arith.constant dense<0.000000e+00> : vector<512x1024xf32>
    %22 = tpu.matmul %20, %21, %cst_16 {dimension_numbers = #tpu.dot_dimension_numbers<[1], [0], [0], [1], [0, 0, 1, 1], [], []>} : vector<512x128xbf16>, vector<128x1024xbf16>, vector<512x1024xf32> -> vector<512x1024xf32>
    %23 = vector.shape_cast %22 : vector<512x1024xf32> to vector<2x256x1024xf32>
    %cst_17 = arith.constant dense<0xFF800000> : vector<2x1024xf32>
    %24 = vector.multi_reduction <maximumf>, %23, %cst_17 [1] : vector<2x256x1024xf32> to vector<2x1024xf32>
    %c0_18 = arith.constant 0 : index
    %c0_19 = arith.constant 0 : index
    %25 = vector.load %arg16[%c0_18, %c0_19] : memref<2x1024xf32, #tpu.memory_space<vmem>>, vector<2x1024xf32>
    %26 = arith.maximumf %25, %24 : vector<2x1024xf32>
    %c0_20 = arith.constant 0 : index
    %c0_21 = arith.constant 0 : index
    %27 = vector.load %arg16[%c0_20, %c0_21] : memref<2x1024xf32, #tpu.memory_space<vmem>>, vector<2x1024xf32>
    tpu.vector_store %arg16[%c0_20, %c0_21], %26 {strides = array<i32>} : memref<2x1024xf32, #tpu.memory_space<vmem>>, vector<2x1024xf32>,
    %c0_i32_22 = arith.constant 0 : i32
    %28 = arith.cmpi eq, %arg1, %c0_i32_22 : i32
    %29 = arith.extui %28 : i1 to i32
    %c0_i32_23 = arith.constant 0 : i32
    %30 = arith.cmpi ne, %29, %c0_i32_23 : i32
    scf.if %30 {
      %c0_24 = arith.constant 0 : index
      %c0_25 = arith.constant 0 : index
      %31 = vector.load %arg16[%c0_24, %c0_25] : memref<2x1024xf32, #tpu.memory_space<vmem>>, vector<2x1024xf32>
      %c0_26 = arith.constant 0 : index
      %c0_27 = arith.constant 0 : index
      %32 = vector.load %arg8[%c0_26, %c0_27] : memref<1x1024xf32, #tpu.memory_space<vmem>>, vector<1x1024xf32>
      %33 = vector.broadcast %32 : vector<1x1024xf32> to vector<2x1024xf32>
      %34 = arith.addf %31, %33 : vector<2x1024xf32>
      %cst_28 = arith.constant 0.000000e+00 : f32
      %35 = vector.broadcast %cst_28 : f32 to vector<2x1024xf32>
      %36 = arith.maximumf %34, %35 : vector<2x1024xf32>
      %37 = arith.truncf %36 : vector<2x1024xf32> to vector<2x1024xbf16>
      %c0_29 = arith.constant 0 : index
      %c0_30 = arith.constant 0 : index
      %38 = vector.load %arg9[%c0_29, %c0_30] : memref<1024x512xbf16, #tpu.memory_space<vmem>>, vector<1024x512xbf16>
      %cst_31 = arith.constant dense<0.000000e+00> : vector<2x512xf32>
      %39 = tpu.matmul %37, %38, %cst_31 {dimension_numbers = #tpu.dot_dimension_numbers<[1], [0], [0], [1], [0, 0, 1, 1], [], []>} : vector<2x1024xbf16>, vector<1024x512xbf16>, vector<2x512xf32> -> vector<2x512xf32>
      %c0_32 = arith.constant 0 : index
      %c0_33 = arith.constant 0 : index
      %40 = vector.load %arg10[%c0_32, %c0_33] : memref<1x512xf32, #tpu.memory_space<vmem>>, vector<1x512xf32>
      %41 = vector.broadcast %40 : vector<1x512xf32> to vector<2x512xf32>
      %42 = arith.addf %39, %41 : vector<2x512xf32>
      %cst_34 = arith.constant 0.000000e+00 : f32
      %43 = vector.broadcast %cst_34 : f32 to vector<2x512xf32>
      %44 = arith.maximumf %42, %43 : vector<2x512xf32>
      %45 = arith.truncf %44 : vector<2x512xf32> to vector<2x512xbf16>
      %c0_35 = arith.constant 0 : index
      %c0_36 = arith.constant 0 : index
      %46 = vector.load %arg11[%c0_35, %c0_36] : memref<512x256xbf16, #tpu.memory_space<vmem>>, vector<512x256xbf16>
      %cst_37 = arith.constant dense<0.000000e+00> : vector<2x256xf32>
      %47 = tpu.matmul %45, %46, %cst_37 {dimension_numbers = #tpu.dot_dimension_numbers<[1], [0], [0], [1], [0, 0, 1, 1], [], []>} : vector<2x512xbf16>, vector<512x256xbf16>, vector<2x256xf32> -> vector<2x256xf32>
      %c0_38 = arith.constant 0 : index
      %c0_39 = arith.constant 0 : index
      %48 = vector.load %arg12[%c0_38, %c0_39] : memref<1x256xf32, #tpu.memory_space<vmem>>, vector<1x256xf32>
      %49 = vector.broadcast %48 : vector<1x256xf32> to vector<2x256xf32>
      %50 = arith.addf %47, %49 : vector<2x256xf32>
      %cst_40 = arith.constant 0.000000e+00 : f32
      %51 = vector.broadcast %cst_40 : f32 to vector<2x256xf32>
      %52 = arith.maximumf %50, %51 : vector<2x256xf32>
      %53 = arith.truncf %52 : vector<2x256xf32> to vector<2x256xbf16>
      %c0_41 = arith.constant 0 : index
      %c0_42 = arith.constant 0 : index
      %54 = vector.load %arg13[%c0_41, %c0_42] : memref<256x256xbf16, #tpu.memory_space<vmem>>, vector<256x256xbf16>
      %cst_43 = arith.constant dense<0.000000e+00> : vector<2x256xf32>
      %55 = tpu.matmul %53, %54, %cst_43 {dimension_numbers = #tpu.dot_dimension_numbers<[1], [0], [0], [1], [0, 0, 1, 1], [], []>} : vector<2x256xbf16>, vector<256x256xbf16>, vector<2x256xf32> -> vector<2x256xf32>
      %c0_44 = arith.constant 0 : index
      %c0_45 = arith.constant 0 : index
      %56 = vector.load %arg14[%c0_44, %c0_45] : memref<1x256xf32, #tpu.memory_space<vmem>>, vector<1x256xf32>
      %57 = vector.broadcast %56 : vector<1x256xf32> to vector<2x256xf32>
      %58 = arith.addf %55, %57 : vector<2x256xf32>
      %59 = vector.shape_cast %58 : vector<2x256xf32> to vector<2x1x256xf32>
      %c0_46 = arith.constant 0 : index
      %c0_47 = arith.constant 0 : index
      %c0_48 = arith.constant 0 : index
      %60 = vector.load %arg15[%c0_46, %c0_47, %c0_48] : memref<2x1x256xf32, #tpu.memory_space<vmem>>, vector<2x1x256xf32>
      tpu.vector_store %arg15[%c0_46, %c0_47, %c0_48], %59 {strides = array<i32>} : memref<2x1x256xf32, #tpu.memory_space<vmem>>, vector<2x1x256xf32>,
    } else {
    }
    return
  }
  func.func @transform_0(%arg0: i32, %arg1: i32) -> (i32, i32, i32) {
    %c0_i32 = arith.constant 0 : i32
    %c0_i32_0 = arith.constant 0 : i32
    return %arg0, %arg1, %c0_i32 : i32, i32, i32
  }
  func.func @transform_1(%arg0: i32, %arg1: i32) -> (i32, i32) {
    %c0_i32 = arith.constant 0 : i32
    %c0_i32_0 = arith.constant 0 : i32
    %c0_i32_1 = arith.constant 0 : i32
    return %c0_i32, %c0_i32_0 : i32, i32
  }
  func.func @transform_2(%arg0: i32, %arg1: i32) -> (i32, i32) {
    %c0_i32 = arith.constant 0 : i32
    %c0_i32_0 = arith.constant 0 : i32
    %c0_i32_1 = arith.constant 0 : i32
    return %c0_i32, %c0_i32_0 : i32, i32
  }
  func.func @transform_3(%arg0: i32, %arg1: i32) -> (i32, i32) {
    %c0_i32 = arith.constant 0 : i32
    %c0_i32_0 = arith.constant 0 : i32
    %c0_i32_1 = arith.constant 0 : i32
    return %c0_i32, %c0_i32_0 : i32, i32
  }
  func.func @transform_4(%arg0: i32, %arg1: i32) -> (i32, i32) {
    %c0_i32 = arith.constant 0 : i32
    %c0_i32_0 = arith.constant 0 : i32
    %c0_i32_1 = arith.constant 0 : i32
    return %c0_i32, %c0_i32_0 : i32, i32
  }
  func.func @transform_5(%arg0: i32, %arg1: i32) -> (i32, i32) {
    %c0_i32 = arith.constant 0 : i32
    %c0_i32_0 = arith.constant 0 : i32
    %c0_i32_1 = arith.constant 0 : i32
    return %c0_i32, %c0_i32_0 : i32, i32
  }
  func.func @transform_6(%arg0: i32, %arg1: i32) -> (i32, i32) {
    %c0_i32 = arith.constant 0 : i32
    %c0_i32_0 = arith.constant 0 : i32
    %c0_i32_1 = arith.constant 0 : i32
    return %c0_i32, %c0_i32_0 : i32, i32
  }
  func.func @transform_7(%arg0: i32, %arg1: i32) -> (i32, i32) {
    %c0_i32 = arith.constant 0 : i32
    %c0_i32_0 = arith.constant 0 : i32
    %c0_i32_1 = arith.constant 0 : i32
    return %c0_i32, %c0_i32_0 : i32, i32
  }
  func.func @transform_8(%arg0: i32, %arg1: i32) -> (i32, i32) {
    %c0_i32 = arith.constant 0 : i32
    %c0_i32_0 = arith.constant 0 : i32
    %c0_i32_1 = arith.constant 0 : i32
    return %c0_i32, %c0_i32_0 : i32, i32
  }
  func.func @transform_9(%arg0: i32, %arg1: i32) -> (i32, i32) {
    %c0_i32 = arith.constant 0 : i32
    %c0_i32_0 = arith.constant 0 : i32
    %c0_i32_1 = arith.constant 0 : i32
    return %c0_i32, %c0_i32_0 : i32, i32
  }
  func.func @transform_10(%arg0: i32, %arg1: i32) -> (i32, i32) {
    %c0_i32 = arith.constant 0 : i32
    %c0_i32_0 = arith.constant 0 : i32
    %c0_i32_1 = arith.constant 0 : i32
    return %c0_i32, %c0_i32_0 : i32, i32
  }
  func.func @transform_11(%arg0: i32, %arg1: i32) -> (i32, i32) {
    %c0_i32 = arith.constant 0 : i32
    %c0_i32_0 = arith.constant 0 : i32
    %c0_i32_1 = arith.constant 0 : i32
    return %c0_i32, %c0_i32_0 : i32, i32
  }
  func.func @transform_12(%arg0: i32, %arg1: i32) -> (i32, i32) {
    %c0_i32 = arith.constant 0 : i32
    %c0_i32_0 = arith.constant 0 : i32
    %c0_i32_1 = arith.constant 0 : i32
    return %c0_i32, %c0_i32_0 : i32, i32
  }
  func.func @transform_13(%arg0: i32, %arg1: i32) -> (i32, i32, i32) {
    %c0_i32 = arith.constant 0 : i32
    %c0_i32_0 = arith.constant 0 : i32
    %c0_i32_1 = arith.constant 0 : i32
    return %arg0, %c0_i32, %c0_i32_0 : i32, i32, i32
  }
}

</mosaic_0001>

<llo_original>
// kernel: tpu_custom_call.1
$region0: #{tpu_custom_call.1}
  #allocation0 [shape = 'u32[]', space=smem, size = 0x4, offset = 0x4, fixed_abs, tag = 'smem constant byte address 0x4 - core index']
  #allocation1 [shape = 'u32[144,128]{1,0:T(1,128)}', space=vmem, size = 0x12000, scoped, tag = 'internal scratch']
  #allocation2 [shape = 'f32[2,1024]{1,0:T(2,128)}', space=vmem, size = 0x2000, scoped, tag = 'scratch operand']
  %s0 = inlined_call_operand.vmem [shape: bf16[4,256,16], index: 0, kind: input, shape index: {}]
  %s1 = inlined_call_operand.vmem [shape: bf16[16,64], index: 1, kind: input, shape index: {}]
  %s2 = inlined_call_operand.vmem [shape: f32[1,64], index: 2, kind: input, shape index: {}]
  %s3 = inlined_call_operand.vmem [shape: bf16[64,128], index: 3, kind: input, shape index: {}]
  %s4 = inlined_call_operand.vmem [shape: f32[1,128], index: 4, kind: input, shape index: {}]
  %s5 = inlined_call_operand.vmem [shape: bf16[128,1024], index: 5, kind: input, shape index: {}]
  %s6 = inlined_call_operand.vmem [shape: f32[1,1024], index: 6, kind: input, shape index: {}]
  %s7 = inlined_call_operand.hbm [shape: bf16[1024,512], index: 7, kind: input, shape index: {}]
  %s8 = inlined_call_operand.vmem [shape: f32[1,512], index: 8, kind: input, shape index: {}]
  %s9 = inlined_call_operand.hbm [shape: bf16[512,256], index: 9, kind: input, shape index: {}]
  %s10 = inlined_call_operand.vmem [shape: f32[1,256], index: 10, kind: input, shape index: {}]
  %s11 = inlined_call_operand.hbm [shape: bf16[256,256], index: 11, kind: input, shape index: {}]
  %s12 = inlined_call_operand.vmem [shape: f32[1,256], index: 12, kind: input, shape index: {}]
  %s13 = inlined_call_operand.hbm [shape: f32[4,1,256], index: 13, kind: output, shape index: {}]
  %s14 = sld [smem:[#allocation0]]
  $region105: #{tpu_custom_call.1} parent=0
    _
  %s16 = ssub.s32 1, %s14
  %s17 = scalar_select 0, %s16, %s14
  $region1: #{tpu_custom_call.1} parent=0
    #allocation3 [shape = 'u8[1048576]{0}', space=vmem, size = 0x100000, scoped, tag = 'input window, operand 7, single buffered']
    #allocation4 [shape = 's32[2]{0}', space=sflag, size = 0x8, scoped, tag = 'scoped memory for tpu_custom_call.1']
    #allocation5 [shape = 's32[2]{0}', space=sflag, size = 0x8, scoped, tag = 'scoped memory for tpu_custom_call.1']
    #allocation6 [shape = 'u8[262144]{0}', space=vmem, size = 0x40000, scoped, tag = 'input window, operand 9, single buffered']
    #allocation7 [shape = 's32[1]{0}', space=sflag, size = 0x4, scoped, tag = 'scoped memory for tpu_custom_call.1']
    #allocation8 [shape = 'u8[131072]{0}', space=vmem, size = 0x20000, scoped, tag = 'input window, operand 11, single buffered']
    #allocation9 [shape = 'u8[4096]{0}', space=vmem, size = 0x1000, scoped, tag = 'output window, operand 0']
    %18 = vsyncpa [#allocation4], 0
    %19 = vsyncpa [#allocation7], 0
    %20 = vsyncpa [#allocation5], 0
    %s21 = scalar_lea.sflag [#allocation5], 1
    %22 = vsyncpa %s21, 0
    loop: start=0, step=1, limit=4
    $region2: #{tpu_custom_call.1} parent=1 // loop_pre_header
      _
    $region3: #{tpu_custom_call.1} parent=1 // loop_header
      %s24 = sphi 0, %s28
      %p25 = scmp.ge.s32.totalorder %s24, 4
      %s31 = sphi 0, %s43
      %s32 = sphi 0, %s39
      %s33 = sphi 0, %s31
      %s34 = sphi 0, %s32
      %s35 = sphi 0, %s33
      %s36 = sphi 0, %s34
      %s48 = sphi 0, %s50
      %s51 = sphi 0, %s48
      %s52 = sphi 0, %s51
      %s68 = sphi 0, %s52
      %s72 = sphi 0, %s72
      %s74 = sphi 0, %s72
      %s75 = sphi 0, %s74
      %s89 = sphi 0, %s75
      %s93 = sphi 0, %s93
      %s95 = sphi 0, %s93
      %s96 = sphi 0, %s95
      %s110 = sphi 0, %s96
      %s114 = sphi 0, %s114
      %s116 = sphi 0, %s114
      %s117 = sphi 0, %s116
      %s131 = sphi 0, %s117
      %s135 = sphi 0, %s135
      %s137 = sphi 0, %s135
      %s138 = sphi 0, %s137
      %s152 = sphi 0, %s138
      %s156 = sphi 0, %s156
      %s158 = sphi 0, %s156
      %s159 = sphi 0, %s158
      %s173 = sphi 0, %s159
      %s177 = sphi 0, %s177
      %s179 = sphi 0, %s177
      %s180 = sphi 0, %s179
      %s194 = sphi 0, %s180
      %s198 = sphi 0, %s198
      %s200 = sphi 0, %s198
      %s201 = sphi 0, %s200
      %s215 = sphi 0, %s201
      %s219 = sphi 0, %s219
      %s221 = sphi 0, %s219
      %s222 = sphi 0, %s221
      %s236 = sphi 0, %s222
      %s240 = sphi 0, %s240
      %s242 = sphi 0, %s240
      %s243 = sphi 0, %s242
      %s257 = sphi 0, %s243
      %s261 = sphi 0, %s261
      %s263 = sphi 0, %s261
      %s264 = sphi 0, %s263
      %s278 = sphi 0, %s264
      %s282 = sphi 0, %s282
      %s284 = sphi 0, %s282
      %s285 = sphi 0, %s284
      %s299 = sphi 0, %s285
      %s303 = sphi 0, %s303
      %s305 = sphi 0, %s303
      %s306 = sphi 0, %s305
      %s320 = sphi 0, %s306
      %s326 = sphi 0, %s328
      %s329 = sphi 0, %s326
      %s330 = sphi 0, %s329
      %s346 = sphi 0, %s330
    $region4: #{tpu_custom_call.1} parent=1 // loop_header_branch
      %27 = sbr.rel (%p25) target = $region8
    $region5: #{tpu_custom_call.1} parent=1 // loop_body
      %s29 = ssub.s32 %s24, 1
      %s30 = ssub.s32 %s24, 2
      %s37 = sadd.s32 1, %s32
      %p38 = scmp.ge.s32.totalorder %s37, 1
      %s39 = scalar_select %p38, 0, %s37
      %s40 = sadd.s32 1, %s31
      %s41 = scalar_select %p38, %s40, %s31
      %p42 = scmp.ge.s32.totalorder %s41, 2
      %s43 = scalar_select %p42, 0, %s41
      %s44 = ssub.s32 %s31, %s43
      %s45 = ssub.s32 %s32, %s39
      %s46 = sor.u32 %s44, %s45
      %p47 = scmp.eq.s32.totalorder %s46, 0
      %s49 = sadd.s32 %s48, 1
      %s50 = scalar_select %p47, %s48, %s49
      %p53 = pneg %p47
      %p54 = scmp.eq.s32.totalorder %s24, 1
      %p55 = por %p53, %p54
      %p56 = scmp.ne.s32.totalorder %s48, %s51
      %p57 = scmp.eq.s32.totalorder %s24, 0
      %p58 = por %p56, %p57
      %p59 = scmp.ne.s32.totalorder %s48, %s51
      %p60 = scmp.eq.s32.totalorder %s29, 1
      %p61 = por %p59, %p60
      %p62 = scmp.ne.s32.totalorder %s51, %s52
      %p63 = scmp.eq.s32.totalorder %s29, 0
      %p64 = por %p62, %p63
      %p65 = scmp.ne.s32.totalorder %s51, %s52
      %p66 = scmp.eq.s32.totalorder %s30, 1
      %p67 = por %p65, %p66
      %p69 = scmp.ne.s32.totalorder %s52, %s68
      %p70 = scmp.eq.s32.totalorder %s30, 0
      %p71 = por %p69, %p70
      %s73 = sadd.s32 %s72, 1
      %p76 = scmp.eq.s32.totalorder %s24, 1
      %p77 = scmp.ne.s32.totalorder %s72, %s74
      %p78 = scmp.eq.s32.totalorder %s24, 0
      %p79 = por %p77, %p78
      %p80 = scmp.ne.s32.totalorder %s72, %s74
      %p81 = scmp.eq.s32.totalorder %s29, 1
      %p82 = por %p80, %p81
      %p83 = scmp.ne.s32.totalorder %s74, %s75
      %p84 = scmp.eq.s32.totalorder %s29, 0
      %p85 = por %p83, %p84
      %p86 = scmp.ne.s32.totalorder %s74, %s75
      %p87 = scmp.eq.s32.totalorder %s30, 1
      %p88 = por %p86, %p87
      %p90 = scmp.ne.s32.totalorder %s75, %s89
      %p91 = scmp.eq.s32.totalorder %s30, 0
      %p92 = por %p90, %p91
      %s94 = sadd.s32 %s93, 1
      %p97 = scmp.eq.s32.totalorder %s24, 1
      %p98 = scmp.ne.s32.totalorder %s93, %s95
      %p99 = scmp.eq.s32.totalorder %s24, 0
      %p100 = por %p98, %p99
      %p101 = scmp.ne.s32.totalorder %s93, %s95
      %p102 = scmp.eq.s32.totalorder %s29, 1
      %p103 = por %p101, %p102
      %p104 = scmp.ne.s32.totalorder %s95, %s96
      %p105 = scmp.eq.s32.totalorder %s29, 0
      %p106 = por %p104, %p105
      %p107 = scmp.ne.s32.totalorder %s95, %s96
      %p108 = scmp.eq.s32.totalorder %s30, 1
      %p109 = por %p107, %p108
      %p111 = scmp.ne.s32.totalorder %s96, %s110
      %p112 = scmp.eq.s32.totalorder %s30, 0
      %p113 = por %p111, %p112
      %s115 = sadd.s32 %s114, 1
      %p118 = scmp.eq.s32.totalorder %s24, 1
      %p119 = scmp.ne.s32.totalorder %s114, %s116
      %p120 = scmp.eq.s32.totalorder %s24, 0
      %p121 = por %p119, %p120
      %p122 = scmp.ne.s32.totalorder %s114, %s116
      %p123 = scmp.eq.s32.totalorder %s29, 1
      %p124 = por %p122, %p123
      %p125 = scmp.ne.s32.totalorder %s116, %s117
      %p126 = scmp.eq.s32.totalorder %s29, 0
      %p127 = por %p125, %p126
      %p128 = scmp.ne.s32.totalorder %s116, %s117
      %p129 = scmp.eq.s32.totalorder %s30, 1
      %p130 = por %p128, %p129
      %p132 = scmp.ne.s32.totalorder %s117, %s131
      %p133 = scmp.eq.s32.totalorder %s30, 0
      %p134 = por %p132, %p133
      %s136 = sadd.s32 %s135, 1
      %p139 = scmp.eq.s32.totalorder %s24, 1
      %p140 = scmp.ne.s32.totalorder %s135, %s137
      %p141 = scmp.eq.s32.totalorder %s24, 0
      %p142 = por %p140, %p141
      %p143 = scmp.ne.s32.totalorder %s135, %s137
      %p144 = scmp.eq.s32.totalorder %s29, 1
      %p145 = por %p143, %p144
      %p146 = scmp.ne.s32.totalorder %s137, %s138
      %p147 = scmp.eq.s32.totalorder %s29, 0
      %p148 = por %p146, %p147
      %p149 = scmp.ne.s32.totalorder %s137, %s138
      %p150 = scmp.eq.s32.totalorder %s30, 1
      %p151 = por %p149, %p150
      %p153 = scmp.ne.s32.totalorder %s138, %s152
      %p154 = scmp.eq.s32.totalorder %s30, 0
      %p155 = por %p153, %p154
      %s157 = sadd.s32 %s156, 1
      %p160 = scmp.eq.s32.totalorder %s24, 1
      %p161 = scmp.ne.s32.totalorder %s156, %s158
      %p162 = scmp.eq.s32.totalorder %s24, 0
      %p163 = por %p161, %p162
      %p164 = scmp.ne.s32.totalorder %s156, %s158
      %p165 = scmp.eq.s32.totalorder %s29, 1
      %p166 = por %p164, %p165
      %p167 = scmp.ne.s32.totalorder %s158, %s159
      %p168 = scmp.eq.s32.totalorder %s29, 0
      %p169 = por %p167, %p168
      %p170 = scmp.ne.s32.totalorder %s158, %s159
      %p171 = scmp.eq.s32.totalorder %s30, 1
      %p172 = por %p170, %p171
      %p174 = scmp.ne.s32.totalorder %s159, %s173
      %p175 = scmp.eq.s32.totalorder %s30, 0
      %p176 = por %p174, %p175
      %s178 = sadd.s32 %s177, 1
      %p181 = scmp.eq.s32.totalorder %s24, 1
      %p182 = scmp.ne.s32.totalorder %s177, %s179
      %p183 = scmp.eq.s32.totalorder %s24, 0
      %p184 = por %p182, %p183
      %p185 = scmp.ne.s32.totalorder %s177, %s179
      %p186 = scmp.eq.s32.totalorder %s29, 1
      %p187 = por %p185, %p186
      %p188 = scmp.ne.s32.totalorder %s179, %s180
      %p189 = scmp.eq.s32.totalorder %s29, 0
      %p190 = por %p188, %p189
      %p191 = scmp.ne.s32.totalorder %s179, %s180
      %p192 = scmp.eq.s32.totalorder %s30, 1
      %p193 = por %p191, %p192
      %p195 = scmp.ne.s32.totalorder %s180, %s194
      %p196 = scmp.eq.s32.totalorder %s30, 0
      %p197 = por %p195, %p196
      %s199 = sadd.s32 %s198, 1
      %p202 = scmp.eq.s32.totalorder %s24, 1
      %p203 = scmp.ne.s32.totalorder %s198, %s200
      %p204 = scmp.eq.s32.totalorder %s24, 0
      %p205 = por %p203, %p204
      %p206 = scmp.ne.s32.totalorder %s198, %s200
      %p207 = scmp.eq.s32.totalorder %s29, 1
      %p208 = por %p206, %p207
      %p209 = scmp.ne.s32.totalorder %s200, %s201
      %p210 = scmp.eq.s32.totalorder %s29, 0
      %p211 = por %p209, %p210
      %p212 = scmp.ne.s32.totalorder %s200, %s201
      %p213 = scmp.eq.s32.totalorder %s30, 1
      %p214 = por %p212, %p213
      %p216 = scmp.ne.s32.totalorder %s201, %s215
      %p217 = scmp.eq.s32.totalorder %s30, 0
      %p218 = por %p216, %p217
      %s220 = sadd.s32 %s219, 1
      %p223 = scmp.eq.s32.totalorder %s24, 1
      %p224 = scmp.ne.s32.totalorder %s219, %s221
      %p225 = scmp.eq.s32.totalorder %s24, 0
      %p226 = por %p224, %p225
      %p227 = scmp.ne.s32.totalorder %s219, %s221
      %p228 = scmp.eq.s32.totalorder %s29, 1
      %p229 = por %p227, %p228
      %p230 = scmp.ne.s32.totalorder %s221, %s222
      %p231 = scmp.eq.s32.totalorder %s29, 0
      %p232 = por %p230, %p231
      %p233 = scmp.ne.s32.totalorder %s221, %s222
      %p234 = scmp.eq.s32.totalorder %s30, 1
      %p235 = por %p233, %p234
      %p237 = scmp.ne.s32.totalorder %s222, %s236
      %p238 = scmp.eq.s32.totalorder %s30, 0
      %p239 = por %p237, %p238
      %s241 = sadd.s32 %s240, 1
      %p244 = scmp.eq.s32.totalorder %s24, 1
      %p245 = scmp.ne.s32.totalorder %s240, %s242
      %p246 = scmp.eq.s32.totalorder %s24, 0
      %p247 = por %p245, %p246
      %p248 = scmp.ne.s32.totalorder %s240, %s242
      %p249 = scmp.eq.s32.totalorder %s29, 1
      %p250 = por %p248, %p249
      %p251 = scmp.ne.s32.totalorder %s242, %s243
      %p252 = scmp.eq.s32.totalorder %s29, 0
      %p253 = por %p251, %p252
      %p254 = scmp.ne.s32.totalorder %s242, %s243
      %p255 = scmp.eq.s32.totalorder %s30, 1
      %p256 = por %p254, %p255
      %p258 = scmp.ne.s32.totalorder %s243, %s257
      %p259 = scmp.eq.s32.totalorder %s30, 0
      %p260 = por %p258, %p259
      %s262 = sadd.s32 %s261, 1
      %p265 = scmp.eq.s32.totalorder %s24, 1
      %p266 = scmp.ne.s32.totalorder %s261, %s263
      %p267 = scmp.eq.s32.totalorder %s24, 0
      %p268 = por %p266, %p267
      %p269 = scmp.ne.s32.totalorder %s261, %s263
      %p270 = scmp.eq.s32.totalorder %s29, 1
      %p271 = por %p269, %p270
      %p272 = scmp.ne.s32.totalorder %s263, %s264
      %p273 = scmp.eq.s32.totalorder %s29, 0
      %p274 = por %p272, %p273
      %p275 = scmp.ne.s32.totalorder %s263, %s264
      %p276 = scmp.eq.s32.totalorder %s30, 1
      %p277 = por %p275, %p276
      %p279 = scmp.ne.s32.totalorder %s264, %s278
      %p280 = scmp.eq.s32.totalorder %s30, 0
      %p281 = por %p279, %p280
      %s283 = sadd.s32 %s282, 1
      %p286 = scmp.eq.s32.totalorder %s24, 1
      %p287 = scmp.ne.s32.totalorder %s282, %s284
      %p288 = scmp.eq.s32.totalorder %s24, 0
      %p289 = por %p287, %p288
      %p290 = scmp.ne.s32.totalorder %s282, %s284
      %p291 = scmp.eq.s32.totalorder %s29, 1
      %p292 = por %p290, %p291
      %p293 = scmp.ne.s32.totalorder %s284, %s285
      %p294 = scmp.eq.s32.totalorder %s29, 0
      %p295 = por %p293, %p294
      %p296 = scmp.ne.s32.totalorder %s284, %s285
      %p297 = scmp.eq.s32.totalorder %s30, 1
      %p298 = por %p296, %p297
      %p300 = scmp.ne.s32.totalorder %s285, %s299
      %p301 = scmp.eq.s32.totalorder %s30, 0
      %p302 = por %p300, %p301
      %s304 = sadd.s32 %s303, 1
      %p307 = scmp.eq.s32.totalorder %s24, 1
      %p308 = scmp.ne.s32.totalorder %s303, %s305
      %p309 = scmp.eq.s32.totalorder %s24, 0
      %p310 = por %p308, %p309
      %p311 = scmp.ne.s32.totalorder %s303, %s305
      %p312 = scmp.eq.s32.totalorder %s29, 1
      %p313 = por %p311, %p312
      %p314 = scmp.ne.s32.totalorder %s305, %s306
      %p315 = scmp.eq.s32.totalorder %s29, 0
      %p316 = por %p314, %p315
      %p317 = scmp.ne.s32.totalorder %s305, %s306
      %p318 = scmp.eq.s32.totalorder %s30, 1
      %p319 = por %p317, %p318
      %p321 = scmp.ne.s32.totalorder %s306, %s320
      %p322 = scmp.eq.s32.totalorder %s30, 0
      %p323 = por %p321, %p322
      %s324 = ssub.s32 %s31, %s43
      %p325 = scmp.eq.s32.totalorder %s324, 0
      %s327 = sadd.s32 %s326, 1
      %s328 = scalar_select %p325, %s326, %s327
      %p331 = pneg %p325
      %p332 = scmp.eq.s32.totalorder %s24, 1
      %p333 = por %p331, %p332
      %p334 = scmp.ne.s32.totalorder %s326, %s329
      %p335 = scmp.eq.s32.totalorder %s24, 0
      %p336 = por %p334, %p335
      %p337 = scmp.ne.s32.totalorder %s326, %s329
      %p338 = scmp.eq.s32.totalorder %s29, 1
      %p339 = por %p337, %p338
      %p340 = scmp.ne.s32.totalorder %s329, %s330
      %p341 = scmp.eq.s32.totalorder %s29, 0
      %p342 = por %p340, %p341
      %p343 = scmp.ne.s32.totalorder %s329, %s330
      %p344 = scmp.eq.s32.totalorder %s30, 1
      %p345 = por %p343, %p344
      %p347 = scmp.ne.s32.totalorder %s330, %s346
      %p348 = scmp.eq.s32.totalorder %s30, 0
      %p349 = por %p347, %p348
      %p350 = scmp.le.s32.totalorder 1, %s24
      %p351 = scmp.lt.s32.totalorder %s24, 3
      %p352 = pnand %p350, %p351
      %p353 = pneg %p352
      // Predicated region
      $region9: #{tpu_custom_call.1} parent=5 // pred_check
        _
      $region10: #{tpu_custom_call.1} parent=5 // pred_check_branch
        %355 = sbr.rel (%p352) target = $region12
      $region11: #{tpu_custom_call.1} parent=5 // pred_region
        %s356 = ssub.s32 %s24, 1
        // Predicated region
        $region13: #{tpu_custom_call.1} parent=11 // pred_check
          %p357 = pneg %p85
        $region14: #{tpu_custom_call.1} parent=11 // pred_check_branch
          %359 = sbr.rel (%p357) target = $region16
        $region15: #{tpu_custom_call.1} parent=11 // pred_region
          _
        $region16: #{tpu_custom_call.1} parent=11 // pred_fallthru
          _
        // Predicated region
        $region17: #{tpu_custom_call.1} parent=11 // pred_check
          %p360 = pneg %p106
        $region18: #{tpu_custom_call.1} parent=11 // pred_check_branch
          %362 = sbr.rel (%p360) target = $region20
        $region19: #{tpu_custom_call.1} parent=11 // pred_region
          _
        $region20: #{tpu_custom_call.1} parent=11 // pred_fallthru
          _
        // Predicated region
        $region21: #{tpu_custom_call.1} parent=11 // pred_check
          %p363 = pneg %p127
        $region22: #{tpu_custom_call.1} parent=11 // pred_check_branch
          %365 = sbr.rel (%p363) target = $region24
        $region23: #{tpu_custom_call.1} parent=11 // pred_region
          _
        $region24: #{tpu_custom_call.1} parent=11 // pred_fallthru
          _
        // Predicated region
        $region25: #{tpu_custom_call.1} parent=11 // pred_check
          %p366 = pneg %p148
        $region26: #{tpu_custom_call.1} parent=11 // pred_check_branch
          %368 = sbr.rel (%p366) target = $region28
        $region27: #{tpu_custom_call.1} parent=11 // pred_region
          _
        $region28: #{tpu_custom_call.1} parent=11 // pred_fallthru
          _
        // Predicated region
        $region29: #{tpu_custom_call.1} parent=11 // pred_check
          %p369 = pneg %p169
        $region30: #{tpu_custom_call.1} parent=11 // pred_check_branch
          %371 = sbr.rel (%p369) target = $region32
        $region31: #{tpu_custom_call.1} parent=11 // pred_region
          _
        $region32: #{tpu_custom_call.1} parent=11 // pred_fallthru
          _
        // Predicated region
        $region33: #{tpu_custom_call.1} parent=11 // pred_check
          %p372 = pneg %p190
        $region34: #{tpu_custom_call.1} parent=11 // pred_check_branch
          %374 = sbr.rel (%p372) target = $region36
        $region35: #{tpu_custom_call.1} parent=11 // pred_region
          _
        $region36: #{tpu_custom_call.1} parent=11 // pred_fallthru
          _
        // Predicated region
        $region37: #{tpu_custom_call.1} parent=11 // pred_check
          %p375 = pneg %p211
        $region38: #{tpu_custom_call.1} parent=11 // pred_check_branch
          %377 = sbr.rel (%p375) target = $region40
        $region39: #{tpu_custom_call.1} parent=11 // pred_region
          %s379 = ssub.s32 32768, 32768
          %380 = vsyncadd [#allocation4], %s379
          %s381 = sshll.u32 [#allocation3], 4
          %s382 = int_to_ptr.vmem [resolvable:$true] %s381
          %387 = dma.hbm_to_vmem [thread:$0]  %s7, 32768, %s382, [#allocation4], 256, 256, 16
        $region40: #{tpu_custom_call.1} parent=11 // pred_fallthru
          _
        // Predicated region
        $region41: #{tpu_custom_call.1} parent=11 // pred_check
          %p388 = pneg %p232
        $region42: #{tpu_custom_call.1} parent=11 // pred_check_branch
          %390 = sbr.rel (%p388) target = $region44
        $region43: #{tpu_custom_call.1} parent=11 // pred_region
          _
        $region44: #{tpu_custom_call.1} parent=11 // pred_fallthru
          _
        // Predicated region
        $region45: #{tpu_custom_call.1} parent=11 // pred_check
          %p391 = pneg %p253
        $region46: #{tpu_custom_call.1} parent=11 // pred_check_branch
          %393 = sbr.rel (%p391) target = $region48
        $region47: #{tpu_custom_call.1} parent=11 // pred_region
          %s395 = ssub.s32 8192, 8192
          %396 = vsyncadd [#allocation7], %s395
          %s397 = sshll.u32 [#allocation6], 4
          %s398 = int_to_ptr.vmem [resolvable:$true] %s397
          %403 = dma.hbm_to_vmem [thread:$0]  %s9, 8192, %s398, [#allocation7], 128, 128, 8
        $region48: #{tpu_custom_call.1} parent=11 // pred_fallthru
          _
        // Predicated region
        $region49: #{tpu_custom_call.1} parent=11 // pred_check
          %p404 = pneg %p274
        $region50: #{tpu_custom_call.1} parent=11 // pred_check_branch
          %406 = sbr.rel (%p404) target = $region52
        $region51: #{tpu_custom_call.1} parent=11 // pred_region
          _
        $region52: #{tpu_custom_call.1} parent=11 // pred_fallthru
          _
        // Predicated region
        $region53: #{tpu_custom_call.1} parent=11 // pred_check
          %p407 = pneg %p295
        $region54: #{tpu_custom_call.1} parent=11 // pred_check_branch
          %409 = sbr.rel (%p407) target = $region56
        $region55: #{tpu_custom_call.1} parent=11 // pred_region
          %s411 = ssub.s32 4096, 4096
          %412 = vsyncadd [#allocation7], %s411
          %s413 = sshll.u32 [#allocation8], 4
          %s414 = int_to_ptr.vmem [resolvable:$true] %s413
          %419 = dma.hbm_to_vmem [thread:$0]  %s11, 4096, %s414, [#allocation7], 128, 128, 8
        $region56: #{tpu_custom_call.1} parent=11 // pred_fallthru
          _
        // Predicated region
        $region57: #{tpu_custom_call.1} parent=11 // pred_check
          %p420 = pneg %p316
        $region58: #{tpu_custom_call.1} parent=11 // pred_check_branch
          %422 = sbr.rel (%p420) target = $region60
        $region59: #{tpu_custom_call.1} parent=11 // pred_region
          _
        $region60: #{tpu_custom_call.1} parent=11 // pred_fallthru
          _
      $region12: #{tpu_custom_call.1} parent=5 // pred_fallthru
        _
      %p423 = scmp.lt.s32.totalorder %s24, 2
      // Predicated region
      $region61: #{tpu_custom_call.1} parent=5 // pred_check
        %p424 = pneg %p423
      $region62: #{tpu_custom_call.1} parent=5 // pred_check_branch
        %426 = sbr.rel (%p424) target = $region64
      $region63: #{tpu_custom_call.1} parent=5 // pred_region
        // Predicated region
        $region65: #{tpu_custom_call.1} parent=63 // pred_check
          %p427 = pneg %p58
        $region66: #{tpu_custom_call.1} parent=63 // pred_check_branch
          %429 = sbr.rel (%p427) target = $region68
        $region67: #{tpu_custom_call.1} parent=63 // pred_region
          %s430 = smul.u32 2, %s31
          %s431 = smul.u32 32, %s32
          %p432 = scmp.lt.s32.totalorder %s430, 3
          %s433 = scalar_select %p432, %s430, 3
          %p434 = scmp.lt.s32.totalorder %s431, 31
          %s435 = scalar_select %p434, %s431, 31
          %s436 = smul.addr %s433, 32
          %s437 = sadd.s32 %s435, %s436
          %s438 = smul.addr %s437, 4
          %s439 = scalar_lea.vmem %s0, %s438
          %s440 = smul.u32 2, %s31
          %s441 = smul.u32 32, %s32
        $region68: #{tpu_custom_call.1} parent=63 // pred_fallthru
          _
      $region64: #{tpu_custom_call.1} parent=5 // pred_fallthru
        _
      %p442 = scmp.le.s32.totalorder 1, %s24
      %p443 = scmp.lt.s32.totalorder %s24, 3
      %p444 = pnand %p442, %p443
      %p445 = pneg %p444
      // Predicated region
      $region69: #{tpu_custom_call.1} parent=5 // pred_check
        _
      $region70: #{tpu_custom_call.1} parent=5 // pred_check_branch
        %447 = sbr.rel (%p444) target = $region72
      $region71: #{tpu_custom_call.1} parent=5 // pred_region
        %s448 = ssub.s32 %s24, 1
        // Predicated region
        $region73: #{tpu_custom_call.1} parent=71 // pred_check
          %p449 = pneg %p211
        $region74: #{tpu_custom_call.1} parent=71 // pred_check_branch
          %451 = sbr.rel (%p449) target = $region76
        $region75: #{tpu_custom_call.1} parent=71 // pred_region
          %452 = dma.done [#allocation4], 32768
        $region76: #{tpu_custom_call.1} parent=71 // pred_fallthru
          _
        // Predicated region
        $region77: #{tpu_custom_call.1} parent=71 // pred_check
          %p453 = pneg %p253
        $region78: #{tpu_custom_call.1} parent=71 // pred_check_branch
          %455 = sbr.rel (%p453) target = $region80
        $region79: #{tpu_custom_call.1} parent=71 // pred_region
          %456 = dma.done [#allocation7], 8192
        $region80: #{tpu_custom_call.1} parent=71 // pred_fallthru
          _
        // Predicated region
        $region81: #{tpu_custom_call.1} parent=71 // pred_check
          %p457 = pneg %p295
        $region82: #{tpu_custom_call.1} parent=71 // pred_check_branch
          %459 = sbr.rel (%p457) target = $region84
        $region83: #{tpu_custom_call.1} parent=71 // pred_region
          %460 = dma.done [#allocation7], 4096
        $region84: #{tpu_custom_call.1} parent=71 // pred_fallthru
          _
        %s461 = smul.u32 2, %s33
        %s462 = smul.u32 32, %s34
        %p463 = scmp.lt.s32.totalorder %s461, 3
        %s464 = scalar_select %p463, %s461, 3
        %p465 = scmp.lt.s32.totalorder %s462, 31
        %s466 = scalar_select %p465, %s462, 31
        %s467 = smul.addr %s464, 32
        %s468 = sadd.s32 %s466, %s467
        %s469 = smul.addr %s468, 4
        %s470 = scalar_lea.vmem %s0, %s469
        %p471 = pneg %p64
        %p472 = pneg %p61
        %p473 = pneg %p85
        %p474 = pneg %p82
        %p475 = pneg %p106
        %p476 = pneg %p103
        %p477 = pneg %p127
        %p478 = pneg %p124
        %p479 = pneg %p148
        %p480 = pneg %p145
        %p481 = pneg %p169
        %p482 = pneg %p166
        %p483 = pneg %p190
        %p484 = pneg %p187
        %p485 = pneg %p211
        %p486 = pneg %p208
        %p487 = pneg %p232
        %p488 = pneg %p229
        %p489 = pneg %p253
        %p490 = pneg %p250
        %p491 = pneg %p274
        %p492 = pneg %p271
        %p493 = pneg %p295
        %p494 = pneg %p292
        %p495 = pneg %p316
        %p496 = pneg %p313
        %p497 = pneg %p342
        %p498 = pneg %p339
        %s499 = sand.u32 %s329, 1
        %s500 = scalar_lea.sflag [#allocation5], %s499
        %s501 = sand.u32 %s329, 1
        %s502 = smul.addr %s501, 4
        %s503 = scalar_lea.vmem [#allocation9], %s502
        %s504 = smul.u32 2, %s33
        %s505 = smul.u32 32, %s34
        %p506 = scmp.lt.s32.totalorder %s504, 3
        %s507 = scalar_select %p506, %s504, 3
        %p508 = scmp.lt.s32.totalorder %s505, 31
        %s509 = scalar_select %p508, %s505, 31
        %s510 = smul.addr %s507, 32
        %s511 = sadd.s32 %s509, %s510
        %s512 = smul.addr %s511, 4
        %s513 = scalar_lea.vmem %s0, %s512
        %s514 = smul.u32 2, %s33
        %s515 = smul.u32 32, %s34
        %s516 = smul.u32 2, %s33
        %p518 = scmp.eq.s32.totalorder %s34, 0
        // Predicated region
        $region85: #{tpu_custom_call.1} parent=71 // pred_check
          %p519 = pneg %p518
        $region86: #{tpu_custom_call.1} parent=71 // pred_check_branch
          %521 = sbr.rel (%p519) target = $region88
        $region87: #{tpu_custom_call.1} parent=71 // pred_region
          %522 = vst [vmem:[#allocation2] sm:$0xff] -inf
          %523 = vst [vmem:[#allocation2 + $0x8] sm:$0xff] -inf
        $region88: #{tpu_custom_call.1} parent=71 // pred_fallthru
          _
        %v524 = vld [vmem:[%s513] sm:$0xf]
        %v525 = vld [vmem:[%s513 + $0x4] sm:$0xf]
        %v526 = vld [vmem:[%s513 + $0x8] sm:$0xf]
        %v527 = vld [vmem:[%s513 + $0xc] sm:$0xf]
        %v528 = vld [vmem:[%s513 + $0x10] sm:$0xf]
        %v529 = vld [vmem:[%s513 + $0x14] sm:$0xf]
        %v530 = vld [vmem:[%s513 + $0x18] sm:$0xf]
        %v531 = vld [vmem:[%s513 + $0x1c] sm:$0xf]
        %v532 = vld [vmem:[%s513 + $0x20] sm:$0xf]
        %v533 = vld [vmem:[%s513 + $0x24] sm:$0xf]
        %v534 = vld [vmem:[%s513 + $0x28] sm:$0xf]
        %v535 = vld [vmem:[%s513 + $0x2c] sm:$0xf]
        %v536 = vld [vmem:[%s513 + $0x30] sm:$0xf]
        %v537 = vld [vmem:[%s513 + $0x34] sm:$0xf]
        %v538 = vld [vmem:[%s513 + $0x38] sm:$0xf]
        %v539 = vld [vmem:[%s513 + $0x3c] sm:$0xf]
        %v540 = vld [vmem:[%s513 + $0x40] sm:$0xf]
        %v541 = vld [vmem:[%s513 + $0x44] sm:$0xf]
        %v542 = vld [vmem:[%s513 + $0x48] sm:$0xf]
        %v543 = vld [vmem:[%s513 + $0x4c] sm:$0xf]
        %v544 = vld [vmem:[%s513 + $0x50] sm:$0xf]
        %v545 = vld [vmem:[%s513 + $0x54] sm:$0xf]
        %v546 = vld [vmem:[%s513 + $0x58] sm:$0xf]
        %v547 = vld [vmem:[%s513 + $0x5c] sm:$0xf]
        %v548 = vld [vmem:[%s513 + $0x60] sm:$0xf]
        %v549 = vld [vmem:[%s513 + $0x64] sm:$0xf]
        %v550 = vld [vmem:[%s513 + $0x68] sm:$0xf]
        %v551 = vld [vmem:[%s513 + $0x6c] sm:$0xf]
        %v552 = vld [vmem:[%s513 + $0x70] sm:$0xf]
        %v553 = vld [vmem:[%s513 + $0x74] sm:$0xf]
        %v554 = vld [vmem:[%s513 + $0x78] sm:$0xf]
        %v555 = vld [vmem:[%s513 + $0x7c] sm:$0xf]
        %v556 = vld [vmem:[%s513 + $0x80] sm:$0xf]
        %v557 = vld [vmem:[%s513 + $0x84] sm:$0xf]
        %v558 = vld [vmem:[%s513 + $0x88] sm:$0xf]
        %v559 = vld [vmem:[%s513 + $0x8c] sm:$0xf]
        %v560 = vld [vmem:[%s513 + $0x90] sm:$0xf]
        %v561 = vld [vmem:[%s513 + $0x94] sm:$0xf]
        %v562 = vld [vmem:[%s513 + $0x98] sm:$0xf]
        %v563 = vld [vmem:[%s513 + $0x9c] sm:$0xf]
        %v564 = vld [vmem:[%s513 + $0xa0] sm:$0xf]
        %v565 = vld [vmem:[%s513 + $0xa4] sm:$0xf]
        %v566 = vld [vmem:[%s513 + $0xa8] sm:$0xf]
        %v567 = vld [vmem:[%s513 + $0xac] sm:$0xf]
        %v568 = vld [vmem:[%s513 + $0xb0] sm:$0xf]
        %v569 = vld [vmem:[%s513 + $0xb4] sm:$0xf]
        %v570 = vld [vmem:[%s513 + $0xb8] sm:$0xf]
        %v571 = vld [vmem:[%s513 + $0xbc] sm:$0xf]
        %v572 = vld [vmem:[%s513 + $0xc0] sm:$0xf]
        %v573 = vld [vmem:[%s513 + $0xc4] sm:$0xf]
        %v574 = vld [vmem:[%s513 + $0xc8] sm:$0xf]
        %v575 = vld [vmem:[%s513 + $0xcc] sm:$0xf]
        %v576 = vld [vmem:[%s513 + $0xd0] sm:$0xf]
        %v577 = vld [vmem:[%s513 + $0xd4] sm:$0xf]
        %v578 = vld [vmem:[%s513 + $0xd8] sm:$0xf]
        %v579 = vld [vmem:[%s513 + $0xdc] sm:$0xf]
        %v580 = vld [vmem:[%s513 + $0xe0] sm:$0xf]
        %v581 = vld [vmem:[%s513 + $0xe4] sm:$0xf]
        %v582 = vld [vmem:[%s513 + $0xe8] sm:$0xf]
        %v583 = vld [vmem:[%s513 + $0xec] sm:$0xf]
        %v584 = vld [vmem:[%s513 + $0xf0] sm:$0xf]
        %v585 = vld [vmem:[%s513 + $0xf4] sm:$0xf]
        %v586 = vld [vmem:[%s513 + $0xf8] sm:$0xf]
        %v587 = vld [vmem:[%s513 + $0xfc] sm:$0xf]
        %v588 = vld [vmem:[%s1] sm:$0xf]
        %v589 = vld [vmem:[%s1 + $0x4] sm:$0xf]
        %v590 = vld [vmem:[%s2] sm:$0x1]
        %v592 = vlaneseq
        %v593 = vshrl.u32 %v592, 7
        %v594 = vsub.s32 0, %v593
        %v595 = vrot.slane %v590, %v594
        %v661 = vunpack.c.l.b16 %v524
        %v662 = vunpack.c.l.b16 %v525
        %v663 = vunpack.c.l.b16 %v526
        %v664 = vunpack.c.l.b16 %v527
        %v665 = vunpack.c.l.b16 %v528
        %v666 = vunpack.c.l.b16 %v529
        %v667 = vunpack.c.l.b16 %v530
        %v668 = vunpack.c.l.b16 %v531
        %v669 = vunpack.c.l.b16 %v532
        %v670 = vunpack.c.l.b16 %v533
        %v671 = vunpack.c.l.b16 %v534
        %v672 = vunpack.c.l.b16 %v535
        %v673 = vunpack.c.l.b16 %v536
        %v674 = vunpack.c.l.b16 %v537
        %v675 = vunpack.c.l.b16 %v538
        %v676 = vunpack.c.l.b16 %v539
        %v677 = vunpack.c.l.b16 %v540
        %v678 = vunpack.c.l.b16 %v541
        %v679 = vunpack.c.l.b16 %v542
        %v680 = vunpack.c.l.b16 %v543
        %v681 = vunpack.c.l.b16 %v544
        %v682 = vunpack.c.l.b16 %v545
        %v683 = vunpack.c.l.b16 %v546
        %v684 = vunpack.c.l.b16 %v547
        %v685 = vunpack.c.l.b16 %v548
        %v686 = vunpack.c.l.b16 %v549
        %v687 = vunpack.c.l.b16 %v550
        %v688 = vunpack.c.l.b16 %v551
        %v689 = vunpack.c.l.b16 %v552
        %v690 = vunpack.c.l.b16 %v553
        %v691 = vunpack.c.l.b16 %v554
        %v692 = vunpack.c.l.b16 %v555
        %v693 = vunpack.c.l.b16 %v556
        %v694 = vunpack.c.l.b16 %v557
        %v695 = vunpack.c.l.b16 %v558
        %v696 = vunpack.c.l.b16 %v559
        %v697 = vunpack.c.l.b16 %v560
        %v698 = vunpack.c.l.b16 %v561
        %v699 = vunpack.c.l.b16 %v562
        %v700 = vunpack.c.l.b16 %v563
        %v701 = vunpack.c.l.b16 %v564
        %v702 = vunpack.c.l.b16 %v565
        %v703 = vunpack.c.l.b16 %v566
        %v704 = vunpack.c.l.b16 %v567
        %v705 = vunpack.c.l.b16 %v568
        %v706 = vunpack.c.l.b16 %v569
        %v707 = vunpack.c.l.b16 %v570
        %v708 = vunpack.c.l.b16 %v571
        %v709 = vunpack.c.l.b16 %v572
        %v710 = vunpack.c.l.b16 %v573
        %v711 = vunpack.c.l.b16 %v574
        %v712 = vunpack.c.l.b16 %v575
        %v713 = vunpack.c.l.b16 %v576
        %v714 = vunpack.c.l.b16 %v577
        %v715 = vunpack.c.l.b16 %v578
        %v716 = vunpack.c.l.b16 %v579
        %v717 = vunpack.c.l.b16 %v580
        %v718 = vunpack.c.l.b16 %v581
        %v719 = vunpack.c.l.b16 %v582
        %v720 = vunpack.c.l.b16 %v583
        %v721 = vunpack.c.l.b16 %v584
        %v722 = vunpack.c.l.b16 %v585
        %v723 = vunpack.c.l.b16 %v586
        %v724 = vunpack.c.l.b16 %v587
        %v725 = vpack.c.b16 %v662, %v661
        %v726 = vpack.c.b16 %v664, %v663
        %v727 = vpack.c.b16 %v666, %v665
        %v728 = vpack.c.b16 %v668, %v667
        %v729 = vpack.c.b16 %v670, %v669
        %v730 = vpack.c.b16 %v672, %v671
        %v731 = vpack.c.b16 %v674, %v673
        %v732 = vpack.c.b16 %v676, %v675
        %v733 = vpack.c.b16 %v678, %v677
        %v734 = vpack.c.b16 %v680, %v679
        %v735 = vpack.c.b16 %v682, %v681
        %v736 = vpack.c.b16 %v684, %v683
        %v737 = vpack.c.b16 %v686, %v685
        %v738 = vpack.c.b16 %v688, %v687
        %v739 = vpack.c.b16 %v690, %v689
        %v740 = vpack.c.b16 %v692, %v691
        %v741 = vpack.c.b16 %v694, %v693
        %v742 = vpack.c.b16 %v696, %v695
        %v743 = vpack.c.b16 %v698, %v697
        %v744 = vpack.c.b16 %v700, %v699
        %v745 = vpack.c.b16 %v702, %v701
        %v746 = vpack.c.b16 %v704, %v703
        %v747 = vpack.c.b16 %v706, %v705
        %v748 = vpack.c.b16 %v708, %v707
        %v749 = vpack.c.b16 %v710, %v709
        %v750 = vpack.c.b16 %v712, %v711
        %v751 = vpack.c.b16 %v714, %v713
        %v752 = vpack.c.b16 %v716, %v715
        %v753 = vpack.c.b16 %v718, %v717
        %v754 = vpack.c.b16 %v720, %v719
        %v755 = vpack.c.b16 %v722, %v721
        %v756 = vpack.c.b16 %v724, %v723
        %v759 = vunpack.c.l.b16 %v588
        %v760 = vunpack.c.l.b16 %v589
        %v761 = vpack.c.b16 %v760, %v759
        %vm763 = vcmask 130048
        %v765 = vsel %vm763, %v725, 0
        %v768 = vsel %vm763, %v726, 0
        %v771 = vsel %vm763, %v727, 0
        %v774 = vsel %vm763, %v728, 0
        %v777 = vsel %vm763, %v729, 0
        %v780 = vsel %vm763, %v730, 0
        %v783 = vsel %vm763, %v731, 0
        %v786 = vsel %vm763, %v732, 0
        %v789 = vsel %vm763, %v733, 0
        %v792 = vsel %vm763, %v734, 0
        %v795 = vsel %vm763, %v735, 0
        %v798 = vsel %vm763, %v736, 0
        %v801 = vsel %vm763, %v737, 0
        %v804 = vsel %vm763, %v738, 0
        %v807 = vsel %vm763, %v739, 0
        %v810 = vsel %vm763, %v740, 0
        %v813 = vsel %vm763, %v741, 0
        %v816 = vsel %vm763, %v742, 0
        %v819 = vsel %vm763, %v743, 0
        %v822 = vsel %vm763, %v744, 0
        %v825 = vsel %vm763, %v745, 0
        %v828 = vsel %vm763, %v746, 0
        %v831 = vsel %vm763, %v747, 0
        %v834 = vsel %vm763, %v748, 0
        %v837 = vsel %vm763, %v749, 0
        %v840 = vsel %vm763, %v750, 0
        %v843 = vsel %vm763, %v751, 0
        %v846 = vsel %vm763, %v752, 0
        %v849 = vsel %vm763, %v753, 0
        %v852 = vsel %vm763, %v754, 0
        %v855 = vsel %vm763, %v755, 0
        %v858 = vsel %vm763, %v756, 0
        %860 = vmatprep.subr.bf16.mxu0 0
        %861 = vmatpush1.bf16.msra.mxu0 0
        %862 = vmatprep.subr.bf16.mxu0 0
        %863 = vmatpush1.bf16.msra.mxu0 0
        %864 = vmatprep.subr.bf16.mxu0 0
        %865 = vmatpush1.bf16.msra.mxu0 0
        %866 = vmatprep.subr.bf16.mxu0 0
        %867 = vmatpush1.bf16.msra.mxu0 0
        %868 = vmatprep.subr.bf16.mxu0 0
        %869 = vmatpush1.bf16.msra.mxu0 0
        %870 = vmatprep.subr.bf16.mxu0 0
        %871 = vmatpush1.bf16.msra.mxu0 0
        %872 = vmatprep.subr.bf16.mxu0 0
        %873 = vmatpush1.bf16.msra.mxu0 0
        %874 = vmatprep.subr.bf16.mxu0 0
        %875 = vmatpush1.bf16.msra.mxu0 %v761
        %876 = vmatprep.subr.bf16.mxu0 0
        %877 = vmatpush2.bf16.msra.mxu0 0
        %878 = vmatprep.subr.bf16.mxu0 0
        %879 = vmatpush2.bf16.msra.mxu0 0
        %880 = vmatprep.subr.bf16.mxu0 0
        %881 = vmatpush2.bf16.msra.mxu0 0
        %882 = vmatprep.subr.bf16.mxu0 0
        %883 = vmatpush2.bf16.msra.mxu0 0
        %884 = vmatprep.subr.bf16.mxu0 0
        %885 = vmatpush2.bf16.msra.mxu0 0
        %886 = vmatprep.subr.bf16.mxu0 0
        %887 = vmatpush2.bf16.msra.mxu0 0
        %888 = vmatprep.subr.bf16.mxu0 0
        %889 = vmatpush2.bf16.msra.mxu0 0
        %890 = vmatprep.subr.bf16.mxu0 0
        %891 = vmatpush2.bf16.msra.mxu0 0
        %892 = vmatprep.mubr.bf16.mxu0 0
        %893 = vmatmul.mubr.bf16.gmra.mxu0 %v765
        %v894 = vpop.f32.mrf.mxu0
        %v895 = vadd.f32 %v595, %v894
        %v896 = vpop.f32.mrf.mxu0
        %v897 = vpop.f32.mrf.mxu0
        %v898 = vadd.f32 %v595, %v897
        %v899 = vpop.f32.mrf.mxu0
        %900 = vmatprep.mubr.bf16.mxu0 0
        %901 = vmatmul.mubr.bf16.gmra.mxu0 %v768
        %v902 = vpop.f32.mrf.mxu0
        %v903 = vadd.f32 %v595, %v902
        %v904 = vpop.f32.mrf.mxu0
        %v905 = vpop.f32.mrf.mxu0
        %v906 = vadd.f32 %v595, %v905
        %v907 = vpop.f32.mrf.mxu0
        %908 = vmatprep.mubr.bf16.mxu0 0
        %909 = vmatmul.mubr.bf16.gmra.mxu0 %v771
        %v910 = vpop.f32.mrf.mxu0
        %v911 = vadd.f32 %v595, %v910
        %v912 = vpop.f32.mrf.mxu0
        %v913 = vpop.f32.mrf.mxu0
        %v914 = vadd.f32 %v595, %v913
        %v915 = vpop.f32.mrf.mxu0
        %916 = vmatprep.mubr.bf16.mxu0 0
        %917 = vmatmul.mubr.bf16.gmra.mxu0 %v774
        %v918 = vpop.f32.mrf.mxu0
        %v919 = vadd.f32 %v595, %v918
        %v920 = vpop.f32.mrf.mxu0
        %v921 = vpop.f32.mrf.mxu0
        %v922 = vadd.f32 %v595, %v921
        %v923 = vpop.f32.mrf.mxu0
        %924 = vmatprep.mubr.bf16.mxu0 0
        %925 = vmatmul.mubr.bf16.gmra.mxu0 %v777
        %v926 = vpop.f32.mrf.mxu0
        %v927 = vadd.f32 %v595, %v926
        %v928 = vpop.f32.mrf.mxu0
        %v929 = vpop.f32.mrf.mxu0
        %v930 = vadd.f32 %v595, %v929
        %v931 = vpop.f32.mrf.mxu0
        %932 = vmatprep.mubr.bf16.mxu0 0
        %933 = vmatmul.mubr.bf16.gmra.mxu0 %v780
        %v934 = vpop.f32.mrf.mxu0
        %v935 = vadd.f32 %v595, %v934
        %v936 = vpop.f32.mrf.mxu0
        %v937 = vpop.f32.mrf.mxu0
        %v938 = vadd.f32 %v595, %v937
        %v939 = vpop.f32.mrf.mxu0
        %940 = vmatprep.mubr.bf16.mxu0 0
        %941 = vmatmul.mubr.bf16.gmra.mxu0 %v783
        %v942 = vpop.f32.mrf.mxu0
        %v943 = vadd.f32 %v595, %v942
        %v944 = vpop.f32.mrf.mxu0
        %v945 = vpop.f32.mrf.mxu0
        %v946 = vadd.f32 %v595, %v945
        %v947 = vpop.f32.mrf.mxu0
        %948 = vmatprep.mubr.bf16.mxu0 0
        %949 = vmatmul.mubr.bf16.gmra.mxu0 %v786
        %v950 = vpop.f32.mrf.mxu0
        %v951 = vadd.f32 %v595, %v950
        %v952 = vpop.f32.mrf.mxu0
        %v953 = vpop.f32.mrf.mxu0
        %v954 = vadd.f32 %v595, %v953
        %v955 = vpop.f32.mrf.mxu0
        %956 = vmatprep.mubr.bf16.mxu0 0
        %957 = vmatmul.mubr.bf16.gmra.mxu0 %v789
        %v958 = vpop.f32.mrf.mxu0
        %v959 = vadd.f32 %v595, %v958
        %v960 = vpop.f32.mrf.mxu0
        %v961 = vpop.f32.mrf.mxu0
        %v962 = vadd.f32 %v595, %v961
        %v963 = vpop.f32.mrf.mxu0
        %964 = vmatprep.mubr.bf16.mxu0 0
        %965 = vmatmul.mubr.bf16.gmra.mxu0 %v792
        %v966 = vpop.f32.mrf.mxu0
        %v967 = vadd.f32 %v595, %v966
        %v968 = vpop.f32.mrf.mxu0
        %v969 = vpop.f32.mrf.mxu0
        %v970 = vadd.f32 %v595, %v969
        %v971 = vpop.f32.mrf.mxu0
        %972 = vmatprep.mubr.bf16.mxu0 0
        %973 = vmatmul.mubr.bf16.gmra.mxu0 %v795
        %v974 = vpop.f32.mrf.mxu0
        %v975 = vadd.f32 %v595, %v974
        %v976 = vpop.f32.mrf.mxu0
        %v977 = vpop.f32.mrf.mxu0
        %v978 = vadd.f32 %v595, %v977
        %v979 = vpop.f32.mrf.mxu0
        %980 = vmatprep.mubr.bf16.mxu0 0
        %981 = vmatmul.mubr.bf16.gmra.mxu0 %v798
        %v982 = vpop.f32.mrf.mxu0
        %v983 = vadd.f32 %v595, %v982
        %v984 = vpop.f32.mrf.mxu0
        %v985 = vpop.f32.mrf.mxu0
        %v986 = vadd.f32 %v595, %v985
        %v987 = vpop.f32.mrf.mxu0
        %988 = vmatprep.mubr.bf16.mxu0 0
        %989 = vmatmul.mubr.bf16.gmra.mxu0 %v801
        %v990 = vpop.f32.mrf.mxu0
        %v991 = vadd.f32 %v595, %v990
        %v992 = vpop.f32.mrf.mxu0
        %v993 = vpop.f32.mrf.mxu0
        %v994 = vadd.f32 %v595, %v993
        %v995 = vpop.f32.mrf.mxu0
        %996 = vmatprep.mubr.bf16.mxu0 0
        %997 = vmatmul.mubr.bf16.gmra.mxu0 %v804
        %v998 = vpop.f32.mrf.mxu0
        %v999 = vadd.f32 %v595, %v998
        %v1000 = vpop.f32.mrf.mxu0
        %v1001 = vpop.f32.mrf.mxu0
        %v1002 = vadd.f32 %v595, %v1001
        %v1003 = vpop.f32.mrf.mxu0
        %1004 = vmatprep.mubr.bf16.mxu0 0
        %1005 = vmatmul.mubr.bf16.gmra.mxu0 %v807
        %v1006 = vpop.f32.mrf.mxu0
        %v1007 = vadd.f32 %v595, %v1006
        %v1008 = vpop.f32.mrf.mxu0
        %v1009 = vpop.f32.mrf.mxu0
        %v1010 = vadd.f32 %v595, %v1009
        %v1011 = vpop.f32.mrf.mxu0
        %1012 = vmatprep.mubr.bf16.mxu0 0
        %1013 = vmatmul.mubr.bf16.gmra.mxu0 %v810
        %v1014 = vpop.f32.mrf.mxu0
        %v1015 = vadd.f32 %v595, %v1014
        %v1016 = vpop.f32.mrf.mxu0
        %v1017 = vpop.f32.mrf.mxu0
        %v1018 = vadd.f32 %v595, %v1017
        %v1019 = vpop.f32.mrf.mxu0
        %1020 = vmatprep.mubr.bf16.mxu0 0
        %1021 = vmatmul.mubr.bf16.gmra.mxu0 %v813
        %v1022 = vpop.f32.mrf.mxu0
        %v1023 = vadd.f32 %v595, %v1022
        %v1024 = vpop.f32.mrf.mxu0
        %v1025 = vpop.f32.mrf.mxu0
        %v1026 = vadd.f32 %v595, %v1025
        %v1027 = vpop.f32.mrf.mxu0
        %1028 = vmatprep.mubr.bf16.mxu0 0
        %1029 = vmatmul.mubr.bf16.gmra.mxu0 %v816
        %v1030 = vpop.f32.mrf.mxu0
        %v1031 = vadd.f32 %v595, %v1030
        %v1032 = vpop.f32.mrf.mxu0
        %v1033 = vpop.f32.mrf.mxu0
        %v1034 = vadd.f32 %v595, %v1033
        %v1035 = vpop.f32.mrf.mxu0
        %1036 = vmatprep.mubr.bf16.mxu0 0
        %1037 = vmatmul.mubr.bf16.gmra.mxu0 %v819
        %v1038 = vpop.f32.mrf.mxu0
        %v1039 = vadd.f32 %v595, %v1038
        %v1040 = vpop.f32.mrf.mxu0
        %v1041 = vpop.f32.mrf.mxu0
        %v1042 = vadd.f32 %v595, %v1041
        %v1043 = vpop.f32.mrf.mxu0
        %1044 = vmatprep.mubr.bf16.mxu0 0
        %1045 = vmatmul.mubr.bf16.gmra.mxu0 %v822
        %v1046 = vpop.f32.mrf.mxu0
        %v1047 = vadd.f32 %v595, %v1046
        %v1048 = vpop.f32.mrf.mxu0
        %v1049 = vpop.f32.mrf.mxu0
        %v1050 = vadd.f32 %v595, %v1049
        %v1051 = vpop.f32.mrf.mxu0
        %1052 = vmatprep.mubr.bf16.mxu0 0
        %1053 = vmatmul.mubr.bf16.gmra.mxu0 %v825
        %v1054 = vpop.f32.mrf.mxu0
        %v1055 = vadd.f32 %v595, %v1054
        %v1056 = vpop.f32.mrf.mxu0
        %v1057 = vpop.f32.mrf.mxu0
        %v1058 = vadd.f32 %v595, %v1057
        %v1059 = vpop.f32.mrf.mxu0
        %1060 = vmatprep.mubr.bf16.mxu0 0
        %1061 = vmatmul.mubr.bf16.gmra.mxu0 %v828
        %v1062 = vpop.f32.mrf.mxu0
        %v1063 = vadd.f32 %v595, %v1062
        %v1064 = vpop.f32.mrf.mxu0
        %v1065 = vpop.f32.mrf.mxu0
        %v1066 = vadd.f32 %v595, %v1065
        %v1067 = vpop.f32.mrf.mxu0
        %1068 = vmatprep.mubr.bf16.mxu0 0
        %1069 = vmatmul.mubr.bf16.gmra.mxu0 %v831
        %v1070 = vpop.f32.mrf.mxu0
        %v1071 = vadd.f32 %v595, %v1070
        %v1072 = vpop.f32.mrf.mxu0
        %v1073 = vpop.f32.mrf.mxu0
        %v1074 = vadd.f32 %v595, %v1073
        %v1075 = vpop.f32.mrf.mxu0
        %1076 = vmatprep.mubr.bf16.mxu0 0
        %1077 = vmatmul.mubr.bf16.gmra.mxu0 %v834
        %v1078 = vpop.f32.mrf.mxu0
        %v1079 = vadd.f32 %v595, %v1078
        %v1080 = vpop.f32.mrf.mxu0
        %v1081 = vpop.f32.mrf.mxu0
        %v1082 = vadd.f32 %v595, %v1081
        %v1083 = vpop.f32.mrf.mxu0
        %1084 = vmatprep.mubr.bf16.mxu0 0
        %1085 = vmatmul.mubr.bf16.gmra.mxu0 %v837
        %v1086 = vpop.f32.mrf.mxu0
        %v1087 = vadd.f32 %v595, %v1086
        %v1088 = vpop.f32.mrf.mxu0
        %v1089 = vpop.f32.mrf.mxu0
        %v1090 = vadd.f32 %v595, %v1089
        %v1091 = vpop.f32.mrf.mxu0
        %1092 = vmatprep.mubr.bf16.mxu0 0
        %1093 = vmatmul.mubr.bf16.gmra.mxu0 %v840
        %v1094 = vpop.f32.mrf.mxu0
        %v1095 = vadd.f32 %v595, %v1094
        %v1096 = vpop.f32.mrf.mxu0
        %v1097 = vpop.f32.mrf.mxu0
        %v1098 = vadd.f32 %v595, %v1097
        %v1099 = vpop.f32.mrf.mxu0
        %1100 = vmatprep.mubr.bf16.mxu0 0
        %1101 = vmatmul.mubr.bf16.gmra.mxu0 %v843
        %v1102 = vpop.f32.mrf.mxu0
        %v1103 = vadd.f32 %v595, %v1102
        %v1104 = vpop.f32.mrf.mxu0
        %v1105 = vpop.f32.mrf.mxu0
        %v1106 = vadd.f32 %v595, %v1105
        %v1107 = vpop.f32.mrf.mxu0
        %1108 = vmatprep.mubr.bf16.mxu0 0
        %1109 = vmatmul.mubr.bf16.gmra.mxu0 %v846
        %v1110 = vpop.f32.mrf.mxu0
        %v1111 = vadd.f32 %v595, %v1110
        %v1112 = vpop.f32.mrf.mxu0
        %v1113 = vpop.f32.mrf.mxu0
        %v1114 = vadd.f32 %v595, %v1113
        %v1115 = vpop.f32.mrf.mxu0
        %1116 = vmatprep.mubr.bf16.mxu0 0
        %1117 = vmatmul.mubr.bf16.gmra.mxu0 %v849
        %v1118 = vpop.f32.mrf.mxu0
        %v1119 = vadd.f32 %v595, %v1118
        %v1120 = vpop.f32.mrf.mxu0
        %v1121 = vpop.f32.mrf.mxu0
        %v1122 = vadd.f32 %v595, %v1121
        %v1123 = vpop.f32.mrf.mxu0
        %1124 = vmatprep.mubr.bf16.mxu0 0
        %1125 = vmatmul.mubr.bf16.gmra.mxu0 %v852
        %v1126 = vpop.f32.mrf.mxu0
        %v1127 = vadd.f32 %v595, %v1126
        %v1128 = vpop.f32.mrf.mxu0
        %v1129 = vpop.f32.mrf.mxu0
        %v1130 = vadd.f32 %v595, %v1129
        %v1131 = vpop.f32.mrf.mxu0
        %1132 = vmatprep.mubr.bf16.mxu0 0
        %1133 = vmatmul.mubr.bf16.gmra.mxu0 %v855
        %v1134 = vpop.f32.mrf.mxu0
        %v1135 = vadd.f32 %v595, %v1134
        %v1136 = vpop.f32.mrf.mxu0
        %v1137 = vpop.f32.mrf.mxu0
        %v1138 = vadd.f32 %v595, %v1137
        %v1139 = vpop.f32.mrf.mxu0
        %1140 = vmatprep.mubr.bf16.mxu0 0
        %1141 = vmatmul.mubr.bf16.gmra.mxu0 %v858
        %v1142 = vpop.f32.mrf.mxu0
        %v1143 = vadd.f32 %v595, %v1142
        %v1144 = vpop.f32.mrf.mxu0
        %v1145 = vpop.f32.mrf.mxu0
        %v1146 = vadd.f32 %v595, %v1145
        %v1147 = vpop.f32.mrf.mxu0
        %1148 = vdwg.mxu0
        %v1149 = vmax.f32 %v895, 0.0
        %v1150 = vmax.f32 %v898, 0.0
        %v1151 = vmax.f32 %v903, 0.0
        %v1152 = vmax.f32 %v906, 0.0
        %v1153 = vmax.f32 %v911, 0.0
        %v1154 = vmax.f32 %v914, 0.0
        %v1155 = vmax.f32 %v919, 0.0
        %v1156 = vmax.f32 %v922, 0.0
        %v1157 = vmax.f32 %v927, 0.0
        %v1158 = vmax.f32 %v930, 0.0
        %v1159 = vmax.f32 %v935, 0.0
        %v1160 = vmax.f32 %v938, 0.0
        %v1161 = vmax.f32 %v943, 0.0
        %v1162 = vmax.f32 %v946, 0.0
        %v1163 = vmax.f32 %v951, 0.0
        %v1164 = vmax.f32 %v954, 0.0
        %v1165 = vmax.f32 %v959, 0.0
        %v1166 = vmax.f32 %v962, 0.0
        %v1167 = vmax.f32 %v967, 0.0
        %v1168 = vmax.f32 %v970, 0.0
        %v1169 = vmax.f32 %v975, 0.0
        %v1170 = vmax.f32 %v978, 0.0
        %v1171 = vmax.f32 %v983, 0.0
        %v1172 = vmax.f32 %v986, 0.0
        %v1173 = vmax.f32 %v991, 0.0
        %v1174 = vmax.f32 %v994, 0.0
        %v1175 = vmax.f32 %v999, 0.0
        %v1176 = vmax.f32 %v1002, 0.0
        %v1177 = vmax.f32 %v1007, 0.0
        %v1178 = vmax.f32 %v1010, 0.0
        %v1179 = vmax.f32 %v1015, 0.0
        %v1180 = vmax.f32 %v1018, 0.0
        %v1181 = vmax.f32 %v1023, 0.0
        %v1182 = vmax.f32 %v1026, 0.0
        %v1183 = vmax.f32 %v1031, 0.0
        %v1184 = vmax.f32 %v1034, 0.0
        %v1185 = vmax.f32 %v1039, 0.0
        %v1186 = vmax.f32 %v1042, 0.0
        %v1187 = vmax.f32 %v1047, 0.0
        %v1188 = vmax.f32 %v1050, 0.0
        %v1189 = vmax.f32 %v1055, 0.0
        %v1190 = vmax.f32 %v1058, 0.0
        %v1191 = vmax.f32 %v1063, 0.0
        %v1192 = vmax.f32 %v1066, 0.0
        %v1193 = vmax.f32 %v1071, 0.0
        %v1194 = vmax.f32 %v1074, 0.0
        %v1195 = vmax.f32 %v1079, 0.0
        %v1196 = vmax.f32 %v1082, 0.0
        %v1197 = vmax.f32 %v1087, 0.0
        %v1198 = vmax.f32 %v1090, 0.0
        %v1199 = vmax.f32 %v1095, 0.0
        %v1200 = vmax.f32 %v1098, 0.0
        %v1201 = vmax.f32 %v1103, 0.0
        %v1202 = vmax.f32 %v1106, 0.0
        %v1203 = vmax.f32 %v1111, 0.0
        %v1204 = vmax.f32 %v1114, 0.0
        %v1205 = vmax.f32 %v1119, 0.0
        %v1206 = vmax.f32 %v1122, 0.0
        %v1207 = vmax.f32 %v1127, 0.0
        %v1208 = vmax.f32 %v1130, 0.0
        %v1209 = vmax.f32 %v1135, 0.0
        %v1210 = vmax.f32 %v1138, 0.0
        %v1211 = vmax.f32 %v1143, 0.0
        %v1212 = vmax.f32 %v1146, 0.0
        %v1213 = vpack.c.bf16 %v1150, %v1149
        %v1214 = vpack.c.bf16 %v1152, %v1151
        %v1215 = vpack.c.bf16 %v1154, %v1153
        %v1216 = vpack.c.bf16 %v1156, %v1155
        %v1217 = vpack.c.bf16 %v1158, %v1157
        %v1218 = vpack.c.bf16 %v1160, %v1159
        %v1219 = vpack.c.bf16 %v1162, %v1161
        %v1220 = vpack.c.bf16 %v1164, %v1163
        %v1221 = vpack.c.bf16 %v1166, %v1165
        %v1222 = vpack.c.bf16 %v1168, %v1167
        %v1223 = vpack.c.bf16 %v1170, %v1169
        %v1224 = vpack.c.bf16 %v1172, %v1171
        %v1225 = vpack.c.bf16 %v1174, %v1173
        %v1226 = vpack.c.bf16 %v1176, %v1175
        %v1227 = vpack.c.bf16 %v1178, %v1177
        %v1228 = vpack.c.bf16 %v1180, %v1179
        %v1229 = vpack.c.bf16 %v1182, %v1181
        %v1230 = vpack.c.bf16 %v1184, %v1183
        %v1231 = vpack.c.bf16 %v1186, %v1185
        %v1232 = vpack.c.bf16 %v1188, %v1187
        %v1233 = vpack.c.bf16 %v1190, %v1189
        %v1234 = vpack.c.bf16 %v1192, %v1191
        %v1235 = vpack.c.bf16 %v1194, %v1193
        %v1236 = vpack.c.bf16 %v1196, %v1195
        %v1237 = vpack.c.bf16 %v1198, %v1197
        %v1238 = vpack.c.bf16 %v1200, %v1199
        %v1239 = vpack.c.bf16 %v1202, %v1201
        %v1240 = vpack.c.bf16 %v1204, %v1203
        %v1241 = vpack.c.bf16 %v1206, %v1205
        %v1242 = vpack.c.bf16 %v1208, %v1207
        %v1243 = vpack.c.bf16 %v1210, %v1209
        %v1244 = vpack.c.bf16 %v1212, %v1211
        %v1245 = vld [vmem:[%s3] sm:$0xf]
        %v1246 = vld [vmem:[%s3 + $0x4] sm:$0xf]
        %v1247 = vld [vmem:[%s3 + $0x8] sm:$0xf]
        %v1248 = vld [vmem:[%s3 + $0xc] sm:$0xf]
        %v1249 = vld [vmem:[%s3 + $0x10] sm:$0xf]
        %v1250 = vld [vmem:[%s3 + $0x14] sm:$0xf]
        %v1251 = vld [vmem:[%s3 + $0x18] sm:$0xf]
        %v1252 = vld [vmem:[%s3 + $0x1c] sm:$0xf]
        %v1253 = vld [vmem:[%s4] sm:$0x1]
        %v1255 = vlaneseq
        %v1256 = vshrl.u32 %v1255, 7
        %v1257 = vsub.s32 0, %v1256
        %v1258 = vrot.slane %v1253, %v1257
        %v1268 = vunpack.c.l.b16 %v1245
        %v1269 = vunpack.c.l.b16 %v1246
        %v1270 = vunpack.c.l.b16 %v1247
        %v1271 = vunpack.c.l.b16 %v1248
        %v1272 = vunpack.c.l.b16 %v1249
        %v1273 = vunpack.c.l.b16 %v1250
        %v1274 = vunpack.c.l.b16 %v1251
        %v1275 = vunpack.c.l.b16 %v1252
        %v1276 = vpack.c.b16 %v1269, %v1268
        %v1277 = vpack.c.b16 %v1271, %v1270
        %v1278 = vpack.c.b16 %v1273, %v1272
        %v1279 = vpack.c.b16 %v1275, %v1274
        %vm1284 = vcmask 523264
        %v1286 = vsel %vm1284, %v1213, 0
        %v1289 = vsel %vm1284, %v1214, 0
        %v1292 = vsel %vm1284, %v1215, 0
        %v1295 = vsel %vm1284, %v1216, 0
        %v1298 = vsel %vm1284, %v1217, 0
        %v1301 = vsel %vm1284, %v1218, 0
        %v1304 = vsel %vm1284, %v1219, 0
        %v1307 = vsel %vm1284, %v1220, 0
        %v1310 = vsel %vm1284, %v1221, 0
        %v1313 = vsel %vm1284, %v1222, 0
        %v1316 = vsel %vm1284, %v1223, 0
        %v1319 = vsel %vm1284, %v1224, 0
        %v1322 = vsel %vm1284, %v1225, 0
        %v1325 = vsel %vm1284, %v1226, 0
        %v1328 = vsel %vm1284, %v1227, 0
        %v1331 = vsel %vm1284, %v1228, 0
        %v1334 = vsel %vm1284, %v1229, 0
        %v1337 = vsel %vm1284, %v1230, 0
        %v1340 = vsel %vm1284, %v1231, 0
        %v1343 = vsel %vm1284, %v1232, 0
        %v1346 = vsel %vm1284, %v1233, 0
        %v1349 = vsel %vm1284, %v1234, 0
        %v1352 = vsel %vm1284, %v1235, 0
        %v1355 = vsel %vm1284, %v1236, 0
        %v1358 = vsel %vm1284, %v1237, 0
        %v1361 = vsel %vm1284, %v1238, 0
        %v1364 = vsel %vm1284, %v1239, 0
        %v1367 = vsel %vm1284, %v1240, 0
        %v1370 = vsel %vm1284, %v1241, 0
        %v1373 = vsel %vm1284, %v1242, 0
        %v1376 = vsel %vm1284, %v1243, 0
        %v1379 = vsel %vm1284, %v1244, 0
        %1381 = vmatprep.subr.bf16.mxu0 0
        %1382 = vmatpush1.bf16.msra.mxu0 0
        %1383 = vmatprep.subr.bf16.mxu0 0
        %1384 = vmatpush1.bf16.msra.mxu0 0
        %1385 = vmatprep.subr.bf16.mxu0 0
        %1386 = vmatpush1.bf16.msra.mxu0 0
        %1387 = vmatprep.subr.bf16.mxu0 0
        %1388 = vmatpush1.bf16.msra.mxu0 0
        %1389 = vmatprep.subr.bf16.mxu0 0
        %1390 = vmatpush1.bf16.msra.mxu0 %v1279
        %1391 = vmatprep.subr.bf16.mxu0 0
        %1392 = vmatpush1.bf16.msra.mxu0 %v1278
        %1393 = vmatprep.subr.bf16.mxu0 0
        %1394 = vmatpush1.bf16.msra.mxu0 %v1277
        %1395 = vmatprep.subr.bf16.mxu0 0
        %1396 = vmatpush1.bf16.msra.mxu0 %v1276
        %1397 = vmatprep.subr.bf16.mxu0 0
        %1398 = vmatpush2.bf16.msra.mxu0 0
        %1399 = vmatprep.subr.bf16.mxu0 0
        %1400 = vmatpush2.bf16.msra.mxu0 0
        %1401 = vmatprep.subr.bf16.mxu0 0
        %1402 = vmatpush2.bf16.msra.mxu0 0
        %1403 = vmatprep.subr.bf16.mxu0 0
        %1404 = vmatpush2.bf16.msra.mxu0 0
        %1405 = vmatprep.subr.bf16.mxu0 0
        %1406 = vmatpush2.bf16.msra.mxu0 0
        %1407 = vmatprep.subr.bf16.mxu0 0
        %1408 = vmatpush2.bf16.msra.mxu0 0
        %1409 = vmatprep.subr.bf16.mxu0 0
        %1410 = vmatpush2.bf16.msra.mxu0 0
        %1411 = vmatprep.subr.bf16.mxu0 0
        %1412 = vmatpush2.bf16.msra.mxu0 0
        %1413 = vmatprep.mubr.bf16.mxu0 0
        %1414 = vmatmul.mubr.bf16.gmra.mxu0 %v1286
        %v1415 = vpop.f32.mrf.mxu0
        %v1416 = vadd.f32 %v1258, %v1415
        %v1417 = vpop.f32.mrf.mxu0
        %v1418 = vpop.f32.mrf.mxu0
        %v1419 = vadd.f32 %v1258, %v1418
        %v1420 = vpop.f32.mrf.mxu0
        %1421 = vmatprep.mubr.bf16.mxu0 0
        %1422 = vmatmul.mubr.bf16.gmra.mxu0 %v1289
        %v1423 = vpop.f32.mrf.mxu0
        %v1424 = vadd.f32 %v1258, %v1423
        %v1425 = vpop.f32.mrf.mxu0
        %v1426 = vpop.f32.mrf.mxu0
        %v1427 = vadd.f32 %v1258, %v1426
        %v1428 = vpop.f32.mrf.mxu0
        %1429 = vmatprep.mubr.bf16.mxu0 0
        %1430 = vmatmul.mubr.bf16.gmra.mxu0 %v1292
        %v1431 = vpop.f32.mrf.mxu0
        %v1432 = vadd.f32 %v1258, %v1431
        %v1433 = vpop.f32.mrf.mxu0
        %v1434 = vpop.f32.mrf.mxu0
        %v1435 = vadd.f32 %v1258, %v1434
        %v1436 = vpop.f32.mrf.mxu0
        %1437 = vmatprep.mubr.bf16.mxu0 0
        %1438 = vmatmul.mubr.bf16.gmra.mxu0 %v1295
        %v1439 = vpop.f32.mrf.mxu0
        %v1440 = vadd.f32 %v1258, %v1439
        %v1441 = vpop.f32.mrf.mxu0
        %v1442 = vpop.f32.mrf.mxu0
        %v1443 = vadd.f32 %v1258, %v1442
        %v1444 = vpop.f32.mrf.mxu0
        %1445 = vmatprep.mubr.bf16.mxu0 0
        %1446 = vmatmul.mubr.bf16.gmra.mxu0 %v1298
        %v1447 = vpop.f32.mrf.mxu0
        %v1448 = vadd.f32 %v1258, %v1447
        %v1449 = vpop.f32.mrf.mxu0
        %v1450 = vpop.f32.mrf.mxu0
        %v1451 = vadd.f32 %v1258, %v1450
        %v1452 = vpop.f32.mrf.mxu0
        %1453 = vmatprep.mubr.bf16.mxu0 0
        %1454 = vmatmul.mubr.bf16.gmra.mxu0 %v1301
        %v1455 = vpop.f32.mrf.mxu0
        %v1456 = vadd.f32 %v1258, %v1455
        %v1457 = vpop.f32.mrf.mxu0
        %v1458 = vpop.f32.mrf.mxu0
        %v1459 = vadd.f32 %v1258, %v1458
        %v1460 = vpop.f32.mrf.mxu0
        %1461 = vmatprep.mubr.bf16.mxu0 0
        %1462 = vmatmul.mubr.bf16.gmra.mxu0 %v1304
        %v1463 = vpop.f32.mrf.mxu0
        %v1464 = vadd.f32 %v1258, %v1463
        %v1465 = vpop.f32.mrf.mxu0
        %v1466 = vpop.f32.mrf.mxu0
        %v1467 = vadd.f32 %v1258, %v1466
        %v1468 = vpop.f32.mrf.mxu0
        %1469 = vmatprep.mubr.bf16.mxu0 0
        %1470 = vmatmul.mubr.bf16.gmra.mxu0 %v1307
        %v1471 = vpop.f32.mrf.mxu0
        %v1472 = vadd.f32 %v1258, %v1471
        %v1473 = vpop.f32.mrf.mxu0
        %v1474 = vpop.f32.mrf.mxu0
        %v1475 = vadd.f32 %v1258, %v1474
        %v1476 = vpop.f32.mrf.mxu0
        %1477 = vmatprep.mubr.bf16.mxu0 0
        %1478 = vmatmul.mubr.bf16.gmra.mxu0 %v1310
        %v1479 = vpop.f32.mrf.mxu0
        %v1480 = vadd.f32 %v1258, %v1479
        %v1481 = vpop.f32.mrf.mxu0
        %v1482 = vpop.f32.mrf.mxu0
        %v1483 = vadd.f32 %v1258, %v1482
        %v1484 = vpop.f32.mrf.mxu0
        %1485 = vmatprep.mubr.bf16.mxu0 0
        %1486 = vmatmul.mubr.bf16.gmra.mxu0 %v1313
        %v1487 = vpop.f32.mrf.mxu0
        %v1488 = vadd.f32 %v1258, %v1487
        %v1489 = vpop.f32.mrf.mxu0
        %v1490 = vpop.f32.mrf.mxu0
        %v1491 = vadd.f32 %v1258, %v1490
        %v1492 = vpop.f32.mrf.mxu0
        %1493 = vmatprep.mubr.bf16.mxu0 0
        %1494 = vmatmul.mubr.bf16.gmra.mxu0 %v1316
        %v1495 = vpop.f32.mrf.mxu0
        %v1496 = vadd.f32 %v1258, %v1495
        %v1497 = vpop.f32.mrf.mxu0
        %v1498 = vpop.f32.mrf.mxu0
        %v1499 = vadd.f32 %v1258, %v1498
        %v1500 = vpop.f32.mrf.mxu0
        %1501 = vmatprep.mubr.bf16.mxu0 0
        %1502 = vmatmul.mubr.bf16.gmra.mxu0 %v1319
        %v1503 = vpop.f32.mrf.mxu0
        %v1504 = vadd.f32 %v1258, %v1503
        %v1505 = vpop.f32.mrf.mxu0
        %v1506 = vpop.f32.mrf.mxu0
        %v1507 = vadd.f32 %v1258, %v1506
        %v1508 = vpop.f32.mrf.mxu0
        %1509 = vmatprep.mubr.bf16.mxu0 0
        %1510 = vmatmul.mubr.bf16.gmra.mxu0 %v1322
        %v1511 = vpop.f32.mrf.mxu0
        %v1512 = vadd.f32 %v1258, %v1511
        %v1513 = vpop.f32.mrf.mxu0
        %v1514 = vpop.f32.mrf.mxu0
        %v1515 = vadd.f32 %v1258, %v1514
        %v1516 = vpop.f32.mrf.mxu0
        %1517 = vmatprep.mubr.bf16.mxu0 0
        %1518 = vmatmul.mubr.bf16.gmra.mxu0 %v1325
        %v1519 = vpop.f32.mrf.mxu0
        %v1520 = vadd.f32 %v1258, %v1519
        %v1521 = vpop.f32.mrf.mxu0
        %v1522 = vpop.f32.mrf.mxu0
        %v1523 = vadd.f32 %v1258, %v1522
        %v1524 = vpop.f32.mrf.mxu0
        %1525 = vmatprep.mubr.bf16.mxu0 0
        %1526 = vmatmul.mubr.bf16.gmra.mxu0 %v1328
        %v1527 = vpop.f32.mrf.mxu0
        %v1528 = vadd.f32 %v1258, %v1527
        %v1529 = vpop.f32.mrf.mxu0
        %v1530 = vpop.f32.mrf.mxu0
        %v1531 = vadd.f32 %v1258, %v1530
        %v1532 = vpop.f32.mrf.mxu0
        %1533 = vmatprep.mubr.bf16.mxu0 0
        %1534 = vmatmul.mubr.bf16.gmra.mxu0 %v1331
        %v1535 = vpop.f32.mrf.mxu0
        %v1536 = vadd.f32 %v1258, %v1535
        %v1537 = vpop.f32.mrf.mxu0
        %v1538 = vpop.f32.mrf.mxu0
        %v1539 = vadd.f32 %v1258, %v1538
        %v1540 = vpop.f32.mrf.mxu0
        %1541 = vmatprep.mubr.bf16.mxu0 0
        %1542 = vmatmul.mubr.bf16.gmra.mxu0 %v1334
        %v1543 = vpop.f32.mrf.mxu0
        %v1544 = vadd.f32 %v1258, %v1543
        %v1545 = vpop.f32.mrf.mxu0
        %v1546 = vpop.f32.mrf.mxu0
        %v1547 = vadd.f32 %v1258, %v1546
        %v1548 = vpop.f32.mrf.mxu0
        %1549 = vmatprep.mubr.bf16.mxu0 0
        %1550 = vmatmul.mubr.bf16.gmra.mxu0 %v1337
        %v1551 = vpop.f32.mrf.mxu0
        %v1552 = vadd.f32 %v1258, %v1551
        %v1553 = vpop.f32.mrf.mxu0
        %v1554 = vpop.f32.mrf.mxu0
        %v1555 = vadd.f32 %v1258, %v1554
        %v1556 = vpop.f32.mrf.mxu0
        %1557 = vmatprep.mubr.bf16.mxu0 0
        %1558 = vmatmul.mubr.bf16.gmra.mxu0 %v1340
        %v1559 = vpop.f32.mrf.mxu0
        %v1560 = vadd.f32 %v1258, %v1559
        %v1561 = vpop.f32.mrf.mxu0
        %v1562 = vpop.f32.mrf.mxu0
        %v1563 = vadd.f32 %v1258, %v1562
        %v1564 = vpop.f32.mrf.mxu0
        %1565 = vmatprep.mubr.bf16.mxu0 0
        %1566 = vmatmul.mubr.bf16.gmra.mxu0 %v1343
        %v1567 = vpop.f32.mrf.mxu0
        %v1568 = vadd.f32 %v1258, %v1567
        %v1569 = vpop.f32.mrf.mxu0
        %v1570 = vpop.f32.mrf.mxu0
        %v1571 = vadd.f32 %v1258, %v1570
        %v1572 = vpop.f32.mrf.mxu0
        %1573 = vmatprep.mubr.bf16.mxu0 0
        %1574 = vmatmul.mubr.bf16.gmra.mxu0 %v1346
        %v1575 = vpop.f32.mrf.mxu0
        %v1576 = vadd.f32 %v1258, %v1575
        %v1577 = vpop.f32.mrf.mxu0
        %v1578 = vpop.f32.mrf.mxu0
        %v1579 = vadd.f32 %v1258, %v1578
        %v1580 = vpop.f32.mrf.mxu0
        %1581 = vmatprep.mubr.bf16.mxu0 0
        %1582 = vmatmul.mubr.bf16.gmra.mxu0 %v1349
        %v1583 = vpop.f32.mrf.mxu0
        %v1584 = vadd.f32 %v1258, %v1583
        %v1585 = vpop.f32.mrf.mxu0
        %v1586 = vpop.f32.mrf.mxu0
        %v1587 = vadd.f32 %v1258, %v1586
        %v1588 = vpop.f32.mrf.mxu0
        %1589 = vmatprep.mubr.bf16.mxu0 0
        %1590 = vmatmul.mubr.bf16.gmra.mxu0 %v1352
        %v1591 = vpop.f32.mrf.mxu0
        %v1592 = vadd.f32 %v1258, %v1591
        %v1593 = vpop.f32.mrf.mxu0
        %v1594 = vpop.f32.mrf.mxu0
        %v1595 = vadd.f32 %v1258, %v1594
        %v1596 = vpop.f32.mrf.mxu0
        %1597 = vmatprep.mubr.bf16.mxu0 0
        %1598 = vmatmul.mubr.bf16.gmra.mxu0 %v1355
        %v1599 = vpop.f32.mrf.mxu0
        %v1600 = vadd.f32 %v1258, %v1599
        %v1601 = vpop.f32.mrf.mxu0
        %v1602 = vpop.f32.mrf.mxu0
        %v1603 = vadd.f32 %v1258, %v1602
        %v1604 = vpop.f32.mrf.mxu0
        %1605 = vmatprep.mubr.bf16.mxu0 0
        %1606 = vmatmul.mubr.bf16.gmra.mxu0 %v1358
        %v1607 = vpop.f32.mrf.mxu0
        %v1608 = vadd.f32 %v1258, %v1607
        %v1609 = vpop.f32.mrf.mxu0
        %v1610 = vpop.f32.mrf.mxu0
        %v1611 = vadd.f32 %v1258, %v1610
        %v1612 = vpop.f32.mrf.mxu0
        %1613 = vmatprep.mubr.bf16.mxu0 0
        %1614 = vmatmul.mubr.bf16.gmra.mxu0 %v1361
        %v1615 = vpop.f32.mrf.mxu0
        %v1616 = vadd.f32 %v1258, %v1615
        %v1617 = vpop.f32.mrf.mxu0
        %v1618 = vpop.f32.mrf.mxu0
        %v1619 = vadd.f32 %v1258, %v1618
        %v1620 = vpop.f32.mrf.mxu0
        %1621 = vmatprep.mubr.bf16.mxu0 0
        %1622 = vmatmul.mubr.bf16.gmra.mxu0 %v1364
        %v1623 = vpop.f32.mrf.mxu0
        %v1624 = vadd.f32 %v1258, %v1623
        %v1625 = vpop.f32.mrf.mxu0
        %v1626 = vpop.f32.mrf.mxu0
        %v1627 = vadd.f32 %v1258, %v1626
        %v1628 = vpop.f32.mrf.mxu0
        %1629 = vmatprep.mubr.bf16.mxu0 0
        %1630 = vmatmul.mubr.bf16.gmra.mxu0 %v1367
        %v1631 = vpop.f32.mrf.mxu0
        %v1632 = vadd.f32 %v1258, %v1631
        %v1633 = vpop.f32.mrf.mxu0
        %v1634 = vpop.f32.mrf.mxu0
        %v1635 = vadd.f32 %v1258, %v1634
        %v1636 = vpop.f32.mrf.mxu0
        %1637 = vmatprep.mubr.bf16.mxu0 0
        %1638 = vmatmul.mubr.bf16.gmra.mxu0 %v1370
        %v1639 = vpop.f32.mrf.mxu0
        %v1640 = vadd.f32 %v1258, %v1639
        %v1641 = vpop.f32.mrf.mxu0
        %v1642 = vpop.f32.mrf.mxu0
        %v1643 = vadd.f32 %v1258, %v1642
        %v1644 = vpop.f32.mrf.mxu0
        %1645 = vmatprep.mubr.bf16.mxu0 0
        %1646 = vmatmul.mubr.bf16.gmra.mxu0 %v1373
        %v1647 = vpop.f32.mrf.mxu0
        %v1648 = vadd.f32 %v1258, %v1647
        %v1649 = vpop.f32.mrf.mxu0
        %v1650 = vpop.f32.mrf.mxu0
        %v1651 = vadd.f32 %v1258, %v1650
        %v1652 = vpop.f32.mrf.mxu0
        %1653 = vmatprep.mubr.bf16.mxu0 0
        %1654 = vmatmul.mubr.bf16.gmra.mxu0 %v1376
        %v1655 = vpop.f32.mrf.mxu0
        %v1656 = vadd.f32 %v1258, %v1655
        %v1657 = vpop.f32.mrf.mxu0
        %v1658 = vpop.f32.mrf.mxu0
        %v1659 = vadd.f32 %v1258, %v1658
        %v1660 = vpop.f32.mrf.mxu0
        %1661 = vmatprep.mubr.bf16.mxu0 0
        %1662 = vmatmul.mubr.bf16.gmra.mxu0 %v1379
        %v1663 = vpop.f32.mrf.mxu0
        %v1664 = vadd.f32 %v1258, %v1663
        %v1665 = vpop.f32.mrf.mxu0
        %v1666 = vpop.f32.mrf.mxu0
        %v1667 = vadd.f32 %v1258, %v1666
        %v1668 = vpop.f32.mrf.mxu0
        %1669 = vdwg.mxu0
        %v1670 = vmax.f32 %v1416, 0.0
        %v1671 = vmax.f32 %v1419, 0.0
        %v1672 = vmax.f32 %v1424, 0.0
        %v1673 = vmax.f32 %v1427, 0.0
        %v1674 = vmax.f32 %v1432, 0.0
        %v1675 = vmax.f32 %v1435, 0.0
        %v1676 = vmax.f32 %v1440, 0.0
        %v1677 = vmax.f32 %v1443, 0.0
        %v1678 = vmax.f32 %v1448, 0.0
        %v1679 = vmax.f32 %v1451, 0.0
        %v1680 = vmax.f32 %v1456, 0.0
        %v1681 = vmax.f32 %v1459, 0.0
        %v1682 = vmax.f32 %v1464, 0.0
        %v1683 = vmax.f32 %v1467, 0.0
        %v1684 = vmax.f32 %v1472, 0.0
        %v1685 = vmax.f32 %v1475, 0.0
        %v1686 = vmax.f32 %v1480, 0.0
        %v1687 = vmax.f32 %v1483, 0.0
        %v1688 = vmax.f32 %v1488, 0.0
        %v1689 = vmax.f32 %v1491, 0.0
        %v1690 = vmax.f32 %v1496, 0.0
        %v1691 = vmax.f32 %v1499, 0.0
        %v1692 = vmax.f32 %v1504, 0.0
        %v1693 = vmax.f32 %v1507, 0.0
        %v1694 = vmax.f32 %v1512, 0.0
        %v1695 = vmax.f32 %v1515, 0.0
        %v1696 = vmax.f32 %v1520, 0.0
        %v1697 = vmax.f32 %v1523, 0.0
        %v1698 = vmax.f32 %v1528, 0.0
        %v1699 = vmax.f32 %v1531, 0.0
        %v1700 = vmax.f32 %v1536, 0.0
        %v1701 = vmax.f32 %v1539, 0.0
        %v1702 = vmax.f32 %v1544, 0.0
        %v1703 = vmax.f32 %v1547, 0.0
        %v1704 = vmax.f32 %v1552, 0.0
        %v1705 = vmax.f32 %v1555, 0.0
        %v1706 = vmax.f32 %v1560, 0.0
        %v1707 = vmax.f32 %v1563, 0.0
        %v1708 = vmax.f32 %v1568, 0.0
        %v1709 = vmax.f32 %v1571, 0.0
        %v1710 = vmax.f32 %v1576, 0.0
        %v1711 = vmax.f32 %v1579, 0.0
        %v1712 = vmax.f32 %v1584, 0.0
        %v1713 = vmax.f32 %v1587, 0.0
        %v1714 = vmax.f32 %v1592, 0.0
        %v1715 = vmax.f32 %v1595, 0.0
        %v1716 = vmax.f32 %v1600, 0.0
        %v1717 = vmax.f32 %v1603, 0.0
        %v1718 = vmax.f32 %v1608, 0.0
        %v1719 = vmax.f32 %v1611, 0.0
        %v1720 = vmax.f32 %v1616, 0.0
        %v1721 = vmax.f32 %v1619, 0.0
        %v1722 = vmax.f32 %v1624, 0.0
        %v1723 = vmax.f32 %v1627, 0.0
        %v1724 = vmax.f32 %v1632, 0.0
        %v1725 = vmax.f32 %v1635, 0.0
        %v1726 = vmax.f32 %v1640, 0.0
        %v1727 = vmax.f32 %v1643, 0.0
        %v1728 = vmax.f32 %v1648, 0.0
        %v1729 = vmax.f32 %v1651, 0.0
        %v1730 = vmax.f32 %v1656, 0.0
        %v1731 = vmax.f32 %v1659, 0.0
        %v1732 = vmax.f32 %v1664, 0.0
        %v1733 = vmax.f32 %v1667, 0.0
        %v1734 = vpack.c.bf16 %v1671, %v1670
        %v1735 = vpack.c.bf16 %v1673, %v1672
        %v1736 = vpack.c.bf16 %v1675, %v1674
        %v1737 = vpack.c.bf16 %v1677, %v1676
        %v1738 = vpack.c.bf16 %v1679, %v1678
        %v1739 = vpack.c.bf16 %v1681, %v1680
        %v1740 = vpack.c.bf16 %v1683, %v1682
        %v1741 = vpack.c.bf16 %v1685, %v1684
        %v1742 = vpack.c.bf16 %v1687, %v1686
        %v1743 = vpack.c.bf16 %v1689, %v1688
        %v1744 = vpack.c.bf16 %v1691, %v1690
        %v1745 = vpack.c.bf16 %v1693, %v1692
        %v1746 = vpack.c.bf16 %v1695, %v1694
        %v1747 = vpack.c.bf16 %v1697, %v1696
        %v1748 = vpack.c.bf16 %v1699, %v1698
        %v1749 = vpack.c.bf16 %v1701, %v1700
        %v1750 = vpack.c.bf16 %v1703, %v1702
        %v1751 = vpack.c.bf16 %v1705, %v1704
        %v1752 = vpack.c.bf16 %v1707, %v1706
        %v1753 = vpack.c.bf16 %v1709, %v1708
        %v1754 = vpack.c.bf16 %v1711, %v1710
        %v1755 = vpack.c.bf16 %v1713, %v1712
        %v1756 = vpack.c.bf16 %v1715, %v1714
        %v1757 = vpack.c.bf16 %v1717, %v1716
        %v1758 = vpack.c.bf16 %v1719, %v1718
        %v1759 = vpack.c.bf16 %v1721, %v1720
        %v1760 = vpack.c.bf16 %v1723, %v1722
        %v1761 = vpack.c.bf16 %v1725, %v1724
        %v1762 = vpack.c.bf16 %v1727, %v1726
        %v1763 = vpack.c.bf16 %v1729, %v1728
        %v1764 = vpack.c.bf16 %v1731, %v1730
        %v1765 = vpack.c.bf16 %v1733, %v1732
        %v1766 = vld [vmem:[%s5] sm:$0xff]
        %v1767 = vld [vmem:[%s5 + $0x8] sm:$0xff]
        %v1768 = vld [vmem:[%s5 + $0x10] sm:$0xff]
        %v1769 = vld [vmem:[%s5 + $0x18] sm:$0xff]
        %v1770 = vld [vmem:[%s5 + $0x20] sm:$0xff]
        %v1771 = vld [vmem:[%s5 + $0x28] sm:$0xff]
        %v1772 = vld [vmem:[%s5 + $0x30] sm:$0xff]
        %v1773 = vld [vmem:[%s5 + $0x38] sm:$0xff]
        %v1774 = vld [vmem:[%s5 + $0x40] sm:$0xff]
        %v1775 = vld [vmem:[%s5 + $0x48] sm:$0xff]
        %v1776 = vld [vmem:[%s5 + $0x50] sm:$0xff]
        %v1777 = vld [vmem:[%s5 + $0x58] sm:$0xff]
        %v1778 = vld [vmem:[%s5 + $0x60] sm:$0xff]
        %v1779 = vld [vmem:[%s5 + $0x68] sm:$0xff]
        %v1780 = vld [vmem:[%s5 + $0x70] sm:$0xff]
        %v1781 = vld [vmem:[%s5 + $0x78] sm:$0xff]
        %v1782 = vld [vmem:[%s5 + $0x80] sm:$0xff]
        %v1783 = vld [vmem:[%s5 + $0x88] sm:$0xff]
        %v1784 = vld [vmem:[%s5 + $0x90] sm:$0xff]
        %v1785 = vld [vmem:[%s5 + $0x98] sm:$0xff]
        %v1786 = vld [vmem:[%s5 + $0xa0] sm:$0xff]
        %v1787 = vld [vmem:[%s5 + $0xa8] sm:$0xff]
        %v1788 = vld [vmem:[%s5 + $0xb0] sm:$0xff]
        %v1789 = vld [vmem:[%s5 + $0xb8] sm:$0xff]
        %v1790 = vld [vmem:[%s5 + $0xc0] sm:$0xff]
        %v1791 = vld [vmem:[%s5 + $0xc8] sm:$0xff]
        %v1792 = vld [vmem:[%s5 + $0xd0] sm:$0xff]
        %v1793 = vld [vmem:[%s5 + $0xd8] sm:$0xff]
        %v1794 = vld [vmem:[%s5 + $0xe0] sm:$0xff]
        %v1795 = vld [vmem:[%s5 + $0xe8] sm:$0xff]
        %v1796 = vld [vmem:[%s5 + $0xf0] sm:$0xff]
        %v1797 = vld [vmem:[%s5 + $0xf8] sm:$0xff]
        %v1798 = vld [vmem:[%s5 + $0x100] sm:$0xff]
        %v1799 = vld [vmem:[%s5 + $0x108] sm:$0xff]
        %v1800 = vld [vmem:[%s5 + $0x110] sm:$0xff]
        %v1801 = vld [vmem:[%s5 + $0x118] sm:$0xff]
        %v1802 = vld [vmem:[%s5 + $0x120] sm:$0xff]
        %v1803 = vld [vmem:[%s5 + $0x128] sm:$0xff]
        %v1804 = vld [vmem:[%s5 + $0x130] sm:$0xff]
        %v1805 = vld [vmem:[%s5 + $0x138] sm:$0xff]
        %v1806 = vld [vmem:[%s5 + $0x140] sm:$0xff]
        %v1807 = vld [vmem:[%s5 + $0x148] sm:$0xff]
        %v1808 = vld [vmem:[%s5 + $0x150] sm:$0xff]
        %v1809 = vld [vmem:[%s5 + $0x158] sm:$0xff]
        %v1810 = vld [vmem:[%s5 + $0x160] sm:$0xff]
        %v1811 = vld [vmem:[%s5 + $0x168] sm:$0xff]
        %v1812 = vld [vmem:[%s5 + $0x170] sm:$0xff]
        %v1813 = vld [vmem:[%s5 + $0x178] sm:$0xff]
        %v1814 = vld [vmem:[%s5 + $0x180] sm:$0xff]
        %v1815 = vld [vmem:[%s5 + $0x188] sm:$0xff]
        %v1816 = vld [vmem:[%s5 + $0x190] sm:$0xff]
        %v1817 = vld [vmem:[%s5 + $0x198] sm:$0xff]
        %v1818 = vld [vmem:[%s5 + $0x1a0] sm:$0xff]
        %v1819 = vld [vmem:[%s5 + $0x1a8] sm:$0xff]
        %v1820 = vld [vmem:[%s5 + $0x1b0] sm:$0xff]
        %v1821 = vld [vmem:[%s5 + $0x1b8] sm:$0xff]
        %v1822 = vld [vmem:[%s5 + $0x1c0] sm:$0xff]
        %v1823 = vld [vmem:[%s5 + $0x1c8] sm:$0xff]
        %v1824 = vld [vmem:[%s5 + $0x1d0] sm:$0xff]
        %v1825 = vld [vmem:[%s5 + $0x1d8] sm:$0xff]
        %v1826 = vld [vmem:[%s5 + $0x1e0] sm:$0xff]
        %v1827 = vld [vmem:[%s5 + $0x1e8] sm:$0xff]
        %v1828 = vld [vmem:[%s5 + $0x1f0] sm:$0xff]
        %v1829 = vld [vmem:[%s5 + $0x1f8] sm:$0xff]
        %v1894 = vunpack.c.l.b16 %v1766
        %v1895 = vunpack.c.h.b16 %v1766
        %v1896 = vunpack.c.l.b16 %v1767
        %v1897 = vunpack.c.h.b16 %v1767
        %v1898 = vunpack.c.l.b16 %v1768
        %v1899 = vunpack.c.h.b16 %v1768
        %v1900 = vunpack.c.l.b16 %v1769
        %v1901 = vunpack.c.h.b16 %v1769
        %v1902 = vunpack.c.l.b16 %v1770
        %v1903 = vunpack.c.h.b16 %v1770
        %v1904 = vunpack.c.l.b16 %v1771
        %v1905 = vunpack.c.h.b16 %v1771
        %v1906 = vunpack.c.l.b16 %v1772
        %v1907 = vunpack.c.h.b16 %v1772
        %v1908 = vunpack.c.l.b16 %v1773
        %v1909 = vunpack.c.h.b16 %v1773
        %v1910 = vunpack.c.l.b16 %v1774
        %v1911 = vunpack.c.h.b16 %v1774
        %v1912 = vunpack.c.l.b16 %v1775
        %v1913 = vunpack.c.h.b16 %v1775
        %v1914 = vunpack.c.l.b16 %v1776
        %v1915 = vunpack.c.h.b16 %v1776
        %v1916 = vunpack.c.l.b16 %v1777
        %v1917 = vunpack.c.h.b16 %v1777
        %v1918 = vunpack.c.l.b16 %v1778
        %v1919 = vunpack.c.h.b16 %v1778
        %v1920 = vunpack.c.l.b16 %v1779
        %v1921 = vunpack.c.h.b16 %v1779
        %v1922 = vunpack.c.l.b16 %v1780
        %v1923 = vunpack.c.h.b16 %v1780
        %v1924 = vunpack.c.l.b16 %v1781
        %v1925 = vunpack.c.h.b16 %v1781
        %v1926 = vunpack.c.l.b16 %v1782
        %v1927 = vunpack.c.h.b16 %v1782
        %v1928 = vunpack.c.l.b16 %v1783
        %v1929 = vunpack.c.h.b16 %v1783
        %v1930 = vunpack.c.l.b16 %v1784
        %v1931 = vunpack.c.h.b16 %v1784
        %v1932 = vunpack.c.l.b16 %v1785
        %v1933 = vunpack.c.h.b16 %v1785
        %v1934 = vunpack.c.l.b16 %v1786
        %v1935 = vunpack.c.h.b16 %v1786
        %v1936 = vunpack.c.l.b16 %v1787
        %v1937 = vunpack.c.h.b16 %v1787
        %v1938 = vunpack.c.l.b16 %v1788
        %v1939 = vunpack.c.h.b16 %v1788
        %v1940 = vunpack.c.l.b16 %v1789
        %v1941 = vunpack.c.h.b16 %v1789
        %v1942 = vunpack.c.l.b16 %v1790
        %v1943 = vunpack.c.h.b16 %v1790
        %v1944 = vunpack.c.l.b16 %v1791
        %v1945 = vunpack.c.h.b16 %v1791
        %v1946 = vunpack.c.l.b16 %v1792
        %v1947 = vunpack.c.h.b16 %v1792
        %v1948 = vunpack.c.l.b16 %v1793
        %v1949 = vunpack.c.h.b16 %v1793
        %v1950 = vunpack.c.l.b16 %v1794
        %v1951 = vunpack.c.h.b16 %v1794
        %v1952 = vunpack.c.l.b16 %v1795
        %v1953 = vunpack.c.h.b16 %v1795
        %v1954 = vunpack.c.l.b16 %v1796
        %v1955 = vunpack.c.h.b16 %v1796
        %v1956 = vunpack.c.l.b16 %v1797
        %v1957 = vunpack.c.h.b16 %v1797
        %v1958 = vunpack.c.l.b16 %v1798
        %v1959 = vunpack.c.h.b16 %v1798
        %v1960 = vunpack.c.l.b16 %v1799
        %v1961 = vunpack.c.h.b16 %v1799
        %v1962 = vunpack.c.l.b16 %v1800
        %v1963 = vunpack.c.h.b16 %v1800
        %v1964 = vunpack.c.l.b16 %v1801
        %v1965 = vunpack.c.h.b16 %v1801
        %v1966 = vunpack.c.l.b16 %v1802
        %v1967 = vunpack.c.h.b16 %v1802
        %v1968 = vunpack.c.l.b16 %v1803
        %v1969 = vunpack.c.h.b16 %v1803
        %v1970 = vunpack.c.l.b16 %v1804
        %v1971 = vunpack.c.h.b16 %v1804
        %v1972 = vunpack.c.l.b16 %v1805
        %v1973 = vunpack.c.h.b16 %v1805
        %v1974 = vunpack.c.l.b16 %v1806
        %v1975 = vunpack.c.h.b16 %v1806
        %v1976 = vunpack.c.l.b16 %v1807
        %v1977 = vunpack.c.h.b16 %v1807
        %v1978 = vunpack.c.l.b16 %v1808
        %v1979 = vunpack.c.h.b16 %v1808
        %v1980 = vunpack.c.l.b16 %v1809
        %v1981 = vunpack.c.h.b16 %v1809
        %v1982 = vunpack.c.l.b16 %v1810
        %v1983 = vunpack.c.h.b16 %v1810
        %v1984 = vunpack.c.l.b16 %v1811
        %v1985 = vunpack.c.h.b16 %v1811
        %v1986 = vunpack.c.l.b16 %v1812
        %v1987 = vunpack.c.h.b16 %v1812
        %v1988 = vunpack.c.l.b16 %v1813
        %v1989 = vunpack.c.h.b16 %v1813
        %v1990 = vunpack.c.l.b16 %v1814
        %v1991 = vunpack.c.h.b16 %v1814
        %v1992 = vunpack.c.l.b16 %v1815
        %v1993 = vunpack.c.h.b16 %v1815
        %v1994 = vunpack.c.l.b16 %v1816
        %v1995 = vunpack.c.h.b16 %v1816
        %v1996 = vunpack.c.l.b16 %v1817
        %v1997 = vunpack.c.h.b16 %v1817
        %v1998 = vunpack.c.l.b16 %v1818
        %v1999 = vunpack.c.h.b16 %v1818
        %v2000 = vunpack.c.l.b16 %v1819
        %v2001 = vunpack.c.h.b16 %v1819
        %v2002 = vunpack.c.l.b16 %v1820
        %v2003 = vunpack.c.h.b16 %v1820
        %v2004 = vunpack.c.l.b16 %v1821
        %v2005 = vunpack.c.h.b16 %v1821
        %v2006 = vunpack.c.l.b16 %v1822
        %v2007 = vunpack.c.h.b16 %v1822
        %v2008 = vunpack.c.l.b16 %v1823
        %v2009 = vunpack.c.h.b16 %v1823
        %v2010 = vunpack.c.l.b16 %v1824
        %v2011 = vunpack.c.h.b16 %v1824
        %v2012 = vunpack.c.l.b16 %v1825
        %v2013 = vunpack.c.h.b16 %v1825
        %v2014 = vunpack.c.l.b16 %v1826
        %v2015 = vunpack.c.h.b16 %v1826
        %v2016 = vunpack.c.l.b16 %v1827
        %v2017 = vunpack.c.h.b16 %v1827
        %v2018 = vunpack.c.l.b16 %v1828
        %v2019 = vunpack.c.h.b16 %v1828
        %v2020 = vunpack.c.l.b16 %v1829
        %v2021 = vunpack.c.h.b16 %v1829
        %v2022 = vpack.c.b16 %v1902, %v1894
        %v2023 = vpack.c.b16 %v1903, %v1895
        %v2024 = vpack.c.b16 %v1904, %v1896
        %v2025 = vpack.c.b16 %v1905, %v1897
        %v2026 = vpack.c.b16 %v1906, %v1898
        %v2027 = vpack.c.b16 %v1907, %v1899
        %v2028 = vpack.c.b16 %v1908, %v1900
        %v2029 = vpack.c.b16 %v1909, %v1901
        %v2030 = vpack.c.b16 %v1918, %v1910
        %v2031 = vpack.c.b16 %v1919, %v1911
        %v2032 = vpack.c.b16 %v1920, %v1912
        %v2033 = vpack.c.b16 %v1921, %v1913
        %v2034 = vpack.c.b16 %v1922, %v1914
        %v2035 = vpack.c.b16 %v1923, %v1915
        %v2036 = vpack.c.b16 %v1924, %v1916
        %v2037 = vpack.c.b16 %v1925, %v1917
        %v2038 = vpack.c.b16 %v1934, %v1926
        %v2039 = vpack.c.b16 %v1935, %v1927
        %v2040 = vpack.c.b16 %v1936, %v1928
        %v2041 = vpack.c.b16 %v1937, %v1929
        %v2042 = vpack.c.b16 %v1938, %v1930
        %v2043 = vpack.c.b16 %v1939, %v1931
        %v2044 = vpack.c.b16 %v1940, %v1932
        %v2045 = vpack.c.b16 %v1941, %v1933
        %v2046 = vpack.c.b16 %v1950, %v1942
        %v2047 = vpack.c.b16 %v1951, %v1943
        %v2048 = vpack.c.b16 %v1952, %v1944
        %v2049 = vpack.c.b16 %v1953, %v1945
        %v2050 = vpack.c.b16 %v1954, %v1946
        %v2051 = vpack.c.b16 %v1955, %v1947
        %v2052 = vpack.c.b16 %v1956, %v1948
        %v2053 = vpack.c.b16 %v1957, %v1949
        %v2054 = vpack.c.b16 %v1966, %v1958
        %v2055 = vpack.c.b16 %v1967, %v1959
        %v2056 = vpack.c.b16 %v1968, %v1960
        %v2057 = vpack.c.b16 %v1969, %v1961
        %v2058 = vpack.c.b16 %v1970, %v1962
        %v2059 = vpack.c.b16 %v1971, %v1963
        %v2060 = vpack.c.b16 %v1972, %v1964
        %v2061 = vpack.c.b16 %v1973, %v1965
        %v2062 = vpack.c.b16 %v1982, %v1974
        %v2063 = vpack.c.b16 %v1983, %v1975
        %v2064 = vpack.c.b16 %v1984, %v1976
        %v2065 = vpack.c.b16 %v1985, %v1977
        %v2066 = vpack.c.b16 %v1986, %v1978
        %v2067 = vpack.c.b16 %v1987, %v1979
        %v2068 = vpack.c.b16 %v1988, %v1980
        %v2069 = vpack.c.b16 %v1989, %v1981
        %v2070 = vpack.c.b16 %v1998, %v1990
        %v2071 = vpack.c.b16 %v1999, %v1991
        %v2072 = vpack.c.b16 %v2000, %v1992
        %v2073 = vpack.c.b16 %v2001, %v1993
        %v2074 = vpack.c.b16 %v2002, %v1994
        %v2075 = vpack.c.b16 %v2003, %v1995
        %v2076 = vpack.c.b16 %v2004, %v1996
        %v2077 = vpack.c.b16 %v2005, %v1997
        %v2078 = vpack.c.b16 %v2014, %v2006
        %v2079 = vpack.c.b16 %v2015, %v2007
        %v2080 = vpack.c.b16 %v2016, %v2008
        %v2081 = vpack.c.b16 %v2017, %v2009
        %v2082 = vpack.c.b16 %v2018, %v2010
        %v2083 = vpack.c.b16 %v2019, %v2011
        %v2084 = vpack.c.b16 %v2020, %v2012
        %v2085 = vpack.c.b16 %v2021, %v2013
        %2150 = vmatprep.subr.bf16.mxu0 %v2079
        %2151 = vmatpush1.bf16.msra.mxu0 %v2078
        %2152 = vmatprep.subr.bf16.mxu0 %v2071
        %2153 = vmatpush1.bf16.msra.mxu0 %v2070
        %2154 = vmatprep.subr.bf16.mxu0 %v2063
        %2155 = vmatpush1.bf16.msra.mxu0 %v2062
        %2156 = vmatprep.subr.bf16.mxu0 %v2055
        %2157 = vmatpush1.bf16.msra.mxu0 %v2054
        %2158 = vmatprep.subr.bf16.mxu0 %v2047
        %2159 = vmatpush1.bf16.msra.mxu0 %v2046
        %2160 = vmatprep.subr.bf16.mxu0 %v2039
        %2161 = vmatpush1.bf16.msra.mxu0 %v2038
        %2162 = vmatprep.subr.bf16.mxu0 %v2031
        %2163 = vmatpush1.bf16.msra.mxu0 %v2030
        %2164 = vmatprep.subr.bf16.mxu0 %v2023
        %2165 = vmatpush1.bf16.msra.mxu0 %v2022
        %2166 = vmatprep.subr.bf16.mxu0 0
        %2167 = vmatpush2.bf16.msra.mxu0 0
        %2168 = vmatprep.subr.bf16.mxu0 0
        %2169 = vmatpush2.bf16.msra.mxu0 0
        %2170 = vmatprep.subr.bf16.mxu0 0
        %2171 = vmatpush2.bf16.msra.mxu0 0
        %2172 = vmatprep.subr.bf16.mxu0 0
        %2173 = vmatpush2.bf16.msra.mxu0 0
        %2174 = vmatprep.subr.bf16.mxu0 0
        %2175 = vmatpush2.bf16.msra.mxu0 0
        %2176 = vmatprep.subr.bf16.mxu0 0
        %2177 = vmatpush2.bf16.msra.mxu0 0
        %2178 = vmatprep.subr.bf16.mxu0 0
        %2179 = vmatpush2.bf16.msra.mxu0 0
        %2180 = vmatprep.subr.bf16.mxu0 0
        %2181 = vmatpush2.bf16.msra.mxu0 0
        %2182 = vmatprep.mubr.bf16.mxu0 0
        %2183 = vmatmul.mubr.bf16.gmra.mxu0 %v1734
        %v2184 = vpop.f32.mrf.mxu0
        %v2185 = vadd.f32 0.0, %v2184
        %v2186 = vpop.f32.mrf.mxu0
        %v2187 = vadd.f32 0.0, %v2186
        %v2188 = vpop.f32.mrf.mxu0
        %v2189 = vadd.f32 0.0, %v2188
        %v2190 = vpop.f32.mrf.mxu0
        %v2191 = vadd.f32 0.0, %v2190
        %2192 = vmatprep.mubr.bf16.mxu0 0
        %2193 = vmatmul.mubr.bf16.gmra.mxu0 %v1735
        %v2194 = vpop.f32.mrf.mxu0
        %v2195 = vadd.f32 0.0, %v2194
        %v2196 = vpop.f32.mrf.mxu0
        %v2197 = vadd.f32 0.0, %v2196
        %v2198 = vpop.f32.mrf.mxu0
        %v2199 = vadd.f32 0.0, %v2198
        %v2200 = vpop.f32.mrf.mxu0
        %v2201 = vadd.f32 0.0, %v2200
        %2202 = vmatprep.mubr.bf16.mxu0 0
        %2203 = vmatmul.mubr.bf16.gmra.mxu0 %v1736
        %v2204 = vpop.f32.mrf.mxu0
        %v2205 = vadd.f32 0.0, %v2204
        %v2206 = vpop.f32.mrf.mxu0
        %v2207 = vadd.f32 0.0, %v2206
        %v2208 = vpop.f32.mrf.mxu0
        %v2209 = vadd.f32 0.0, %v2208
        %v2210 = vpop.f32.mrf.mxu0
        %v2211 = vadd.f32 0.0, %v2210
        %2212 = vmatprep.mubr.bf16.mxu0 0
        %2213 = vmatmul.mubr.bf16.gmra.mxu0 %v1737
        %v2214 = vpop.f32.mrf.mxu0
        %v2215 = vadd.f32 0.0, %v2214
        %v2216 = vpop.f32.mrf.mxu0
        %v2217 = vadd.f32 0.0, %v2216
        %v2218 = vpop.f32.mrf.mxu0
        %v2219 = vadd.f32 0.0, %v2218
        %v2220 = vpop.f32.mrf.mxu0
        %v2221 = vadd.f32 0.0, %v2220
        %2222 = vmatprep.mubr.bf16.mxu0 0
        %2223 = vmatmul.mubr.bf16.gmra.mxu0 %v1738
        %v2224 = vpop.f32.mrf.mxu0
        %v2225 = vadd.f32 0.0, %v2224
        %v2226 = vpop.f32.mrf.mxu0
        %v2227 = vadd.f32 0.0, %v2226
        %v2228 = vpop.f32.mrf.mxu0
        %v2229 = vadd.f32 0.0, %v2228
        %v2230 = vpop.f32.mrf.mxu0
        %v2231 = vadd.f32 0.0, %v2230
        %2232 = vmatprep.mubr.bf16.mxu0 0
        %2233 = vmatmul.mubr.bf16.gmra.mxu0 %v1739
        %v2234 = vpop.f32.mrf.mxu0
        %v2235 = vadd.f32 0.0, %v2234
        %v2236 = vpop.f32.mrf.mxu0
        %v2237 = vadd.f32 0.0, %v2236
        %v2238 = vpop.f32.mrf.mxu0
        %v2239 = vadd.f32 0.0, %v2238
        %v2240 = vpop.f32.mrf.mxu0
        %v2241 = vadd.f32 0.0, %v2240
        %2242 = vmatprep.mubr.bf16.mxu0 0
        %2243 = vmatmul.mubr.bf16.gmra.mxu0 %v1740
        %v2244 = vpop.f32.mrf.mxu0
        %v2245 = vadd.f32 0.0, %v2244
        %v2246 = vpop.f32.mrf.mxu0
        %v2247 = vadd.f32 0.0, %v2246
        %v2248 = vpop.f32.mrf.mxu0
        %v2249 = vadd.f32 0.0, %v2248
        %v2250 = vpop.f32.mrf.mxu0
        %v2251 = vadd.f32 0.0, %v2250
        %2252 = vmatprep.mubr.bf16.mxu0 0
        %2253 = vmatmul.mubr.bf16.gmra.mxu0 %v1741
        %v2254 = vpop.f32.mrf.mxu0
        %v2255 = vadd.f32 0.0, %v2254
        %v2256 = vpop.f32.mrf.mxu0
        %v2257 = vadd.f32 0.0, %v2256
        %v2258 = vpop.f32.mrf.mxu0
        %v2259 = vadd.f32 0.0, %v2258
        %v2260 = vpop.f32.mrf.mxu0
        %v2261 = vadd.f32 0.0, %v2260
        %2262 = vmatprep.mubr.bf16.mxu0 0
        %2263 = vmatmul.mubr.bf16.gmra.mxu0 %v1742
        %v2264 = vpop.f32.mrf.mxu0
        %v2265 = vadd.f32 0.0, %v2264
        %v2266 = vpop.f32.mrf.mxu0
        %v2267 = vadd.f32 0.0, %v2266
        %v2268 = vpop.f32.mrf.mxu0
        %v2269 = vadd.f32 0.0, %v2268
        %v2270 = vpop.f32.mrf.mxu0
        %v2271 = vadd.f32 0.0, %v2270
        %2272 = vmatprep.mubr.bf16.mxu0 0
        %2273 = vmatmul.mubr.bf16.gmra.mxu0 %v1743
        %v2274 = vpop.f32.mrf.mxu0
        %v2275 = vadd.f32 0.0, %v2274
        %v2276 = vpop.f32.mrf.mxu0
        %v2277 = vadd.f32 0.0, %v2276
        %v2278 = vpop.f32.mrf.mxu0
        %v2279 = vadd.f32 0.0, %v2278
        %v2280 = vpop.f32.mrf.mxu0
        %v2281 = vadd.f32 0.0, %v2280
        %2282 = vmatprep.mubr.bf16.mxu0 0
        %2283 = vmatmul.mubr.bf16.gmra.mxu0 %v1744
        %v2284 = vpop.f32.mrf.mxu0
        %v2285 = vadd.f32 0.0, %v2284
        %v2286 = vpop.f32.mrf.mxu0
        %v2287 = vadd.f32 0.0, %v2286
        %v2288 = vpop.f32.mrf.mxu0
        %v2289 = vadd.f32 0.0, %v2288
        %v2290 = vpop.f32.mrf.mxu0
        %v2291 = vadd.f32 0.0, %v2290
        %2292 = vmatprep.mubr.bf16.mxu0 0
        %2293 = vmatmul.mubr.bf16.gmra.mxu0 %v1745
        %v2294 = vpop.f32.mrf.mxu0
        %v2295 = vadd.f32 0.0, %v2294
        %v2296 = vpop.f32.mrf.mxu0
        %v2297 = vadd.f32 0.0, %v2296
        %v2298 = vpop.f32.mrf.mxu0
        %v2299 = vadd.f32 0.0, %v2298
        %v2300 = vpop.f32.mrf.mxu0
        %v2301 = vadd.f32 0.0, %v2300
        %2302 = vmatprep.mubr.bf16.mxu0 0
        %2303 = vmatmul.mubr.bf16.gmra.mxu0 %v1746
        %v2304 = vpop.f32.mrf.mxu0
        %v2305 = vadd.f32 0.0, %v2304
        %v2306 = vpop.f32.mrf.mxu0
        %v2307 = vadd.f32 0.0, %v2306
        %v2308 = vpop.f32.mrf.mxu0
        %v2309 = vadd.f32 0.0, %v2308
        %v2310 = vpop.f32.mrf.mxu0
        %v2311 = vadd.f32 0.0, %v2310
        %2312 = vmatprep.mubr.bf16.mxu0 0
        %2313 = vmatmul.mubr.bf16.gmra.mxu0 %v1747
        %v2314 = vpop.f32.mrf.mxu0
        %v2315 = vadd.f32 0.0, %v2314
        %v2316 = vpop.f32.mrf.mxu0
        %v2317 = vadd.f32 0.0, %v2316
        %v2318 = vpop.f32.mrf.mxu0
        %v2319 = vadd.f32 0.0, %v2318
        %v2320 = vpop.f32.mrf.mxu0
        %v2321 = vadd.f32 0.0, %v2320
        %2322 = vmatprep.mubr.bf16.mxu0 0
        %2323 = vmatmul.mubr.bf16.gmra.mxu0 %v1748
        %v2324 = vpop.f32.mrf.mxu0
        %v2325 = vadd.f32 0.0, %v2324
        %v2326 = vpop.f32.mrf.mxu0
        %v2327 = vadd.f32 0.0, %v2326
        %v2328 = vpop.f32.mrf.mxu0
        %v2329 = vadd.f32 0.0, %v2328
        %v2330 = vpop.f32.mrf.mxu0
        %v2331 = vadd.f32 0.0, %v2330
        %2332 = vmatprep.mubr.bf16.mxu0 0
        %2333 = vmatmul.mubr.bf16.gmra.mxu0 %v1749
        %v2334 = vpop.f32.mrf.mxu0
        %v2335 = vadd.f32 0.0, %v2334
        %v2336 = vpop.f32.mrf.mxu0
        %v2337 = vadd.f32 0.0, %v2336
        %v2338 = vpop.f32.mrf.mxu0
        %v2339 = vadd.f32 0.0, %v2338
        %v2340 = vpop.f32.mrf.mxu0
        %v2341 = vadd.f32 0.0, %v2340
        %2342 = vmatprep.mubr.bf16.mxu0 0
        %2343 = vmatmul.mubr.bf16.gmra.mxu0 %v1750
        %v2344 = vpop.f32.mrf.mxu0
        %v2345 = vadd.f32 0.0, %v2344
        %v2346 = vpop.f32.mrf.mxu0
        %v2347 = vadd.f32 0.0, %v2346
        %v2348 = vpop.f32.mrf.mxu0
        %v2349 = vadd.f32 0.0, %v2348
        %v2350 = vpop.f32.mrf.mxu0
        %v2351 = vadd.f32 0.0, %v2350
        %2352 = vmatprep.mubr.bf16.mxu0 0
        %2353 = vmatmul.mubr.bf16.gmra.mxu0 %v1751
        %v2354 = vpop.f32.mrf.mxu0
        %v2355 = vadd.f32 0.0, %v2354
        %v2356 = vpop.f32.mrf.mxu0
        %v2357 = vadd.f32 0.0, %v2356
        %v2358 = vpop.f32.mrf.mxu0
        %v2359 = vadd.f32 0.0, %v2358
        %v2360 = vpop.f32.mrf.mxu0
        %v2361 = vadd.f32 0.0, %v2360
        %2362 = vmatprep.mubr.bf16.mxu0 0
        %2363 = vmatmul.mubr.bf16.gmra.mxu0 %v1752
        %v2364 = vpop.f32.mrf.mxu0
        %v2365 = vadd.f32 0.0, %v2364
        %v2366 = vpop.f32.mrf.mxu0
        %v2367 = vadd.f32 0.0, %v2366
        %v2368 = vpop.f32.mrf.mxu0
        %v2369 = vadd.f32 0.0, %v2368
        %v2370 = vpop.f32.mrf.mxu0
        %v2371 = vadd.f32 0.0, %v2370
        %2372 = vmatprep.mubr.bf16.mxu0 0
        %2373 = vmatmul.mubr.bf16.gmra.mxu0 %v1753
        %v2374 = vpop.f32.mrf.mxu0
        %v2375 = vadd.f32 0.0, %v2374
        %v2376 = vpop.f32.mrf.mxu0
        %v2377 = vadd.f32 0.0, %v2376
        %v2378 = vpop.f32.mrf.mxu0
        %v2379 = vadd.f32 0.0, %v2378
        %v2380 = vpop.f32.mrf.mxu0
        %v2381 = vadd.f32 0.0, %v2380
        %2382 = vmatprep.mubr.bf16.mxu0 0
        %2383 = vmatmul.mubr.bf16.gmra.mxu0 %v1754
        %v2384 = vpop.f32.mrf.mxu0
        %v2385 = vadd.f32 0.0, %v2384
        %v2386 = vpop.f32.mrf.mxu0
        %v2387 = vadd.f32 0.0, %v2386
        %v2388 = vpop.f32.mrf.mxu0
        %v2389 = vadd.f32 0.0, %v2388
        %v2390 = vpop.f32.mrf.mxu0
        %v2391 = vadd.f32 0.0, %v2390
        %2392 = vmatprep.mubr.bf16.mxu0 0
        %2393 = vmatmul.mubr.bf16.gmra.mxu0 %v1755
        %v2394 = vpop.f32.mrf.mxu0
        %v2395 = vadd.f32 0.0, %v2394
        %v2396 = vpop.f32.mrf.mxu0
        %v2397 = vadd.f32 0.0, %v2396
        %v2398 = vpop.f32.mrf.mxu0
        %v2399 = vadd.f32 0.0, %v2398
        %v2400 = vpop.f32.mrf.mxu0
        %v2401 = vadd.f32 0.0, %v2400
        %2402 = vmatprep.mubr.bf16.mxu0 0
        %2403 = vmatmul.mubr.bf16.gmra.mxu0 %v1756
        %v2404 = vpop.f32.mrf.mxu0
        %v2405 = vadd.f32 0.0, %v2404
        %v2406 = vpop.f32.mrf.mxu0
        %v2407 = vadd.f32 0.0, %v2406
        %v2408 = vpop.f32.mrf.mxu0
        %v2409 = vadd.f32 0.0, %v2408
        %v2410 = vpop.f32.mrf.mxu0
        %v2411 = vadd.f32 0.0, %v2410
        %2412 = vmatprep.mubr.bf16.mxu0 0
        %2413 = vmatmul.mubr.bf16.gmra.mxu0 %v1757
        %v2414 = vpop.f32.mrf.mxu0
        %v2415 = vadd.f32 0.0, %v2414
        %v2416 = vpop.f32.mrf.mxu0
        %v2417 = vadd.f32 0.0, %v2416
        %v2418 = vpop.f32.mrf.mxu0
        %v2419 = vadd.f32 0.0, %v2418
        %v2420 = vpop.f32.mrf.mxu0
        %v2421 = vadd.f32 0.0, %v2420
        %2422 = vmatprep.mubr.bf16.mxu0 0
        %2423 = vmatmul.mubr.bf16.gmra.mxu0 %v1758
        %v2424 = vpop.f32.mrf.mxu0
        %v2425 = vadd.f32 0.0, %v2424
        %v2426 = vpop.f32.mrf.mxu0
        %v2427 = vadd.f32 0.0, %v2426
        %v2428 = vpop.f32.mrf.mxu0
        %v2429 = vadd.f32 0.0, %v2428
        %v2430 = vpop.f32.mrf.mxu0
        %v2431 = vadd.f32 0.0, %v2430
        %2432 = vmatprep.mubr.bf16.mxu0 0
        %2433 = vmatmul.mubr.bf16.gmra.mxu0 %v1759
        %v2434 = vpop.f32.mrf.mxu0
        %v2435 = vadd.f32 0.0, %v2434
        %v2436 = vpop.f32.mrf.mxu0
        %v2437 = vadd.f32 0.0, %v2436
        %v2438 = vpop.f32.mrf.mxu0
        %v2439 = vadd.f32 0.0, %v2438
        %v2440 = vpop.f32.mrf.mxu0
        %v2441 = vadd.f32 0.0, %v2440
        %2442 = vmatprep.mubr.bf16.mxu0 0
        %2443 = vmatmul.mubr.bf16.gmra.mxu0 %v1760
        %v2444 = vpop.f32.mrf.mxu0
        %v2445 = vadd.f32 0.0, %v2444
        %v2446 = vpop.f32.mrf.mxu0
        %v2447 = vadd.f32 0.0, %v2446
        %v2448 = vpop.f32.mrf.mxu0
        %v2449 = vadd.f32 0.0, %v2448
        %v2450 = vpop.f32.mrf.mxu0
        %v2451 = vadd.f32 0.0, %v2450
        %2452 = vmatprep.mubr.bf16.mxu0 0
        %2453 = vmatmul.mubr.bf16.gmra.mxu0 %v1761
        %v2454 = vpop.f32.mrf.mxu0
        %v2455 = vadd.f32 0.0, %v2454
        %v2456 = vpop.f32.mrf.mxu0
        %v2457 = vadd.f32 0.0, %v2456
        %v2458 = vpop.f32.mrf.mxu0
        %v2459 = vadd.f32 0.0, %v2458
        %v2460 = vpop.f32.mrf.mxu0
        %v2461 = vadd.f32 0.0, %v2460
        %2462 = vmatprep.mubr.bf16.mxu0 0
        %2463 = vmatmul.mubr.bf16.gmra.mxu0 %v1762
        %v2464 = vpop.f32.mrf.mxu0
        %v2465 = vadd.f32 0.0, %v2464
        %v2466 = vpop.f32.mrf.mxu0
        %v2467 = vadd.f32 0.0, %v2466
        %v2468 = vpop.f32.mrf.mxu0
        %v2469 = vadd.f32 0.0, %v2468
        %v2470 = vpop.f32.mrf.mxu0
        %v2471 = vadd.f32 0.0, %v2470
        %2472 = vmatprep.mubr.bf16.mxu0 0
        %2473 = vmatmul.mubr.bf16.gmra.mxu0 %v1763
        %v2474 = vpop.f32.mrf.mxu0
        %v2475 = vadd.f32 0.0, %v2474
        %v2476 = vpop.f32.mrf.mxu0
        %v2477 = vadd.f32 0.0, %v2476
        %v2478 = vpop.f32.mrf.mxu0
        %v2479 = vadd.f32 0.0, %v2478
        %v2480 = vpop.f32.mrf.mxu0
        %v2481 = vadd.f32 0.0, %v2480
        %2482 = vmatprep.mubr.bf16.mxu0 0
        %2483 = vmatmul.mubr.bf16.gmra.mxu0 %v1764
        %v2484 = vpop.f32.mrf.mxu0
        %v2485 = vadd.f32 0.0, %v2484
        %v2486 = vpop.f32.mrf.mxu0
        %v2487 = vadd.f32 0.0, %v2486
        %v2488 = vpop.f32.mrf.mxu0
        %v2489 = vadd.f32 0.0, %v2488
        %v2490 = vpop.f32.mrf.mxu0
        %v2491 = vadd.f32 0.0, %v2490
        %2492 = vmatprep.mubr.bf16.mxu0 0
        %2493 = vmatmul.mubr.bf16.gmra.mxu0 %v1765
        %v2494 = vpop.f32.mrf.mxu0
        %v2495 = vadd.f32 0.0, %v2494
        %v2496 = vpop.f32.mrf.mxu0
        %v2497 = vadd.f32 0.0, %v2496
        %v2498 = vpop.f32.mrf.mxu0
        %v2499 = vadd.f32 0.0, %v2498
        %v2500 = vpop.f32.mrf.mxu0
        %v2501 = vadd.f32 0.0, %v2500
        %2502 = vdwg.mxu0
        %2503 = vmatprep.subr.bf16.mxu0 %v2081
        %2504 = vmatpush1.bf16.msra.mxu0 %v2080
        %2505 = vmatprep.subr.bf16.mxu0 %v2073
        %2506 = vmatpush1.bf16.msra.mxu0 %v2072
        %2507 = vmatprep.subr.bf16.mxu0 %v2065
        %2508 = vmatpush1.bf16.msra.mxu0 %v2064
        %2509 = vmatprep.subr.bf16.mxu0 %v2057
        %2510 = vmatpush1.bf16.msra.mxu0 %v2056
        %2511 = vmatprep.subr.bf16.mxu0 %v2049
        %2512 = vmatpush1.bf16.msra.mxu0 %v2048
        %2513 = vmatprep.subr.bf16.mxu0 %v2041
        %2514 = vmatpush1.bf16.msra.mxu0 %v2040
        %2515 = vmatprep.subr.bf16.mxu0 %v2033
        %2516 = vmatpush1.bf16.msra.mxu0 %v2032
        %2517 = vmatprep.subr.bf16.mxu0 %v2025
        %2518 = vmatpush1.bf16.msra.mxu0 %v2024
        %2519 = vmatprep.subr.bf16.mxu0 0
        %2520 = vmatpush2.bf16.msra.mxu0 0
        %2521 = vmatprep.subr.bf16.mxu0 0
        %2522 = vmatpush2.bf16.msra.mxu0 0
        %2523 = vmatprep.subr.bf16.mxu0 0
        %2524 = vmatpush2.bf16.msra.mxu0 0
        %2525 = vmatprep.subr.bf16.mxu0 0
        %2526 = vmatpush2.bf16.msra.mxu0 0
        %2527 = vmatprep.subr.bf16.mxu0 0
        %2528 = vmatpush2.bf16.msra.mxu0 0
        %2529 = vmatprep.subr.bf16.mxu0 0
        %2530 = vmatpush2.bf16.msra.mxu0 0
        %2531 = vmatprep.subr.bf16.mxu0 0
        %2532 = vmatpush2.bf16.msra.mxu0 0
        %2533 = vmatprep.subr.bf16.mxu0 0
        %2534 = vmatpush2.bf16.msra.mxu0 0
        %2535 = vmatprep.mubr.bf16.mxu0 0
        %2536 = vmatmul.mubr.bf16.gmra.mxu0 %v1734
        %v2537 = vpop.f32.mrf.mxu0
        %v2538 = vadd.f32 0.0, %v2537
        %v2539 = vpop.f32.mrf.mxu0
        %v2540 = vadd.f32 0.0, %v2539
        %v2541 = vpop.f32.mrf.mxu0
        %v2542 = vadd.f32 0.0, %v2541
        %v2543 = vpop.f32.mrf.mxu0
        %v2544 = vadd.f32 0.0, %v2543
        %2545 = vmatprep.mubr.bf16.mxu0 0
        %2546 = vmatmul.mubr.bf16.gmra.mxu0 %v1735
        %v2547 = vpop.f32.mrf.mxu0
        %v2548 = vadd.f32 0.0, %v2547
        %v2549 = vpop.f32.mrf.mxu0
        %v2550 = vadd.f32 0.0, %v2549
        %v2551 = vpop.f32.mrf.mxu0
        %v2552 = vadd.f32 0.0, %v2551
        %v2553 = vpop.f32.mrf.mxu0
        %v2554 = vadd.f32 0.0, %v2553
        %2555 = vmatprep.mubr.bf16.mxu0 0
        %2556 = vmatmul.mubr.bf16.gmra.mxu0 %v1736
        %v2557 = vpop.f32.mrf.mxu0
        %v2558 = vadd.f32 0.0, %v2557
        %v2559 = vpop.f32.mrf.mxu0
        %v2560 = vadd.f32 0.0, %v2559
        %v2561 = vpop.f32.mrf.mxu0
        %v2562 = vadd.f32 0.0, %v2561
        %v2563 = vpop.f32.mrf.mxu0
        %v2564 = vadd.f32 0.0, %v2563
        %2565 = vmatprep.mubr.bf16.mxu0 0
        %2566 = vmatmul.mubr.bf16.gmra.mxu0 %v1737
        %v2567 = vpop.f32.mrf.mxu0
        %v2568 = vadd.f32 0.0, %v2567
        %v2569 = vpop.f32.mrf.mxu0
        %v2570 = vadd.f32 0.0, %v2569
        %v2571 = vpop.f32.mrf.mxu0
        %v2572 = vadd.f32 0.0, %v2571
        %v2573 = vpop.f32.mrf.mxu0
        %v2574 = vadd.f32 0.0, %v2573
        %2575 = vmatprep.mubr.bf16.mxu0 0
        %2576 = vmatmul.mubr.bf16.gmra.mxu0 %v1738
        %v2577 = vpop.f32.mrf.mxu0
        %v2578 = vadd.f32 0.0, %v2577
        %v2579 = vpop.f32.mrf.mxu0
        %v2580 = vadd.f32 0.0, %v2579
        %v2581 = vpop.f32.mrf.mxu0
        %v2582 = vadd.f32 0.0, %v2581
        %v2583 = vpop.f32.mrf.mxu0
        %v2584 = vadd.f32 0.0, %v2583
        %2585 = vmatprep.mubr.bf16.mxu0 0
        %2586 = vmatmul.mubr.bf16.gmra.mxu0 %v1739
        %v2587 = vpop.f32.mrf.mxu0
        %v2588 = vadd.f32 0.0, %v2587
        %v2589 = vpop.f32.mrf.mxu0
        %v2590 = vadd.f32 0.0, %v2589
        %v2591 = vpop.f32.mrf.mxu0
        %v2592 = vadd.f32 0.0, %v2591
        %v2593 = vpop.f32.mrf.mxu0
        %v2594 = vadd.f32 0.0, %v2593
        %2595 = vmatprep.mubr.bf16.mxu0 0
        %2596 = vmatmul.mubr.bf16.gmra.mxu0 %v1740
        %v2597 = vpop.f32.mrf.mxu0
        %v2598 = vadd.f32 0.0, %v2597
        %v2599 = vpop.f32.mrf.mxu0
        %v2600 = vadd.f32 0.0, %v2599
        %v2601 = vpop.f32.mrf.mxu0
        %v2602 = vadd.f32 0.0, %v2601
        %v2603 = vpop.f32.mrf.mxu0
        %v2604 = vadd.f32 0.0, %v2603
        %2605 = vmatprep.mubr.bf16.mxu0 0
        %2606 = vmatmul.mubr.bf16.gmra.mxu0 %v1741
        %v2607 = vpop.f32.mrf.mxu0
        %v2608 = vadd.f32 0.0, %v2607
        %v2609 = vpop.f32.mrf.mxu0
        %v2610 = vadd.f32 0.0, %v2609
        %v2611 = vpop.f32.mrf.mxu0
        %v2612 = vadd.f32 0.0, %v2611
        %v2613 = vpop.f32.mrf.mxu0
        %v2614 = vadd.f32 0.0, %v2613
        %2615 = vmatprep.mubr.bf16.mxu0 0
        %2616 = vmatmul.mubr.bf16.gmra.mxu0 %v1742
        %v2617 = vpop.f32.mrf.mxu0
        %v2618 = vadd.f32 0.0, %v2617
        %v2619 = vpop.f32.mrf.mxu0
        %v2620 = vadd.f32 0.0, %v2619
        %v2621 = vpop.f32.mrf.mxu0
        %v2622 = vadd.f32 0.0, %v2621
        %v2623 = vpop.f32.mrf.mxu0
        %v2624 = vadd.f32 0.0, %v2623
        %2625 = vmatprep.mubr.bf16.mxu0 0
        %2626 = vmatmul.mubr.bf16.gmra.mxu0 %v1743
        %v2627 = vpop.f32.mrf.mxu0
        %v2628 = vadd.f32 0.0, %v2627
        %v2629 = vpop.f32.mrf.mxu0
        %v2630 = vadd.f32 0.0, %v2629
        %v2631 = vpop.f32.mrf.mxu0
        %v2632 = vadd.f32 0.0, %v2631
        %v2633 = vpop.f32.mrf.mxu0
        %v2634 = vadd.f32 0.0, %v2633
        %2635 = vmatprep.mubr.bf16.mxu0 0
        %2636 = vmatmul.mubr.bf16.gmra.mxu0 %v1744
        %v2637 = vpop.f32.mrf.mxu0
        %v2638 = vadd.f32 0.0, %v2637
        %v2639 = vpop.f32.mrf.mxu0
        %v2640 = vadd.f32 0.0, %v2639
        %v2641 = vpop.f32.mrf.mxu0
        %v2642 = vadd.f32 0.0, %v2641
        %v2643 = vpop.f32.mrf.mxu0
        %v2644 = vadd.f32 0.0, %v2643
        %2645 = vmatprep.mubr.bf16.mxu0 0
        %2646 = vmatmul.mubr.bf16.gmra.mxu0 %v1745
        %v2647 = vpop.f32.mrf.mxu0
        %v2648 = vadd.f32 0.0, %v2647
        %v2649 = vpop.f32.mrf.mxu0
        %v2650 = vadd.f32 0.0, %v2649
        %v2651 = vpop.f32.mrf.mxu0
        %v2652 = vadd.f32 0.0, %v2651
        %v2653 = vpop.f32.mrf.mxu0
        %v2654 = vadd.f32 0.0, %v2653
        %2655 = vmatprep.mubr.bf16.mxu0 0
        %2656 = vmatmul.mubr.bf16.gmra.mxu0 %v1746
        %v2657 = vpop.f32.mrf.mxu0
        %v2658 = vadd.f32 0.0, %v2657
        %v2659 = vpop.f32.mrf.mxu0
        %v2660 = vadd.f32 0.0, %v2659
        %v2661 = vpop.f32.mrf.mxu0
        %v2662 = vadd.f32 0.0, %v2661
        %v2663 = vpop.f32.mrf.mxu0
        %v2664 = vadd.f32 0.0, %v2663
        %2665 = vmatprep.mubr.bf16.mxu0 0
        %2666 = vmatmul.mubr.bf16.gmra.mxu0 %v1747
        %v2667 = vpop.f32.mrf.mxu0
        %v2668 = vadd.f32 0.0, %v2667
        %v2669 = vpop.f32.mrf.mxu0
        %v2670 = vadd.f32 0.0, %v2669
        %v2671 = vpop.f32.mrf.mxu0
        %v2672 = vadd.f32 0.0, %v2671
        %v2673 = vpop.f32.mrf.mxu0
        %v2674 = vadd.f32 0.0, %v2673
        %2675 = vmatprep.mubr.bf16.mxu0 0
        %2676 = vmatmul.mubr.bf16.gmra.mxu0 %v1748
        %v2677 = vpop.f32.mrf.mxu0
        %v2678 = vadd.f32 0.0, %v2677
        %v2679 = vpop.f32.mrf.mxu0
        %v2680 = vadd.f32 0.0, %v2679
        %v2681 = vpop.f32.mrf.mxu0
        %v2682 = vadd.f32 0.0, %v2681
        %v2683 = vpop.f32.mrf.mxu0
        %v2684 = vadd.f32 0.0, %v2683
        %2685 = vmatprep.mubr.bf16.mxu0 0
        %2686 = vmatmul.mubr.bf16.gmra.mxu0 %v1749
        %v2687 = vpop.f32.mrf.mxu0
        %v2688 = vadd.f32 0.0, %v2687
        %v2689 = vpop.f32.mrf.mxu0
        %v2690 = vadd.f32 0.0, %v2689
        %v2691 = vpop.f32.mrf.mxu0
        %v2692 = vadd.f32 0.0, %v2691
        %v2693 = vpop.f32.mrf.mxu0
        %v2694 = vadd.f32 0.0, %v2693
        %2695 = vmatprep.mubr.bf16.mxu0 0
        %2696 = vmatmul.mubr.bf16.gmra.mxu0 %v1750
        %v2697 = vpop.f32.mrf.mxu0
        %v2698 = vadd.f32 0.0, %v2697
        %v2699 = vpop.f32.mrf.mxu0
        %v2700 = vadd.f32 0.0, %v2699
        %v2701 = vpop.f32.mrf.mxu0
        %v2702 = vadd.f32 0.0, %v2701
        %v2703 = vpop.f32.mrf.mxu0
        %v2704 = vadd.f32 0.0, %v2703
        %2705 = vmatprep.mubr.bf16.mxu0 0
        %2706 = vmatmul.mubr.bf16.gmra.mxu0 %v1751
        %v2707 = vpop.f32.mrf.mxu0
        %v2708 = vadd.f32 0.0, %v2707
        %v2709 = vpop.f32.mrf.mxu0
        %v2710 = vadd.f32 0.0, %v2709
        %v2711 = vpop.f32.mrf.mxu0
        %v2712 = vadd.f32 0.0, %v2711
        %v2713 = vpop.f32.mrf.mxu0
        %v2714 = vadd.f32 0.0, %v2713
        %2715 = vmatprep.mubr.bf16.mxu0 0
        %2716 = vmatmul.mubr.bf16.gmra.mxu0 %v1752
        %v2717 = vpop.f32.mrf.mxu0
        %v2718 = vadd.f32 0.0, %v2717
        %v2719 = vpop.f32.mrf.mxu0
        %v2720 = vadd.f32 0.0, %v2719
        %v2721 = vpop.f32.mrf.mxu0
        %v2722 = vadd.f32 0.0, %v2721
        %v2723 = vpop.f32.mrf.mxu0
        %v2724 = vadd.f32 0.0, %v2723
        %2725 = vmatprep.mubr.bf16.mxu0 0
        %2726 = vmatmul.mubr.bf16.gmra.mxu0 %v1753
        %v2727 = vpop.f32.mrf.mxu0
        %v2728 = vadd.f32 0.0, %v2727
        %v2729 = vpop.f32.mrf.mxu0
        %v2730 = vadd.f32 0.0, %v2729
        %v2731 = vpop.f32.mrf.mxu0
        %v2732 = vadd.f32 0.0, %v2731
        %v2733 = vpop.f32.mrf.mxu0
        %v2734 = vadd.f32 0.0, %v2733
        %2735 = vmatprep.mubr.bf16.mxu0 0
        %2736 = vmatmul.mubr.bf16.gmra.mxu0 %v1754
        %v2737 = vpop.f32.mrf.mxu0
        %v2738 = vadd.f32 0.0, %v2737
        %v2739 = vpop.f32.mrf.mxu0
        %v2740 = vadd.f32 0.0, %v2739
        %v2741 = vpop.f32.mrf.mxu0
        %v2742 = vadd.f32 0.0, %v2741
        %v2743 = vpop.f32.mrf.mxu0
        %v2744 = vadd.f32 0.0, %v2743
        %2745 = vmatprep.mubr.bf16.mxu0 0
        %2746 = vmatmul.mubr.bf16.gmra.mxu0 %v1755
        %v2747 = vpop.f32.mrf.mxu0
        %v2748 = vadd.f32 0.0, %v2747
        %v2749 = vpop.f32.mrf.mxu0
        %v2750 = vadd.f32 0.0, %v2749
        %v2751 = vpop.f32.mrf.mxu0
        %v2752 = vadd.f32 0.0, %v2751
        %v2753 = vpop.f32.mrf.mxu0
        %v2754 = vadd.f32 0.0, %v2753
        %2755 = vmatprep.mubr.bf16.mxu0 0
        %2756 = vmatmul.mubr.bf16.gmra.mxu0 %v1756
        %v2757 = vpop.f32.mrf.mxu0
        %v2758 = vadd.f32 0.0, %v2757
        %v2759 = vpop.f32.mrf.mxu0
        %v2760 = vadd.f32 0.0, %v2759
        %v2761 = vpop.f32.mrf.mxu0
        %v2762 = vadd.f32 0.0, %v2761
        %v2763 = vpop.f32.mrf.mxu0
        %v2764 = vadd.f32 0.0, %v2763
        %2765 = vmatprep.mubr.bf16.mxu0 0
        %2766 = vmatmul.mubr.bf16.gmra.mxu0 %v1757
        %v2767 = vpop.f32.mrf.mxu0
        %v2768 = vadd.f32 0.0, %v2767
        %v2769 = vpop.f32.mrf.mxu0
        %v2770 = vadd.f32 0.0, %v2769
        %v2771 = vpop.f32.mrf.mxu0
        %v2772 = vadd.f32 0.0, %v2771
        %v2773 = vpop.f32.mrf.mxu0
        %v2774 = vadd.f32 0.0, %v2773
        %2775 = vmatprep.mubr.bf16.mxu0 0
        %2776 = vmatmul.mubr.bf16.gmra.mxu0 %v1758
        %v2777 = vpop.f32.mrf.mxu0
        %v2778 = vadd.f32 0.0, %v2777
        %v2779 = vpop.f32.mrf.mxu0
        %v2780 = vadd.f32 0.0, %v2779
        %v2781 = vpop.f32.mrf.mxu0
        %v2782 = vadd.f32 0.0, %v2781
        %v2783 = vpop.f32.mrf.mxu0
        %v2784 = vadd.f32 0.0, %v2783
        %2785 = vmatprep.mubr.bf16.mxu0 0
        %2786 = vmatmul.mubr.bf16.gmra.mxu0 %v1759
        %v2787 = vpop.f32.mrf.mxu0
        %v2788 = vadd.f32 0.0, %v2787
        %v2789 = vpop.f32.mrf.mxu0
        %v2790 = vadd.f32 0.0, %v2789
        %v2791 = vpop.f32.mrf.mxu0
        %v2792 = vadd.f32 0.0, %v2791
        %v2793 = vpop.f32.mrf.mxu0
        %v2794 = vadd.f32 0.0, %v2793
        %2795 = vmatprep.mubr.bf16.mxu0 0
        %2796 = vmatmul.mubr.bf16.gmra.mxu0 %v1760
        %v2797 = vpop.f32.mrf.mxu0
        %v2798 = vadd.f32 0.0, %v2797
        %v2799 = vpop.f32.mrf.mxu0
        %v2800 = vadd.f32 0.0, %v2799
        %v2801 = vpop.f32.mrf.mxu0
        %v2802 = vadd.f32 0.0, %v2801
        %v2803 = vpop.f32.mrf.mxu0
        %v2804 = vadd.f32 0.0, %v2803
        %2805 = vmatprep.mubr.bf16.mxu0 0
        %2806 = vmatmul.mubr.bf16.gmra.mxu0 %v1761
        %v2807 = vpop.f32.mrf.mxu0
        %v2808 = vadd.f32 0.0, %v2807
        %v2809 = vpop.f32.mrf.mxu0
        %v2810 = vadd.f32 0.0, %v2809
        %v2811 = vpop.f32.mrf.mxu0
        %v2812 = vadd.f32 0.0, %v2811
        %v2813 = vpop.f32.mrf.mxu0
        %v2814 = vadd.f32 0.0, %v2813
        %2815 = vmatprep.mubr.bf16.mxu0 0
        %2816 = vmatmul.mubr.bf16.gmra.mxu0 %v1762
        %v2817 = vpop.f32.mrf.mxu0
        %v2818 = vadd.f32 0.0, %v2817
        %v2819 = vpop.f32.mrf.mxu0
        %v2820 = vadd.f32 0.0, %v2819
        %v2821 = vpop.f32.mrf.mxu0
        %v2822 = vadd.f32 0.0, %v2821
        %v2823 = vpop.f32.mrf.mxu0
        %v2824 = vadd.f32 0.0, %v2823
        %2825 = vmatprep.mubr.bf16.mxu0 0
        %2826 = vmatmul.mubr.bf16.gmra.mxu0 %v1763
        %v2827 = vpop.f32.mrf.mxu0
        %v2828 = vadd.f32 0.0, %v2827
        %v2829 = vpop.f32.mrf.mxu0
        %v2830 = vadd.f32 0.0, %v2829
        %v2831 = vpop.f32.mrf.mxu0
        %v2832 = vadd.f32 0.0, %v2831
        %v2833 = vpop.f32.mrf.mxu0
        %v2834 = vadd.f32 0.0, %v2833
        %2835 = vmatprep.mubr.bf16.mxu0 0
        %2836 = vmatmul.mubr.bf16.gmra.mxu0 %v1764
        %v2837 = vpop.f32.mrf.mxu0
        %v2838 = vadd.f32 0.0, %v2837
        %v2839 = vpop.f32.mrf.mxu0
        %v2840 = vadd.f32 0.0, %v2839
        %v2841 = vpop.f32.mrf.mxu0
        %v2842 = vadd.f32 0.0, %v2841
        %v2843 = vpop.f32.mrf.mxu0
        %v2844 = vadd.f32 0.0, %v2843
        %2845 = vmatprep.mubr.bf16.mxu0 0
        %2846 = vmatmul.mubr.bf16.gmra.mxu0 %v1765
        %v2847 = vpop.f32.mrf.mxu0
        %v2848 = vadd.f32 0.0, %v2847
        %v2849 = vpop.f32.mrf.mxu0
        %v2850 = vadd.f32 0.0, %v2849
        %v2851 = vpop.f32.mrf.mxu0
        %v2852 = vadd.f32 0.0, %v2851
        %v2853 = vpop.f32.mrf.mxu0
        %v2854 = vadd.f32 0.0, %v2853
        %2855 = vdwg.mxu0
        %2856 = vmatprep.subr.bf16.mxu0 %v2083
        %2857 = vmatpush1.bf16.msra.mxu0 %v2082
        %2858 = vmatprep.subr.bf16.mxu0 %v2075
        %2859 = vmatpush1.bf16.msra.mxu0 %v2074
        %2860 = vmatprep.subr.bf16.mxu0 %v2067
        %2861 = vmatpush1.bf16.msra.mxu0 %v2066
        %2862 = vmatprep.subr.bf16.mxu0 %v2059
        %2863 = vmatpush1.bf16.msra.mxu0 %v2058
        %2864 = vmatprep.subr.bf16.mxu0 %v2051
        %2865 = vmatpush1.bf16.msra.mxu0 %v2050
        %2866 = vmatprep.subr.bf16.mxu0 %v2043
        %2867 = vmatpush1.bf16.msra.mxu0 %v2042
        %2868 = vmatprep.subr.bf16.mxu0 %v2035
        %2869 = vmatpush1.bf16.msra.mxu0 %v2034
        %2870 = vmatprep.subr.bf16.mxu0 %v2027
        %2871 = vmatpush1.bf16.msra.mxu0 %v2026
        %2872 = vmatprep.subr.bf16.mxu0 0
        %2873 = vmatpush2.bf16.msra.mxu0 0
        %2874 = vmatprep.subr.bf16.mxu0 0
        %2875 = vmatpush2.bf16.msra.mxu0 0
        %2876 = vmatprep.subr.bf16.mxu0 0
        %2877 = vmatpush2.bf16.msra.mxu0 0
        %2878 = vmatprep.subr.bf16.mxu0 0
        %2879 = vmatpush2.bf16.msra.mxu0 0
        %2880 = vmatprep.subr.bf16.mxu0 0
        %2881 = vmatpush2.bf16.msra.mxu0 0
        %2882 = vmatprep.subr.bf16.mxu0 0
        %2883 = vmatpush2.bf16.msra.mxu0 0
        %2884 = vmatprep.subr.bf16.mxu0 0
        %2885 = vmatpush2.bf16.msra.mxu0 0
        %2886 = vmatprep.subr.bf16.mxu0 0
        %2887 = vmatpush2.bf16.msra.mxu0 0
        %2888 = vmatprep.mubr.bf16.mxu0 0
        %2889 = vmatmul.mubr.bf16.gmra.mxu0 %v1734
        %v2890 = vpop.f32.mrf.mxu0
        %v2891 = vadd.f32 0.0, %v2890
        %v2892 = vpop.f32.mrf.mxu0
        %v2893 = vadd.f32 0.0, %v2892
        %v2894 = vpop.f32.mrf.mxu0
        %v2895 = vadd.f32 0.0, %v2894
        %v2896 = vpop.f32.mrf.mxu0
        %v2897 = vadd.f32 0.0, %v2896
        %2898 = vmatprep.mubr.bf16.mxu0 0
        %2899 = vmatmul.mubr.bf16.gmra.mxu0 %v1735
        %v2900 = vpop.f32.mrf.mxu0
        %v2901 = vadd.f32 0.0, %v2900
        %v2902 = vpop.f32.mrf.mxu0
        %v2903 = vadd.f32 0.0, %v2902
        %v2904 = vpop.f32.mrf.mxu0
        %v2905 = vadd.f32 0.0, %v2904
        %v2906 = vpop.f32.mrf.mxu0
        %v2907 = vadd.f32 0.0, %v2906
        %2908 = vmatprep.mubr.bf16.mxu0 0
        %2909 = vmatmul.mubr.bf16.gmra.mxu0 %v1736
        %v2910 = vpop.f32.mrf.mxu0
        %v2911 = vadd.f32 0.0, %v2910
        %v2912 = vpop.f32.mrf.mxu0
        %v2913 = vadd.f32 0.0, %v2912
        %v2914 = vpop.f32.mrf.mxu0
        %v2915 = vadd.f32 0.0, %v2914
        %v2916 = vpop.f32.mrf.mxu0
        %v2917 = vadd.f32 0.0, %v2916
        %2918 = vmatprep.mubr.bf16.mxu0 0
        %2919 = vmatmul.mubr.bf16.gmra.mxu0 %v1737
        %v2920 = vpop.f32.mrf.mxu0
        %v2921 = vadd.f32 0.0, %v2920
        %v2922 = vpop.f32.mrf.mxu0
        %v2923 = vadd.f32 0.0, %v2922
        %v2924 = vpop.f32.mrf.mxu0
        %v2925 = vadd.f32 0.0, %v2924
        %v2926 = vpop.f32.mrf.mxu0
        %v2927 = vadd.f32 0.0, %v2926
        %2928 = vmatprep.mubr.bf16.mxu0 0
        %2929 = vmatmul.mubr.bf16.gmra.mxu0 %v1738
        %v2930 = vpop.f32.mrf.mxu0
        %v2931 = vadd.f32 0.0, %v2930
        %v2932 = vpop.f32.mrf.mxu0
        %v2933 = vadd.f32 0.0, %v2932
        %v2934 = vpop.f32.mrf.mxu0
        %v2935 = vadd.f32 0.0, %v2934
        %v2936 = vpop.f32.mrf.mxu0
        %v2937 = vadd.f32 0.0, %v2936
        %2938 = vmatprep.mubr.bf16.mxu0 0
        %2939 = vmatmul.mubr.bf16.gmra.mxu0 %v1739
        %v2940 = vpop.f32.mrf.mxu0
        %v2941 = vadd.f32 0.0, %v2940
        %v2942 = vpop.f32.mrf.mxu0
        %v2943 = vadd.f32 0.0, %v2942
        %v2944 = vpop.f32.mrf.mxu0
        %v2945 = vadd.f32 0.0, %v2944
        %v2946 = vpop.f32.mrf.mxu0
        %v2947 = vadd.f32 0.0, %v2946
        %2948 = vmatprep.mubr.bf16.mxu0 0
        %2949 = vmatmul.mubr.bf16.gmra.mxu0 %v1740
        %v2950 = vpop.f32.mrf.mxu0
        %v2951 = vadd.f32 0.0, %v2950
        %v2952 = vpop.f32.mrf.mxu0
        %v2953 = vadd.f32 0.0, %v2952
        %v2954 = vpop.f32.mrf.mxu0
        %v2955 = vadd.f32 0.0, %v2954
        %v2956 = vpop.f32.mrf.mxu0
        %v2957 = vadd.f32 0.0, %v2956
        %2958 = vmatprep.mubr.bf16.mxu0 0
        %2959 = vmatmul.mubr.bf16.gmra.mxu0 %v1741
        %v2960 = vpop.f32.mrf.mxu0
        %v2961 = vadd.f32 0.0, %v2960
        %v2962 = vpop.f32.mrf.mxu0
        %v2963 = vadd.f32 0.0, %v2962
        %v2964 = vpop.f32.mrf.mxu0
        %v2965 = vadd.f32 0.0, %v2964
        %v2966 = vpop.f32.mrf.mxu0
        %v2967 = vadd.f32 0.0, %v2966
        %2968 = vmatprep.mubr.bf16.mxu0 0
        %2969 = vmatmul.mubr.bf16.gmra.mxu0 %v1742
        %v2970 = vpop.f32.mrf.mxu0
        %v2971 = vadd.f32 0.0, %v2970
        %v2972 = vpop.f32.mrf.mxu0
        %v2973 = vadd.f32 0.0, %v2972
        %v2974 = vpop.f32.mrf.mxu0
        %v2975 = vadd.f32 0.0, %v2974
        %v2976 = vpop.f32.mrf.mxu0
        %v2977 = vadd.f32 0.0, %v2976
        %2978 = vmatprep.mubr.bf16.mxu0 0
        %2979 = vmatmul.mubr.bf16.gmra.mxu0 %v1743
        %v2980 = vpop.f32.mrf.mxu0
        %v2981 = vadd.f32 0.0, %v2980
        %v2982 = vpop.f32.mrf.mxu0
        %v2983 = vadd.f32 0.0, %v2982
        %v2984 = vpop.f32.mrf.mxu0
        %v2985 = vadd.f32 0.0, %v2984
        %v2986 = vpop.f32.mrf.mxu0
        %v2987 = vadd.f32 0.0, %v2986
        %2988 = vmatprep.mubr.bf16.mxu0 0
        %2989 = vmatmul.mubr.bf16.gmra.mxu0 %v1744
        %v2990 = vpop.f32.mrf.mxu0
        %v2991 = vadd.f32 0.0, %v2990
        %v2992 = vpop.f32.mrf.mxu0
        %v2993 = vadd.f32 0.0, %v2992
        %v2994 = vpop.f32.mrf.mxu0
        %v2995 = vadd.f32 0.0, %v2994
        %v2996 = vpop.f32.mrf.mxu0
        %v2997 = vadd.f32 0.0, %v2996
        %2998 = vmatprep.mubr.bf16.mxu0 0
        %2999 = vmatmul.mubr.bf16.gmra.mxu0 %v1745
        %v3000 = vpop.f32.mrf.mxu0
        %v3001 = vadd.f32 0.0, %v3000
        %v3002 = vpop.f32.mrf.mxu0
        %v3003 = vadd.f32 0.0, %v3002
        %v3004 = vpop.f32.mrf.mxu0
        %v3005 = vadd.f32 0.0, %v3004
        %v3006 = vpop.f32.mrf.mxu0
        %v3007 = vadd.f32 0.0, %v3006
        %3008 = vmatprep.mubr.bf16.mxu0 0
        %3009 = vmatmul.mubr.bf16.gmra.mxu0 %v1746
        %v3010 = vpop.f32.mrf.mxu0
        %v3011 = vadd.f32 0.0, %v3010
        %v3012 = vpop.f32.mrf.mxu0
        %v3013 = vadd.f32 0.0, %v3012
        %v3014 = vpop.f32.mrf.mxu0
        %v3015 = vadd.f32 0.0, %v3014
        %v3016 = vpop.f32.mrf.mxu0
        %v3017 = vadd.f32 0.0, %v3016
        %3018 = vmatprep.mubr.bf16.mxu0 0
        %3019 = vmatmul.mubr.bf16.gmra.mxu0 %v1747
        %v3020 = vpop.f32.mrf.mxu0
        %v3021 = vadd.f32 0.0, %v3020
        %v3022 = vpop.f32.mrf.mxu0
        %v3023 = vadd.f32 0.0, %v3022
        %v3024 = vpop.f32.mrf.mxu0
        %v3025 = vadd.f32 0.0, %v3024
        %v3026 = vpop.f32.mrf.mxu0
        %v3027 = vadd.f32 0.0, %v3026
        %3028 = vmatprep.mubr.bf16.mxu0 0
        %3029 = vmatmul.mubr.bf16.gmra.mxu0 %v1748
        %v3030 = vpop.f32.mrf.mxu0
        %v3031 = vadd.f32 0.0, %v3030
        %v3032 = vpop.f32.mrf.mxu0
        %v3033 = vadd.f32 0.0, %v3032
        %v3034 = vpop.f32.mrf.mxu0
        %v3035 = vadd.f32 0.0, %v3034
        %v3036 = vpop.f32.mrf.mxu0
        %v3037 = vadd.f32 0.0, %v3036
        %3038 = vmatprep.mubr.bf16.mxu0 0
        %3039 = vmatmul.mubr.bf16.gmra.mxu0 %v1749
        %v3040 = vpop.f32.mrf.mxu0
        %v3041 = vadd.f32 0.0, %v3040
        %v3042 = vpop.f32.mrf.mxu0
        %v3043 = vadd.f32 0.0, %v3042
        %v3044 = vpop.f32.mrf.mxu0
        %v3045 = vadd.f32 0.0, %v3044
        %v3046 = vpop.f32.mrf.mxu0
        %v3047 = vadd.f32 0.0, %v3046
        %3048 = vmatprep.mubr.bf16.mxu0 0
        %3049 = vmatmul.mubr.bf16.gmra.mxu0 %v1750
        %v3050 = vpop.f32.mrf.mxu0
        %v3051 = vadd.f32 0.0, %v3050
        %v3052 = vpop.f32.mrf.mxu0
        %v3053 = vadd.f32 0.0, %v3052
        %v3054 = vpop.f32.mrf.mxu0
        %v3055 = vadd.f32 0.0, %v3054
        %v3056 = vpop.f32.mrf.mxu0
        %v3057 = vadd.f32 0.0, %v3056
        %3058 = vmatprep.mubr.bf16.mxu0 0
        %3059 = vmatmul.mubr.bf16.gmra.mxu0 %v1751
        %v3060 = vpop.f32.mrf.mxu0
        %v3061 = vadd.f32 0.0, %v3060
        %v3062 = vpop.f32.mrf.mxu0
        %v3063 = vadd.f32 0.0, %v3062
        %v3064 = vpop.f32.mrf.mxu0
        %v3065 = vadd.f32 0.0, %v3064
        %v3066 = vpop.f32.mrf.mxu0
        %v3067 = vadd.f32 0.0, %v3066
        %3068 = vmatprep.mubr.bf16.mxu0 0
        %3069 = vmatmul.mubr.bf16.gmra.mxu0 %v1752
        %v3070 = vpop.f32.mrf.mxu0
        %v3071 = vadd.f32 0.0, %v3070
        %v3072 = vpop.f32.mrf.mxu0
        %v3073 = vadd.f32 0.0, %v3072
        %v3074 = vpop.f32.mrf.mxu0
        %v3075 = vadd.f32 0.0, %v3074
        %v3076 = vpop.f32.mrf.mxu0
        %v3077 = vadd.f32 0.0, %v3076
        %3078 = vmatprep.mubr.bf16.mxu0 0
        %3079 = vmatmul.mubr.bf16.gmra.mxu0 %v1753
        %v3080 = vpop.f32.mrf.mxu0
        %v3081 = vadd.f32 0.0, %v3080
        %v3082 = vpop.f32.mrf.mxu0
        %v3083 = vadd.f32 0.0, %v3082
        %v3084 = vpop.f32.mrf.mxu0
        %v3085 = vadd.f32 0.0, %v3084
        %v3086 = vpop.f32.mrf.mxu0
        %v3087 = vadd.f32 0.0, %v3086
        %3088 = vmatprep.mubr.bf16.mxu0 0
        %3089 = vmatmul.mubr.bf16.gmra.mxu0 %v1754
        %v3090 = vpop.f32.mrf.mxu0
        %v3091 = vadd.f32 0.0, %v3090
        %v3092 = vpop.f32.mrf.mxu0
        %v3093 = vadd.f32 0.0, %v3092
        %v3094 = vpop.f32.mrf.mxu0
        %v3095 = vadd.f32 0.0, %v3094
        %v3096 = vpop.f32.mrf.mxu0
        %v3097 = vadd.f32 0.0, %v3096
        %3098 = vmatprep.mubr.bf16.mxu0 0
        %3099 = vmatmul.mubr.bf16.gmra.mxu0 %v1755
        %v3100 = vpop.f32.mrf.mxu0
        %v3101 = vadd.f32 0.0, %v3100
        %v3102 = vpop.f32.mrf.mxu0
        %v3103 = vadd.f32 0.0, %v3102
        %v3104 = vpop.f32.mrf.mxu0
        %v3105 = vadd.f32 0.0, %v3104
        %v3106 = vpop.f32.mrf.mxu0
        %v3107 = vadd.f32 0.0, %v3106
        %3108 = vmatprep.mubr.bf16.mxu0 0
        %3109 = vmatmul.mubr.bf16.gmra.mxu0 %v1756
        %v3110 = vpop.f32.mrf.mxu0
        %v3111 = vadd.f32 0.0, %v3110
        %v3112 = vpop.f32.mrf.mxu0
        %v3113 = vadd.f32 0.0, %v3112
        %v3114 = vpop.f32.mrf.mxu0
        %v3115 = vadd.f32 0.0, %v3114
        %v3116 = vpop.f32.mrf.mxu0
        %v3117 = vadd.f32 0.0, %v3116
        %3118 = vmatprep.mubr.bf16.mxu0 0
        %3119 = vmatmul.mubr.bf16.gmra.mxu0 %v1757
        %v3120 = vpop.f32.mrf.mxu0
        %v3121 = vadd.f32 0.0, %v3120
        %v3122 = vpop.f32.mrf.mxu0
        %v3123 = vadd.f32 0.0, %v3122
        %v3124 = vpop.f32.mrf.mxu0
        %v3125 = vadd.f32 0.0, %v3124
        %v3126 = vpop.f32.mrf.mxu0
        %v3127 = vadd.f32 0.0, %v3126
        %3128 = vmatprep.mubr.bf16.mxu0 0
        %3129 = vmatmul.mubr.bf16.gmra.mxu0 %v1758
        %v3130 = vpop.f32.mrf.mxu0
        %v3131 = vadd.f32 0.0, %v3130
        %v3132 = vpop.f32.mrf.mxu0
        %v3133 = vadd.f32 0.0, %v3132
        %v3134 = vpop.f32.mrf.mxu0
        %v3135 = vadd.f32 0.0, %v3134
        %v3136 = vpop.f32.mrf.mxu0
        %v3137 = vadd.f32 0.0, %v3136
        %3138 = vmatprep.mubr.bf16.mxu0 0
        %3139 = vmatmul.mubr.bf16.gmra.mxu0 %v1759
        %v3140 = vpop.f32.mrf.mxu0
        %v3141 = vadd.f32 0.0, %v3140
        %v3142 = vpop.f32.mrf.mxu0
        %v3143 = vadd.f32 0.0, %v3142
        %v3144 = vpop.f32.mrf.mxu0
        %v3145 = vadd.f32 0.0, %v3144
        %v3146 = vpop.f32.mrf.mxu0
        %v3147 = vadd.f32 0.0, %v3146
        %3148 = vmatprep.mubr.bf16.mxu0 0
        %3149 = vmatmul.mubr.bf16.gmra.mxu0 %v1760
        %v3150 = vpop.f32.mrf.mxu0
        %v3151 = vadd.f32 0.0, %v3150
        %v3152 = vpop.f32.mrf.mxu0
        %v3153 = vadd.f32 0.0, %v3152
        %v3154 = vpop.f32.mrf.mxu0
        %v3155 = vadd.f32 0.0, %v3154
        %v3156 = vpop.f32.mrf.mxu0
        %v3157 = vadd.f32 0.0, %v3156
        %3158 = vmatprep.mubr.bf16.mxu0 0
        %3159 = vmatmul.mubr.bf16.gmra.mxu0 %v1761
        %v3160 = vpop.f32.mrf.mxu0
        %v3161 = vadd.f32 0.0, %v3160
        %v3162 = vpop.f32.mrf.mxu0
        %v3163 = vadd.f32 0.0, %v3162
        %v3164 = vpop.f32.mrf.mxu0
        %v3165 = vadd.f32 0.0, %v3164
        %v3166 = vpop.f32.mrf.mxu0
        %v3167 = vadd.f32 0.0, %v3166
        %3168 = vmatprep.mubr.bf16.mxu0 0
        %3169 = vmatmul.mubr.bf16.gmra.mxu0 %v1762
        %v3170 = vpop.f32.mrf.mxu0
        %v3171 = vadd.f32 0.0, %v3170
        %v3172 = vpop.f32.mrf.mxu0
        %v3173 = vadd.f32 0.0, %v3172
        %v3174 = vpop.f32.mrf.mxu0
        %v3175 = vadd.f32 0.0, %v3174
        %v3176 = vpop.f32.mrf.mxu0
        %v3177 = vadd.f32 0.0, %v3176
        %3178 = vmatprep.mubr.bf16.mxu0 0
        %3179 = vmatmul.mubr.bf16.gmra.mxu0 %v1763
        %v3180 = vpop.f32.mrf.mxu0
        %v3181 = vadd.f32 0.0, %v3180
        %v3182 = vpop.f32.mrf.mxu0
        %v3183 = vadd.f32 0.0, %v3182
        %v3184 = vpop.f32.mrf.mxu0
        %v3185 = vadd.f32 0.0, %v3184
        %v3186 = vpop.f32.mrf.mxu0
        %v3187 = vadd.f32 0.0, %v3186
        %3188 = vmatprep.mubr.bf16.mxu0 0
        %3189 = vmatmul.mubr.bf16.gmra.mxu0 %v1764
        %v3190 = vpop.f32.mrf.mxu0
        %v3191 = vadd.f32 0.0, %v3190
        %v3192 = vpop.f32.mrf.mxu0
        %v3193 = vadd.f32 0.0, %v3192
        %v3194 = vpop.f32.mrf.mxu0
        %v3195 = vadd.f32 0.0, %v3194
        %v3196 = vpop.f32.mrf.mxu0
        %v3197 = vadd.f32 0.0, %v3196
        %3198 = vmatprep.mubr.bf16.mxu0 0
        %3199 = vmatmul.mubr.bf16.gmra.mxu0 %v1765
        %v3200 = vpop.f32.mrf.mxu0
        %v3201 = vadd.f32 0.0, %v3200
        %v3202 = vpop.f32.mrf.mxu0
        %v3203 = vadd.f32 0.0, %v3202
        %v3204 = vpop.f32.mrf.mxu0
        %v3205 = vadd.f32 0.0, %v3204
        %v3206 = vpop.f32.mrf.mxu0
        %v3207 = vadd.f32 0.0, %v3206
        %3208 = vdwg.mxu0
        %3209 = vmatprep.subr.bf16.mxu0 %v2085
        %3210 = vmatpush1.bf16.msra.mxu0 %v2084
        %3211 = vmatprep.subr.bf16.mxu0 %v2077
        %3212 = vmatpush1.bf16.msra.mxu0 %v2076
        %3213 = vmatprep.subr.bf16.mxu0 %v2069
        %3214 = vmatpush1.bf16.msra.mxu0 %v2068
        %3215 = vmatprep.subr.bf16.mxu0 %v2061
        %3216 = vmatpush1.bf16.msra.mxu0 %v2060
        %3217 = vmatprep.subr.bf16.mxu0 %v2053
        %3218 = vmatpush1.bf16.msra.mxu0 %v2052
        %3219 = vmatprep.subr.bf16.mxu0 %v2045
        %3220 = vmatpush1.bf16.msra.mxu0 %v2044
        %3221 = vmatprep.subr.bf16.mxu0 %v2037
        %3222 = vmatpush1.bf16.msra.mxu0 %v2036
        %3223 = vmatprep.subr.bf16.mxu0 %v2029
        %3224 = vmatpush1.bf16.msra.mxu0 %v2028
        %3225 = vmatprep.subr.bf16.mxu0 0
        %3226 = vmatpush2.bf16.msra.mxu0 0
        %3227 = vmatprep.subr.bf16.mxu0 0
        %3228 = vmatpush2.bf16.msra.mxu0 0
        %3229 = vmatprep.subr.bf16.mxu0 0
        %3230 = vmatpush2.bf16.msra.mxu0 0
        %3231 = vmatprep.subr.bf16.mxu0 0
        %3232 = vmatpush2.bf16.msra.mxu0 0
        %3233 = vmatprep.subr.bf16.mxu0 0
        %3234 = vmatpush2.bf16.msra.mxu0 0
        %3235 = vmatprep.subr.bf16.mxu0 0
        %3236 = vmatpush2.bf16.msra.mxu0 0
        %3237 = vmatprep.subr.bf16.mxu0 0
        %3238 = vmatpush2.bf16.msra.mxu0 0
        %3239 = vmatprep.subr.bf16.mxu0 0
        %3240 = vmatpush2.bf16.msra.mxu0 0
        %3241 = vmatprep.mubr.bf16.mxu0 0
        %3242 = vmatmul.mubr.bf16.gmra.mxu0 %v1734
        %v3243 = vpop.f32.mrf.mxu0
        %v3244 = vadd.f32 0.0, %v3243
        %v3245 = vpop.f32.mrf.mxu0
        %v3246 = vadd.f32 0.0, %v3245
        %v3247 = vpop.f32.mrf.mxu0
        %v3248 = vadd.f32 0.0, %v3247
        %v3249 = vpop.f32.mrf.mxu0
        %v3250 = vadd.f32 0.0, %v3249
        %3251 = vmatprep.mubr.bf16.mxu0 0
        %3252 = vmatmul.mubr.bf16.gmra.mxu0 %v1735
        %v3253 = vpop.f32.mrf.mxu0
        %v3254 = vadd.f32 0.0, %v3253
        %v3255 = vpop.f32.mrf.mxu0
        %v3256 = vadd.f32 0.0, %v3255
        %v3257 = vpop.f32.mrf.mxu0
        %v3258 = vadd.f32 0.0, %v3257
        %v3259 = vpop.f32.mrf.mxu0
        %v3260 = vadd.f32 0.0, %v3259
        %3261 = vmatprep.mubr.bf16.mxu0 0
        %3262 = vmatmul.mubr.bf16.gmra.mxu0 %v1736
        %v3263 = vpop.f32.mrf.mxu0
        %v3264 = vadd.f32 0.0, %v3263
        %v3265 = vpop.f32.mrf.mxu0
        %v3266 = vadd.f32 0.0, %v3265
        %v3267 = vpop.f32.mrf.mxu0
        %v3268 = vadd.f32 0.0, %v3267
        %v3269 = vpop.f32.mrf.mxu0
        %v3270 = vadd.f32 0.0, %v3269
        %3271 = vmatprep.mubr.bf16.mxu0 0
        %3272 = vmatmul.mubr.bf16.gmra.mxu0 %v1737
        %v3273 = vpop.f32.mrf.mxu0
        %v3274 = vadd.f32 0.0, %v3273
        %v3275 = vpop.f32.mrf.mxu0
        %v3276 = vadd.f32 0.0, %v3275
        %v3277 = vpop.f32.mrf.mxu0
        %v3278 = vadd.f32 0.0, %v3277
        %v3279 = vpop.f32.mrf.mxu0
        %v3280 = vadd.f32 0.0, %v3279
        %3281 = vmatprep.mubr.bf16.mxu0 0
        %3282 = vmatmul.mubr.bf16.gmra.mxu0 %v1738
        %v3283 = vpop.f32.mrf.mxu0
        %v3284 = vadd.f32 0.0, %v3283
        %v3285 = vpop.f32.mrf.mxu0
        %v3286 = vadd.f32 0.0, %v3285
        %v3287 = vpop.f32.mrf.mxu0
        %v3288 = vadd.f32 0.0, %v3287
        %v3289 = vpop.f32.mrf.mxu0
        %v3290 = vadd.f32 0.0, %v3289
        %3291 = vmatprep.mubr.bf16.mxu0 0
        %3292 = vmatmul.mubr.bf16.gmra.mxu0 %v1739
        %v3293 = vpop.f32.mrf.mxu0
        %v3294 = vadd.f32 0.0, %v3293
        %v3295 = vpop.f32.mrf.mxu0
        %v3296 = vadd.f32 0.0, %v3295
        %v3297 = vpop.f32.mrf.mxu0
        %v3298 = vadd.f32 0.0, %v3297
        %v3299 = vpop.f32.mrf.mxu0
        %v3300 = vadd.f32 0.0, %v3299
        %3301 = vmatprep.mubr.bf16.mxu0 0
        %3302 = vmatmul.mubr.bf16.gmra.mxu0 %v1740
        %v3303 = vpop.f32.mrf.mxu0
        %v3304 = vadd.f32 0.0, %v3303
        %v3305 = vpop.f32.mrf.mxu0
        %v3306 = vadd.f32 0.0, %v3305
        %v3307 = vpop.f32.mrf.mxu0
        %v3308 = vadd.f32 0.0, %v3307
        %v3309 = vpop.f32.mrf.mxu0
        %v3310 = vadd.f32 0.0, %v3309
        %3311 = vmatprep.mubr.bf16.mxu0 0
        %3312 = vmatmul.mubr.bf16.gmra.mxu0 %v1741
        %v3313 = vpop.f32.mrf.mxu0
        %v3314 = vadd.f32 0.0, %v3313
        %v3315 = vpop.f32.mrf.mxu0
        %v3316 = vadd.f32 0.0, %v3315
        %v3317 = vpop.f32.mrf.mxu0
        %v3318 = vadd.f32 0.0, %v3317
        %v3319 = vpop.f32.mrf.mxu0
        %v3320 = vadd.f32 0.0, %v3319
        %3321 = vmatprep.mubr.bf16.mxu0 0
        %3322 = vmatmul.mubr.bf16.gmra.mxu0 %v1742
        %v3323 = vpop.f32.mrf.mxu0
        %v3324 = vadd.f32 0.0, %v3323
        %v3325 = vpop.f32.mrf.mxu0
        %v3326 = vadd.f32 0.0, %v3325
        %v3327 = vpop.f32.mrf.mxu0
        %v3328 = vadd.f32 0.0, %v3327
        %v3329 = vpop.f32.mrf.mxu0
        %v3330 = vadd.f32 0.0, %v3329
        %3331 = vmatprep.mubr.bf16.mxu0 0
        %3332 = vmatmul.mubr.bf16.gmra.mxu0 %v1743
        %v3333 = vpop.f32.mrf.mxu0
        %v3334 = vadd.f32 0.0, %v3333
        %v3335 = vpop.f32.mrf.mxu0
        %v3336 = vadd.f32 0.0, %v3335
        %v3337 = vpop.f32.mrf.mxu0
        %v3338 = vadd.f32 0.0, %v3337
        %v3339 = vpop.f32.mrf.mxu0
        %v3340 = vadd.f32 0.0, %v3339
        %3341 = vmatprep.mubr.bf16.mxu0 0
        %3342 = vmatmul.mubr.bf16.gmra.mxu0 %v1744
        %v3343 = vpop.f32.mrf.mxu0
        %v3344 = vadd.f32 0.0, %v3343
        %v3345 = vpop.f32.mrf.mxu0
        %v3346 = vadd.f32 0.0, %v3345
        %v3347 = vpop.f32.mrf.mxu0
        %v3348 = vadd.f32 0.0, %v3347
        %v3349 = vpop.f32.mrf.mxu0
        %v3350 = vadd.f32 0.0, %v3349
        %3351 = vmatprep.mubr.bf16.mxu0 0
        %3352 = vmatmul.mubr.bf16.gmra.mxu0 %v1745
        %v3353 = vpop.f32.mrf.mxu0
        %v3354 = vadd.f32 0.0, %v3353
        %v3355 = vpop.f32.mrf.mxu0
        %v3356 = vadd.f32 0.0, %v3355
        %v3357 = vpop.f32.mrf.mxu0
        %v3358 = vadd.f32 0.0, %v3357
        %v3359 = vpop.f32.mrf.mxu0
        %v3360 = vadd.f32 0.0, %v3359
        %3361 = vmatprep.mubr.bf16.mxu0 0
        %3362 = vmatmul.mubr.bf16.gmra.mxu0 %v1746
        %v3363 = vpop.f32.mrf.mxu0
        %v3364 = vadd.f32 0.0, %v3363
        %v3365 = vpop.f32.mrf.mxu0
        %v3366 = vadd.f32 0.0, %v3365
        %v3367 = vpop.f32.mrf.mxu0
        %v3368 = vadd.f32 0.0, %v3367
        %v3369 = vpop.f32.mrf.mxu0
        %v3370 = vadd.f32 0.0, %v3369
        %3371 = vmatprep.mubr.bf16.mxu0 0
        %3372 = vmatmul.mubr.bf16.gmra.mxu0 %v1747
        %v3373 = vpop.f32.mrf.mxu0
        %v3374 = vadd.f32 0.0, %v3373
        %v3375 = vpop.f32.mrf.mxu0
        %v3376 = vadd.f32 0.0, %v3375
        %v3377 = vpop.f32.mrf.mxu0
        %v3378 = vadd.f32 0.0, %v3377
        %v3379 = vpop.f32.mrf.mxu0
        %v3380 = vadd.f32 0.0, %v3379
        %3381 = vmatprep.mubr.bf16.mxu0 0
        %3382 = vmatmul.mubr.bf16.gmra.mxu0 %v1748
        %v3383 = vpop.f32.mrf.mxu0
        %v3384 = vadd.f32 0.0, %v3383
        %v3385 = vpop.f32.mrf.mxu0
        %v3386 = vadd.f32 0.0, %v3385
        %v3387 = vpop.f32.mrf.mxu0
        %v3388 = vadd.f32 0.0, %v3387
        %v3389 = vpop.f32.mrf.mxu0
        %v3390 = vadd.f32 0.0, %v3389
        %3391 = vmatprep.mubr.bf16.mxu0 0
        %3392 = vmatmul.mubr.bf16.gmra.mxu0 %v1749
        %v3393 = vpop.f32.mrf.mxu0
        %v3394 = vadd.f32 0.0, %v3393
        %v3395 = vpop.f32.mrf.mxu0
        %v3396 = vadd.f32 0.0, %v3395
        %v3397 = vpop.f32.mrf.mxu0
        %v3398 = vadd.f32 0.0, %v3397
        %v3399 = vpop.f32.mrf.mxu0
        %v3400 = vadd.f32 0.0, %v3399
        %3401 = vmatprep.mubr.bf16.mxu0 0
        %3402 = vmatmul.mubr.bf16.gmra.mxu0 %v1750
        %v3403 = vpop.f32.mrf.mxu0
        %v3404 = vadd.f32 0.0, %v3403
        %v3405 = vpop.f32.mrf.mxu0
        %v3406 = vadd.f32 0.0, %v3405
        %v3407 = vpop.f32.mrf.mxu0
        %v3408 = vadd.f32 0.0, %v3407
        %v3409 = vpop.f32.mrf.mxu0
        %v3410 = vadd.f32 0.0, %v3409
        %3411 = vmatprep.mubr.bf16.mxu0 0
        %3412 = vmatmul.mubr.bf16.gmra.mxu0 %v1751
        %v3413 = vpop.f32.mrf.mxu0
        %v3414 = vadd.f32 0.0, %v3413
        %v3415 = vpop.f32.mrf.mxu0
        %v3416 = vadd.f32 0.0, %v3415
        %v3417 = vpop.f32.mrf.mxu0
        %v3418 = vadd.f32 0.0, %v3417
        %v3419 = vpop.f32.mrf.mxu0
        %v3420 = vadd.f32 0.0, %v3419
        %3421 = vmatprep.mubr.bf16.mxu0 0
        %3422 = vmatmul.mubr.bf16.gmra.mxu0 %v1752
        %v3423 = vpop.f32.mrf.mxu0
        %v3424 = vadd.f32 0.0, %v3423
        %v3425 = vpop.f32.mrf.mxu0
        %v3426 = vadd.f32 0.0, %v3425
        %v3427 = vpop.f32.mrf.mxu0
        %v3428 = vadd.f32 0.0, %v3427
        %v3429 = vpop.f32.mrf.mxu0
        %v3430 = vadd.f32 0.0, %v3429
        %3431 = vmatprep.mubr.bf16.mxu0 0
        %3432 = vmatmul.mubr.bf16.gmra.mxu0 %v1753
        %v3433 = vpop.f32.mrf.mxu0
        %v3434 = vadd.f32 0.0, %v3433
        %v3435 = vpop.f32.mrf.mxu0
        %v3436 = vadd.f32 0.0, %v3435
        %v3437 = vpop.f32.mrf.mxu0
        %v3438 = vadd.f32 0.0, %v3437
        %v3439 = vpop.f32.mrf.mxu0
        %v3440 = vadd.f32 0.0, %v3439
        %3441 = vmatprep.mubr.bf16.mxu0 0
        %3442 = vmatmul.mubr.bf16.gmra.mxu0 %v1754
        %v3443 = vpop.f32.mrf.mxu0
        %v3444 = vadd.f32 0.0, %v3443
        %v3445 = vpop.f32.mrf.mxu0
        %v3446 = vadd.f32 0.0, %v3445
        %v3447 = vpop.f32.mrf.mxu0
        %v3448 = vadd.f32 0.0, %v3447
        %v3449 = vpop.f32.mrf.mxu0
        %v3450 = vadd.f32 0.0, %v3449
        %3451 = vmatprep.mubr.bf16.mxu0 0
        %3452 = vmatmul.mubr.bf16.gmra.mxu0 %v1755
        %v3453 = vpop.f32.mrf.mxu0
        %v3454 = vadd.f32 0.0, %v3453
        %v3455 = vpop.f32.mrf.mxu0
        %v3456 = vadd.f32 0.0, %v3455
        %v3457 = vpop.f32.mrf.mxu0
        %v3458 = vadd.f32 0.0, %v3457
        %v3459 = vpop.f32.mrf.mxu0
        %v3460 = vadd.f32 0.0, %v3459
        %3461 = vmatprep.mubr.bf16.mxu0 0
        %3462 = vmatmul.mubr.bf16.gmra.mxu0 %v1756
        %v3463 = vpop.f32.mrf.mxu0
        %v3464 = vadd.f32 0.0, %v3463
        %v3465 = vpop.f32.mrf.mxu0
        %v3466 = vadd.f32 0.0, %v3465
        %v3467 = vpop.f32.mrf.mxu0
        %v3468 = vadd.f32 0.0, %v3467
        %v3469 = vpop.f32.mrf.mxu0
        %v3470 = vadd.f32 0.0, %v3469
        %3471 = vmatprep.mubr.bf16.mxu0 0
        %3472 = vmatmul.mubr.bf16.gmra.mxu0 %v1757
        %v3473 = vpop.f32.mrf.mxu0
        %v3474 = vadd.f32 0.0, %v3473
        %v3475 = vpop.f32.mrf.mxu0
        %v3476 = vadd.f32 0.0, %v3475
        %v3477 = vpop.f32.mrf.mxu0
        %v3478 = vadd.f32 0.0, %v3477
        %v3479 = vpop.f32.mrf.mxu0
        %v3480 = vadd.f32 0.0, %v3479
        %3481 = vmatprep.mubr.bf16.mxu0 0
        %3482 = vmatmul.mubr.bf16.gmra.mxu0 %v1758
        %v3483 = vpop.f32.mrf.mxu0
        %v3484 = vadd.f32 0.0, %v3483
        %v3485 = vpop.f32.mrf.mxu0
        %v3486 = vadd.f32 0.0, %v3485
        %v3487 = vpop.f32.mrf.mxu0
        %v3488 = vadd.f32 0.0, %v3487
        %v3489 = vpop.f32.mrf.mxu0
        %v3490 = vadd.f32 0.0, %v3489
        %3491 = vmatprep.mubr.bf16.mxu0 0
        %3492 = vmatmul.mubr.bf16.gmra.mxu0 %v1759
        %v3493 = vpop.f32.mrf.mxu0
        %v3494 = vadd.f32 0.0, %v3493
        %v3495 = vpop.f32.mrf.mxu0
        %v3496 = vadd.f32 0.0, %v3495
        %v3497 = vpop.f32.mrf.mxu0
        %v3498 = vadd.f32 0.0, %v3497
        %v3499 = vpop.f32.mrf.mxu0
        %v3500 = vadd.f32 0.0, %v3499
        %3501 = vmatprep.mubr.bf16.mxu0 0
        %3502 = vmatmul.mubr.bf16.gmra.mxu0 %v1760
        %v3503 = vpop.f32.mrf.mxu0
        %v3504 = vadd.f32 0.0, %v3503
        %v3505 = vpop.f32.mrf.mxu0
        %v3506 = vadd.f32 0.0, %v3505
        %v3507 = vpop.f32.mrf.mxu0
        %v3508 = vadd.f32 0.0, %v3507
        %v3509 = vpop.f32.mrf.mxu0
        %v3510 = vadd.f32 0.0, %v3509
        %3511 = vmatprep.mubr.bf16.mxu0 0
        %3512 = vmatmul.mubr.bf16.gmra.mxu0 %v1761
        %v3513 = vpop.f32.mrf.mxu0
        %v3514 = vadd.f32 0.0, %v3513
        %v3515 = vpop.f32.mrf.mxu0
        %v3516 = vadd.f32 0.0, %v3515
        %v3517 = vpop.f32.mrf.mxu0
        %v3518 = vadd.f32 0.0, %v3517
        %v3519 = vpop.f32.mrf.mxu0
        %v3520 = vadd.f32 0.0, %v3519
        %3521 = vmatprep.mubr.bf16.mxu0 0
        %3522 = vmatmul.mubr.bf16.gmra.mxu0 %v1762
        %v3523 = vpop.f32.mrf.mxu0
        %v3524 = vadd.f32 0.0, %v3523
        %v3525 = vpop.f32.mrf.mxu0
        %v3526 = vadd.f32 0.0, %v3525
        %v3527 = vpop.f32.mrf.mxu0
        %v3528 = vadd.f32 0.0, %v3527
        %v3529 = vpop.f32.mrf.mxu0
        %v3530 = vadd.f32 0.0, %v3529
        %3531 = vmatprep.mubr.bf16.mxu0 0
        %3532 = vmatmul.mubr.bf16.gmra.mxu0 %v1763
        %v3533 = vpop.f32.mrf.mxu0
        %v3534 = vadd.f32 0.0, %v3533
        %v3535 = vpop.f32.mrf.mxu0
        %v3536 = vadd.f32 0.0, %v3535
        %v3537 = vpop.f32.mrf.mxu0
        %v3538 = vadd.f32 0.0, %v3537
        %v3539 = vpop.f32.mrf.mxu0
        %v3540 = vadd.f32 0.0, %v3539
        %3541 = vmatprep.mubr.bf16.mxu0 0
        %3542 = vmatmul.mubr.bf16.gmra.mxu0 %v1764
        %v3543 = vpop.f32.mrf.mxu0
        %v3544 = vadd.f32 0.0, %v3543
        %v3545 = vpop.f32.mrf.mxu0
        %v3546 = vadd.f32 0.0, %v3545
        %v3547 = vpop.f32.mrf.mxu0
        %v3548 = vadd.f32 0.0, %v3547
        %v3549 = vpop.f32.mrf.mxu0
        %v3550 = vadd.f32 0.0, %v3549
        %3551 = vmatprep.mubr.bf16.mxu0 0
        %3552 = vmatmul.mubr.bf16.gmra.mxu0 %v1765
        %v3553 = vpop.f32.mrf.mxu0
        %v3554 = vadd.f32 0.0, %v3553
        %v3555 = vpop.f32.mrf.mxu0
        %v3556 = vadd.f32 0.0, %v3555
        %v3557 = vpop.f32.mrf.mxu0
        %v3558 = vadd.f32 0.0, %v3557
        %v3559 = vpop.f32.mrf.mxu0
        %v3560 = vadd.f32 0.0, %v3559
        %3561 = vdwg.mxu0
        %v3562 = vmax.f32 %v2185, %v2189
        %v3563 = vmax.f32 %v3562, %v2195
        %v3564 = vmax.f32 %v3563, %v2199
        %v3565 = vmax.f32 %v3564, %v2205
        %v3566 = vmax.f32 %v3565, %v2209
        %v3567 = vmax.f32 %v3566, %v2215
        %v3568 = vmax.f32 %v3567, %v2219
        %v3569 = vmax.f32 %v3568, %v2225
        %v3570 = vmax.f32 %v3569, %v2229
        %v3571 = vmax.f32 %v3570, %v2235
        %v3572 = vmax.f32 %v3571, %v2239
        %v3573 = vmax.f32 %v3572, %v2245
        %v3574 = vmax.f32 %v3573, %v2249
        %v3575 = vmax.f32 %v3574, %v2255
        %v3576 = vmax.f32 %v3575, %v2259
        %v3577 = vmax.f32 %v3576, %v2265
        %v3578 = vmax.f32 %v3577, %v2269
        %v3579 = vmax.f32 %v3578, %v2275
        %v3580 = vmax.f32 %v3579, %v2279
        %v3581 = vmax.f32 %v3580, %v2285
        %v3582 = vmax.f32 %v3581, %v2289
        %v3583 = vmax.f32 %v3582, %v2295
        %v3584 = vmax.f32 %v3583, %v2299
        %v3585 = vmax.f32 %v3584, %v2305
        %v3586 = vmax.f32 %v3585, %v2309
        %v3587 = vmax.f32 %v3586, %v2315
        %v3588 = vmax.f32 %v3587, %v2319
        %v3589 = vmax.f32 %v3588, %v2325
        %v3590 = vmax.f32 %v3589, %v2329
        %v3591 = vmax.f32 %v3590, %v2335
        %v3592 = vmax.f32 %v3591, %v2339
        %v3593 = vrot.slane %v3592, 4
        %v3594 = vmax.f32 %v3592, %v3593
        %v3595 = vrot.slane %v3594, 2
        %v3596 = vmax.f32 %v3594, %v3595
        %v3597 = vrot.slane %v3596, 1
        %v3598 = vmax.f32 %v3596, %v3597
        %v3599 = vmax.f32 %v2187, %v2191
        %v3600 = vmax.f32 %v3599, %v2197
        %v3601 = vmax.f32 %v3600, %v2201
        %v3602 = vmax.f32 %v3601, %v2207
        %v3603 = vmax.f32 %v3602, %v2211
        %v3604 = vmax.f32 %v3603, %v2217
        %v3605 = vmax.f32 %v3604, %v2221
        %v3606 = vmax.f32 %v3605, %v2227
        %v3607 = vmax.f32 %v3606, %v2231
        %v3608 = vmax.f32 %v3607, %v2237
        %v3609 = vmax.f32 %v3608, %v2241
        %v3610 = vmax.f32 %v3609, %v2247
        %v3611 = vmax.f32 %v3610, %v2251
        %v3612 = vmax.f32 %v3611, %v2257
        %v3613 = vmax.f32 %v3612, %v2261
        %v3614 = vmax.f32 %v3613, %v2267
        %v3615 = vmax.f32 %v3614, %v2271
        %v3616 = vmax.f32 %v3615, %v2277
        %v3617 = vmax.f32 %v3616, %v2281
        %v3618 = vmax.f32 %v3617, %v2287
        %v3619 = vmax.f32 %v3618, %v2291
        %v3620 = vmax.f32 %v3619, %v2297
        %v3621 = vmax.f32 %v3620, %v2301
        %v3622 = vmax.f32 %v3621, %v2307
        %v3623 = vmax.f32 %v3622, %v2311
        %v3624 = vmax.f32 %v3623, %v2317
        %v3625 = vmax.f32 %v3624, %v2321
        %v3626 = vmax.f32 %v3625, %v2327
        %v3627 = vmax.f32 %v3626, %v2331
        %v3628 = vmax.f32 %v3627, %v2337
        %v3629 = vmax.f32 %v3628, %v2341
        %v3630 = vrot.slane %v3629, 4
        %v3631 = vmax.f32 %v3629, %v3630
        %v3632 = vrot.slane %v3631, 2
        %v3633 = vmax.f32 %v3631, %v3632
        %v3634 = vrot.slane %v3633, 1
        %v3635 = vmax.f32 %v3633, %v3634
        %v3636 = vmax.f32 %v2538, %v2542
        %v3637 = vmax.f32 %v3636, %v2548
        %v3638 = vmax.f32 %v3637, %v2552
        %v3639 = vmax.f32 %v3638, %v2558
        %v3640 = vmax.f32 %v3639, %v2562
        %v3641 = vmax.f32 %v3640, %v2568
        %v3642 = vmax.f32 %v3641, %v2572
        %v3643 = vmax.f32 %v3642, %v2578
        %v3644 = vmax.f32 %v3643, %v2582
        %v3645 = vmax.f32 %v3644, %v2588
        %v3646 = vmax.f32 %v3645, %v2592
        %v3647 = vmax.f32 %v3646, %v2598
        %v3648 = vmax.f32 %v3647, %v2602
        %v3649 = vmax.f32 %v3648, %v2608
        %v3650 = vmax.f32 %v3649, %v2612
        %v3651 = vmax.f32 %v3650, %v2618
        %v3652 = vmax.f32 %v3651, %v2622
        %v3653 = vmax.f32 %v3652, %v2628
        %v3654 = vmax.f32 %v3653, %v2632
        %v3655 = vmax.f32 %v3654, %v2638
        %v3656 = vmax.f32 %v3655, %v2642
        %v3657 = vmax.f32 %v3656, %v2648
        %v3658 = vmax.f32 %v3657, %v2652
        %v3659 = vmax.f32 %v3658, %v2658
        %v3660 = vmax.f32 %v3659, %v2662
        %v3661 = vmax.f32 %v3660, %v2668
        %v3662 = vmax.f32 %v3661, %v2672
        %v3663 = vmax.f32 %v3662, %v2678
        %v3664 = vmax.f32 %v3663, %v2682
        %v3665 = vmax.f32 %v3664, %v2688
        %v3666 = vmax.f32 %v3665, %v2692
        %v3667 = vrot.slane %v3666, 4
        %v3668 = vmax.f32 %v3666, %v3667
        %v3669 = vrot.slane %v3668, 2
        %v3670 = vmax.f32 %v3668, %v3669
        %v3671 = vrot.slane %v3670, 1
        %v3672 = vmax.f32 %v3670, %v3671
        %v3673 = vmax.f32 %v2540, %v2544
        %v3674 = vmax.f32 %v3673, %v2550
        %v3675 = vmax.f32 %v3674, %v2554
        %v3676 = vmax.f32 %v3675, %v2560
        %v3677 = vmax.f32 %v3676, %v2564
        %v3678 = vmax.f32 %v3677, %v2570
        %v3679 = vmax.f32 %v3678, %v2574
        %v3680 = vmax.f32 %v3679, %v2580
        %v3681 = vmax.f32 %v3680, %v2584
        %v3682 = vmax.f32 %v3681, %v2590
        %v3683 = vmax.f32 %v3682, %v2594
        %v3684 = vmax.f32 %v3683, %v2600
        %v3685 = vmax.f32 %v3684, %v2604
        %v3686 = vmax.f32 %v3685, %v2610
        %v3687 = vmax.f32 %v3686, %v2614
        %v3688 = vmax.f32 %v3687, %v2620
        %v3689 = vmax.f32 %v3688, %v2624
        %v3690 = vmax.f32 %v3689, %v2630
        %v3691 = vmax.f32 %v3690, %v2634
        %v3692 = vmax.f32 %v3691, %v2640
        %v3693 = vmax.f32 %v3692, %v2644
        %v3694 = vmax.f32 %v3693, %v2650
        %v3695 = vmax.f32 %v3694, %v2654
        %v3696 = vmax.f32 %v3695, %v2660
        %v3697 = vmax.f32 %v3696, %v2664
        %v3698 = vmax.f32 %v3697, %v2670
        %v3699 = vmax.f32 %v3698, %v2674
        %v3700 = vmax.f32 %v3699, %v2680
        %v3701 = vmax.f32 %v3700, %v2684
        %v3702 = vmax.f32 %v3701, %v2690
        %v3703 = vmax.f32 %v3702, %v2694
        %v3704 = vrot.slane %v3703, 4
        %v3705 = vmax.f32 %v3703, %v3704
        %v3706 = vrot.slane %v3705, 2
        %v3707 = vmax.f32 %v3705, %v3706
        %v3708 = vrot.slane %v3707, 1
        %v3709 = vmax.f32 %v3707, %v3708
        %v3710 = vmax.f32 %v2891, %v2895
        %v3711 = vmax.f32 %v3710, %v2901
        %v3712 = vmax.f32 %v3711, %v2905
        %v3713 = vmax.f32 %v3712, %v2911
        %v3714 = vmax.f32 %v3713, %v2915
        %v3715 = vmax.f32 %v3714, %v2921
        %v3716 = vmax.f32 %v3715, %v2925
        %v3717 = vmax.f32 %v3716, %v2931
        %v3718 = vmax.f32 %v3717, %v2935
        %v3719 = vmax.f32 %v3718, %v2941
        %v3720 = vmax.f32 %v3719, %v2945
        %v3721 = vmax.f32 %v3720, %v2951
        %v3722 = vmax.f32 %v3721, %v2955
        %v3723 = vmax.f32 %v3722, %v2961
        %v3724 = vmax.f32 %v3723, %v2965
        %v3725 = vmax.f32 %v3724, %v2971
        %v3726 = vmax.f32 %v3725, %v2975
        %v3727 = vmax.f32 %v3726, %v2981
        %v3728 = vmax.f32 %v3727, %v2985
        %v3729 = vmax.f32 %v3728, %v2991
        %v3730 = vmax.f32 %v3729, %v2995
        %v3731 = vmax.f32 %v3730, %v3001
        %v3732 = vmax.f32 %v3731, %v3005
        %v3733 = vmax.f32 %v3732, %v3011
        %v3734 = vmax.f32 %v3733, %v3015
        %v3735 = vmax.f32 %v3734, %v3021
        %v3736 = vmax.f32 %v3735, %v3025
        %v3737 = vmax.f32 %v3736, %v3031
        %v3738 = vmax.f32 %v3737, %v3035
        %v3739 = vmax.f32 %v3738, %v3041
        %v3740 = vmax.f32 %v3739, %v3045
        %v3741 = vrot.slane %v3740, 4
        %v3742 = vmax.f32 %v3740, %v3741
        %v3743 = vrot.slane %v3742, 2
        %v3744 = vmax.f32 %v3742, %v3743
        %v3745 = vrot.slane %v3744, 1
        %v3746 = vmax.f32 %v3744, %v3745
        %v3747 = vmax.f32 %v2893, %v2897
        %v3748 = vmax.f32 %v3747, %v2903
        %v3749 = vmax.f32 %v3748, %v2907
        %v3750 = vmax.f32 %v3749, %v2913
        %v3751 = vmax.f32 %v3750, %v2917
        %v3752 = vmax.f32 %v3751, %v2923
        %v3753 = vmax.f32 %v3752, %v2927
        %v3754 = vmax.f32 %v3753, %v2933
        %v3755 = vmax.f32 %v3754, %v2937
        %v3756 = vmax.f32 %v3755, %v2943
        %v3757 = vmax.f32 %v3756, %v2947
        %v3758 = vmax.f32 %v3757, %v2953
        %v3759 = vmax.f32 %v3758, %v2957
        %v3760 = vmax.f32 %v3759, %v2963
        %v3761 = vmax.f32 %v3760, %v2967
        %v3762 = vmax.f32 %v3761, %v2973
        %v3763 = vmax.f32 %v3762, %v2977
        %v3764 = vmax.f32 %v3763, %v2983
        %v3765 = vmax.f32 %v3764, %v2987
        %v3766 = vmax.f32 %v3765, %v2993
        %v3767 = vmax.f32 %v3766, %v2997
        %v3768 = vmax.f32 %v3767, %v3003
        %v3769 = vmax.f32 %v3768, %v3007
        %v3770 = vmax.f32 %v3769, %v3013
        %v3771 = vmax.f32 %v3770, %v3017
        %v3772 = vmax.f32 %v3771, %v3023
        %v3773 = vmax.f32 %v3772, %v3027
        %v3774 = vmax.f32 %v3773, %v3033
        %v3775 = vmax.f32 %v3774, %v3037
        %v3776 = vmax.f32 %v3775, %v3043
        %v3777 = vmax.f32 %v3776, %v3047
        %v3778 = vrot.slane %v3777, 4
        %v3779 = vmax.f32 %v3777, %v3778
        %v3780 = vrot.slane %v3779, 2
        %v3781 = vmax.f32 %v3779, %v3780
        %v3782 = vrot.slane %v3781, 1
        %v3783 = vmax.f32 %v3781, %v3782
        %v3784 = vmax.f32 %v3244, %v3248
        %v3785 = vmax.f32 %v3784, %v3254
        %v3786 = vmax.f32 %v3785, %v3258
        %v3787 = vmax.f32 %v3786, %v3264
        %v3788 = vmax.f32 %v3787, %v3268
        %v3789 = vmax.f32 %v3788, %v3274
        %v3790 = vmax.f32 %v3789, %v3278
        %v3791 = vmax.f32 %v3790, %v3284
        %v3792 = vmax.f32 %v3791, %v3288
        %v3793 = vmax.f32 %v3792, %v3294
        %v3794 = vmax.f32 %v3793, %v3298
        %v3795 = vmax.f32 %v3794, %v3304
        %v3796 = vmax.f32 %v3795, %v3308
        %v3797 = vmax.f32 %v3796, %v3314
        %v3798 = vmax.f32 %v3797, %v3318
        %v3799 = vmax.f32 %v3798, %v3324
        %v3800 = vmax.f32 %v3799, %v3328
        %v3801 = vmax.f32 %v3800, %v3334
        %v3802 = vmax.f32 %v3801, %v3338
        %v3803 = vmax.f32 %v3802, %v3344
        %v3804 = vmax.f32 %v3803, %v3348
        %v3805 = vmax.f32 %v3804, %v3354
        %v3806 = vmax.f32 %v3805, %v3358
        %v3807 = vmax.f32 %v3806, %v3364
        %v3808 = vmax.f32 %v3807, %v3368
        %v3809 = vmax.f32 %v3808, %v3374
        %v3810 = vmax.f32 %v3809, %v3378
        %v3811 = vmax.f32 %v3810, %v3384
        %v3812 = vmax.f32 %v3811, %v3388
        %v3813 = vmax.f32 %v3812, %v3394
        %v3814 = vmax.f32 %v3813, %v3398
        %v3815 = vrot.slane %v3814, 4
        %v3816 = vmax.f32 %v3814, %v3815
        %v3817 = vrot.slane %v3816, 2
        %v3818 = vmax.f32 %v3816, %v3817
        %v3819 = vrot.slane %v3818, 1
        %v3820 = vmax.f32 %v3818, %v3819
        %v3821 = vmax.f32 %v3246, %v3250
        %v3822 = vmax.f32 %v3821, %v3256
        %v3823 = vmax.f32 %v3822, %v3260
        %v3824 = vmax.f32 %v3823, %v3266
        %v3825 = vmax.f32 %v3824, %v3270
        %v3826 = vmax.f32 %v3825, %v3276
        %v3827 = vmax.f32 %v3826, %v3280
        %v3828 = vmax.f32 %v3827, %v3286
        %v3829 = vmax.f32 %v3828, %v3290
        %v3830 = vmax.f32 %v3829, %v3296
        %v3831 = vmax.f32 %v3830, %v3300
        %v3832 = vmax.f32 %v3831, %v3306
        %v3833 = vmax.f32 %v3832, %v3310
        %v3834 = vmax.f32 %v3833, %v3316
        %v3835 = vmax.f32 %v3834, %v3320
        %v3836 = vmax.f32 %v3835, %v3326
        %v3837 = vmax.f32 %v3836, %v3330
        %v3838 = vmax.f32 %v3837, %v3336
        %v3839 = vmax.f32 %v3838, %v3340
        %v3840 = vmax.f32 %v3839, %v3346
        %v3841 = vmax.f32 %v3840, %v3350
        %v3842 = vmax.f32 %v3841, %v3356
        %v3843 = vmax.f32 %v3842, %v3360
        %v3844 = vmax.f32 %v3843, %v3366
        %v3845 = vmax.f32 %v3844, %v3370
        %v3846 = vmax.f32 %v3845, %v3376
        %v3847 = vmax.f32 %v3846, %v3380
        %v3848 = vmax.f32 %v3847, %v3386
        %v3849 = vmax.f32 %v3848, %v3390
        %v3850 = vmax.f32 %v3849, %v3396
        %v3851 = vmax.f32 %v3850, %v3400
        %v3852 = vrot.slane %v3851, 4
        %v3853 = vmax.f32 %v3851, %v3852
        %v3854 = vrot.slane %v3853, 2
        %v3855 = vmax.f32 %v3853, %v3854
        %v3856 = vrot.slane %v3855, 1
        %v3857 = vmax.f32 %v3855, %v3856
        %v3858 = vmax.f32 %v2345, %v2349
        %v3859 = vmax.f32 %v3858, %v2355
        %v3860 = vmax.f32 %v3859, %v2359
        %v3861 = vmax.f32 %v3860, %v2365
        %v3862 = vmax.f32 %v3861, %v2369
        %v3863 = vmax.f32 %v3862, %v2375
        %v3864 = vmax.f32 %v3863, %v2379
        %v3865 = vmax.f32 %v3864, %v2385
        %v3866 = vmax.f32 %v3865, %v2389
        %v3867 = vmax.f32 %v3866, %v2395
        %v3868 = vmax.f32 %v3867, %v2399
        %v3869 = vmax.f32 %v3868, %v2405
        %v3870 = vmax.f32 %v3869, %v2409
        %v3871 = vmax.f32 %v3870, %v2415
        %v3872 = vmax.f32 %v3871, %v2419
        %v3873 = vmax.f32 %v3872, %v2425
        %v3874 = vmax.f32 %v3873, %v2429
        %v3875 = vmax.f32 %v3874, %v2435
        %v3876 = vmax.f32 %v3875, %v2439
        %v3877 = vmax.f32 %v3876, %v2445
        %v3878 = vmax.f32 %v3877, %v2449
        %v3879 = vmax.f32 %v3878, %v2455
        %v3880 = vmax.f32 %v3879, %v2459
        %v3881 = vmax.f32 %v3880, %v2465
        %v3882 = vmax.f32 %v3881, %v2469
        %v3883 = vmax.f32 %v3882, %v2475
        %v3884 = vmax.f32 %v3883, %v2479
        %v3885 = vmax.f32 %v3884, %v2485
        %v3886 = vmax.f32 %v3885, %v2489
        %v3887 = vmax.f32 %v3886, %v2495
        %v3888 = vmax.f32 %v3887, %v2499
        %v3889 = vrot.slane %v3888, 4
        %v3890 = vmax.f32 %v3888, %v3889
        %v3891 = vrot.slane %v3890, 2
        %v3892 = vmax.f32 %v3890, %v3891
        %v3893 = vrot.slane %v3892, 1
        %v3894 = vmax.f32 %v3892, %v3893
        %v3895 = vmax.f32 %v2347, %v2351
        %v3896 = vmax.f32 %v3895, %v2357
        %v3897 = vmax.f32 %v3896, %v2361
        %v3898 = vmax.f32 %v3897, %v2367
        %v3899 = vmax.f32 %v3898, %v2371
        %v3900 = vmax.f32 %v3899, %v2377
        %v3901 = vmax.f32 %v3900, %v2381
        %v3902 = vmax.f32 %v3901, %v2387
        %v3903 = vmax.f32 %v3902, %v2391
        %v3904 = vmax.f32 %v3903, %v2397
        %v3905 = vmax.f32 %v3904, %v2401
        %v3906 = vmax.f32 %v3905, %v2407
        %v3907 = vmax.f32 %v3906, %v2411
        %v3908 = vmax.f32 %v3907, %v2417
        %v3909 = vmax.f32 %v3908, %v2421
        %v3910 = vmax.f32 %v3909, %v2427
        %v3911 = vmax.f32 %v3910, %v2431
        %v3912 = vmax.f32 %v3911, %v2437
        %v3913 = vmax.f32 %v3912, %v2441
        %v3914 = vmax.f32 %v3913, %v2447
        %v3915 = vmax.f32 %v3914, %v2451
        %v3916 = vmax.f32 %v3915, %v2457
        %v3917 = vmax.f32 %v3916, %v2461
        %v3918 = vmax.f32 %v3917, %v2467
        %v3919 = vmax.f32 %v3918, %v2471
        %v3920 = vmax.f32 %v3919, %v2477
        %v3921 = vmax.f32 %v3920, %v2481
        %v3922 = vmax.f32 %v3921, %v2487
        %v3923 = vmax.f32 %v3922, %v2491
        %v3924 = vmax.f32 %v3923, %v2497
        %v3925 = vmax.f32 %v3924, %v2501
        %v3926 = vrot.slane %v3925, 4
        %v3927 = vmax.f32 %v3925, %v3926
        %v3928 = vrot.slane %v3927, 2
        %v3929 = vmax.f32 %v3927, %v3928
        %v3930 = vrot.slane %v3929, 1
        %v3931 = vmax.f32 %v3929, %v3930
        %v3932 = vmax.f32 %v2698, %v2702
        %v3933 = vmax.f32 %v3932, %v2708
        %v3934 = vmax.f32 %v3933, %v2712
        %v3935 = vmax.f32 %v3934, %v2718
        %v3936 = vmax.f32 %v3935, %v2722
        %v3937 = vmax.f32 %v3936, %v2728
        %v3938 = vmax.f32 %v3937, %v2732
        %v3939 = vmax.f32 %v3938, %v2738
        %v3940 = vmax.f32 %v3939, %v2742
        %v3941 = vmax.f32 %v3940, %v2748
        %v3942 = vmax.f32 %v3941, %v2752
        %v3943 = vmax.f32 %v3942, %v2758
        %v3944 = vmax.f32 %v3943, %v2762
        %v3945 = vmax.f32 %v3944, %v2768
        %v3946 = vmax.f32 %v3945, %v2772
        %v3947 = vmax.f32 %v3946, %v2778
        %v3948 = vmax.f32 %v3947, %v2782
        %v3949 = vmax.f32 %v3948, %v2788
        %v3950 = vmax.f32 %v3949, %v2792
        %v3951 = vmax.f32 %v3950, %v2798
        %v3952 = vmax.f32 %v3951, %v2802
        %v3953 = vmax.f32 %v3952, %v2808
        %v3954 = vmax.f32 %v3953, %v2812
        %v3955 = vmax.f32 %v3954, %v2818
        %v3956 = vmax.f32 %v3955, %v2822
        %v3957 = vmax.f32 %v3956, %v2828
        %v3958 = vmax.f32 %v3957, %v2832
        %v3959 = vmax.f32 %v3958, %v2838
        %v3960 = vmax.f32 %v3959, %v2842
        %v3961 = vmax.f32 %v3960, %v2848
        %v3962 = vmax.f32 %v3961, %v2852
        %v3963 = vrot.slane %v3962, 4
        %v3964 = vmax.f32 %v3962, %v3963
        %v3965 = vrot.slane %v3964, 2
        %v3966 = vmax.f32 %v3964, %v3965
        %v3967 = vrot.slane %v3966, 1
        %v3968 = vmax.f32 %v3966, %v3967
        %v3969 = vmax.f32 %v2700, %v2704
        %v3970 = vmax.f32 %v3969, %v2710
        %v3971 = vmax.f32 %v3970, %v2714
        %v3972 = vmax.f32 %v3971, %v2720
        %v3973 = vmax.f32 %v3972, %v2724
        %v3974 = vmax.f32 %v3973, %v2730
        %v3975 = vmax.f32 %v3974, %v2734
        %v3976 = vmax.f32 %v3975, %v2740
        %v3977 = vmax.f32 %v3976, %v2744
        %v3978 = vmax.f32 %v3977, %v2750
        %v3979 = vmax.f32 %v3978, %v2754
        %v3980 = vmax.f32 %v3979, %v2760
        %v3981 = vmax.f32 %v3980, %v2764
        %v3982 = vmax.f32 %v3981, %v2770
        %v3983 = vmax.f32 %v3982, %v2774
        %v3984 = vmax.f32 %v3983, %v2780
        %v3985 = vmax.f32 %v3984, %v2784
        %v3986 = vmax.f32 %v3985, %v2790
        %v3987 = vmax.f32 %v3986, %v2794
        %v3988 = vmax.f32 %v3987, %v2800
        %v3989 = vmax.f32 %v3988, %v2804
        %v3990 = vmax.f32 %v3989, %v2810
        %v3991 = vmax.f32 %v3990, %v2814
        %v3992 = vmax.f32 %v3991, %v2820
        %v3993 = vmax.f32 %v3992, %v2824
        %v3994 = vmax.f32 %v3993, %v2830
        %v3995 = vmax.f32 %v3994, %v2834
        %v3996 = vmax.f32 %v3995, %v2840
        %v3997 = vmax.f32 %v3996, %v2844
        %v3998 = vmax.f32 %v3997, %v2850
        %v3999 = vmax.f32 %v3998, %v2854
        %v4000 = vrot.slane %v3999, 4
        %v4001 = vmax.f32 %v3999, %v4000
        %v4002 = vrot.slane %v4001, 2
        %v4003 = vmax.f32 %v4001, %v4002
        %v4004 = vrot.slane %v4003, 1
        %v4005 = vmax.f32 %v4003, %v4004
        %v4006 = vmax.f32 %v3051, %v3055
        %v4007 = vmax.f32 %v4006, %v3061
        %v4008 = vmax.f32 %v4007, %v3065
        %v4009 = vmax.f32 %v4008, %v3071
        %v4010 = vmax.f32 %v4009, %v3075
        %v4011 = vmax.f32 %v4010, %v3081
        %v4012 = vmax.f32 %v4011, %v3085
        %v4013 = vmax.f32 %v4012, %v3091
        %v4014 = vmax.f32 %v4013, %v3095
        %v4015 = vmax.f32 %v4014, %v3101
        %v4016 = vmax.f32 %v4015, %v3105
        %v4017 = vmax.f32 %v4016, %v3111
        %v4018 = vmax.f32 %v4017, %v3115
        %v4019 = vmax.f32 %v4018, %v3121
        %v4020 = vmax.f32 %v4019, %v3125
        %v4021 = vmax.f32 %v4020, %v3131
        %v4022 = vmax.f32 %v4021, %v3135
        %v4023 = vmax.f32 %v4022, %v3141
        %v4024 = vmax.f32 %v4023, %v3145
        %v4025 = vmax.f32 %v4024, %v3151
        %v4026 = vmax.f32 %v4025, %v3155
        %v4027 = vmax.f32 %v4026, %v3161
        %v4028 = vmax.f32 %v4027, %v3165
        %v4029 = vmax.f32 %v4028, %v3171
        %v4030 = vmax.f32 %v4029, %v3175
        %v4031 = vmax.f32 %v4030, %v3181
        %v4032 = vmax.f32 %v4031, %v3185
        %v4033 = vmax.f32 %v4032, %v3191
        %v4034 = vmax.f32 %v4033, %v3195
        %v4035 = vmax.f32 %v4034, %v3201
        %v4036 = vmax.f32 %v4035, %v3205
        %v4037 = vrot.slane %v4036, 4
        %v4038 = vmax.f32 %v4036, %v4037
        %v4039 = vrot.slane %v4038, 2
        %v4040 = vmax.f32 %v4038, %v4039
        %v4041 = vrot.slane %v4040, 1
        %v4042 = vmax.f32 %v4040, %v4041
        %v4043 = vmax.f32 %v3053, %v3057
        %v4044 = vmax.f32 %v4043, %v3063
        %v4045 = vmax.f32 %v4044, %v3067
        %v4046 = vmax.f32 %v4045, %v3073
        %v4047 = vmax.f32 %v4046, %v3077
        %v4048 = vmax.f32 %v4047, %v3083
        %v4049 = vmax.f32 %v4048, %v3087
        %v4050 = vmax.f32 %v4049, %v3093
        %v4051 = vmax.f32 %v4050, %v3097
        %v4052 = vmax.f32 %v4051, %v3103
        %v4053 = vmax.f32 %v4052, %v3107
        %v4054 = vmax.f32 %v4053, %v3113
        %v4055 = vmax.f32 %v4054, %v3117
        %v4056 = vmax.f32 %v4055, %v3123
        %v4057 = vmax.f32 %v4056, %v3127
        %v4058 = vmax.f32 %v4057, %v3133
        %v4059 = vmax.f32 %v4058, %v3137
        %v4060 = vmax.f32 %v4059, %v3143
        %v4061 = vmax.f32 %v4060, %v3147
        %v4062 = vmax.f32 %v4061, %v3153
        %v4063 = vmax.f32 %v4062, %v3157
        %v4064 = vmax.f32 %v4063, %v3163
        %v4065 = vmax.f32 %v4064, %v3167
        %v4066 = vmax.f32 %v4065, %v3173
        %v4067 = vmax.f32 %v4066, %v3177
        %v4068 = vmax.f32 %v4067, %v3183
        %v4069 = vmax.f32 %v4068, %v3187
        %v4070 = vmax.f32 %v4069, %v3193
        %v4071 = vmax.f32 %v4070, %v3197
        %v4072 = vmax.f32 %v4071, %v3203
        %v4073 = vmax.f32 %v4072, %v3207
        %v4074 = vrot.slane %v4073, 4
        %v4075 = vmax.f32 %v4073, %v4074
        %v4076 = vrot.slane %v4075, 2
        %v4077 = vmax.f32 %v4075, %v4076
        %v4078 = vrot.slane %v4077, 1
        %v4079 = vmax.f32 %v4077, %v4078
        %v4080 = vmax.f32 %v3404, %v3408
        %v4081 = vmax.f32 %v4080, %v3414
        %v4082 = vmax.f32 %v4081, %v3418
        %v4083 = vmax.f32 %v4082, %v3424
        %v4084 = vmax.f32 %v4083, %v3428
        %v4085 = vmax.f32 %v4084, %v3434
        %v4086 = vmax.f32 %v4085, %v3438
        %v4087 = vmax.f32 %v4086, %v3444
        %v4088 = vmax.f32 %v4087, %v3448
        %v4089 = vmax.f32 %v4088, %v3454
        %v4090 = vmax.f32 %v4089, %v3458
        %v4091 = vmax.f32 %v4090, %v3464
        %v4092 = vmax.f32 %v4091, %v3468
        %v4093 = vmax.f32 %v4092, %v3474
        %v4094 = vmax.f32 %v4093, %v3478
        %v4095 = vmax.f32 %v4094, %v3484
        %v4096 = vmax.f32 %v4095, %v3488
        %v4097 = vmax.f32 %v4096, %v3494
        %v4098 = vmax.f32 %v4097, %v3498
        %v4099 = vmax.f32 %v4098, %v3504
        %v4100 = vmax.f32 %v4099, %v3508
        %v4101 = vmax.f32 %v4100, %v3514
        %v4102 = vmax.f32 %v4101, %v3518
        %v4103 = vmax.f32 %v4102, %v3524
        %v4104 = vmax.f32 %v4103, %v3528
        %v4105 = vmax.f32 %v4104, %v3534
        %v4106 = vmax.f32 %v4105, %v3538
        %v4107 = vmax.f32 %v4106, %v3544
        %v4108 = vmax.f32 %v4107, %v3548
        %v4109 = vmax.f32 %v4108, %v3554
        %v4110 = vmax.f32 %v4109, %v3558
        %v4111 = vrot.slane %v4110, 4
        %v4112 = vmax.f32 %v4110, %v4111
        %v4113 = vrot.slane %v4112, 2
        %v4114 = vmax.f32 %v4112, %v4113
        %v4115 = vrot.slane %v4114, 1
        %v4116 = vmax.f32 %v4114, %v4115
        %v4117 = vmax.f32 %v3406, %v3410
        %v4118 = vmax.f32 %v4117, %v3416
        %v4119 = vmax.f32 %v4118, %v3420
        %v4120 = vmax.f32 %v4119, %v3426
        %v4121 = vmax.f32 %v4120, %v3430
        %v4122 = vmax.f32 %v4121, %v3436
        %v4123 = vmax.f32 %v4122, %v3440
        %v4124 = vmax.f32 %v4123, %v3446
        %v4125 = vmax.f32 %v4124, %v3450
        %v4126 = vmax.f32 %v4125, %v3456
        %v4127 = vmax.f32 %v4126, %v3460
        %v4128 = vmax.f32 %v4127, %v3466
        %v4129 = vmax.f32 %v4128, %v3470
        %v4130 = vmax.f32 %v4129, %v3476
        %v4131 = vmax.f32 %v4130, %v3480
        %v4132 = vmax.f32 %v4131, %v3486
        %v4133 = vmax.f32 %v4132, %v3490
        %v4134 = vmax.f32 %v4133, %v3496
        %v4135 = vmax.f32 %v4134, %v3500
        %v4136 = vmax.f32 %v4135, %v3506
        %v4137 = vmax.f32 %v4136, %v3510
        %v4138 = vmax.f32 %v4137, %v3516
        %v4139 = vmax.f32 %v4138, %v3520
        %v4140 = vmax.f32 %v4139, %v3526
        %v4141 = vmax.f32 %v4140, %v3530
        %v4142 = vmax.f32 %v4141, %v3536
        %v4143 = vmax.f32 %v4142, %v3540
        %v4144 = vmax.f32 %v4143, %v3546
        %v4145 = vmax.f32 %v4144, %v3550
        %v4146 = vmax.f32 %v4145, %v3556
        %v4147 = vmax.f32 %v4146, %v3560
        %v4148 = vrot.slane %v4147, 4
        %v4149 = vmax.f32 %v4147, %v4148
        %v4150 = vrot.slane %v4149, 2
        %v4151 = vmax.f32 %v4149, %v4150
        %v4152 = vrot.slane %v4151, 1
        %v4153 = vmax.f32 %v4151, %v4152
        %v4154 = vld [vmem:[#allocation2] sm:$0xff]
        %v4155 = vld [vmem:[#allocation2 + $0x8] sm:$0xff]
        %v4172 = vcombine.low %v3598, %v3635
        %v4173 = vcombine.low %v3672, %v3709
        %v4175 = vunpack.c.l.s4 1983009808
        %v4176 = vunpack.c.0.s8 %v4175
        %v4177 = vlaneseq
        %v4178 = vshrl.u32 %v4177, 7
        %v4179 = vsub.s32 %v4176, %v4178
        %v4180 = vrot.slane %v4172, %v4179
        %v4182 = vunpack.c.l.s4 1983009808
        %v4183 = vunpack.c.0.s8 %v4182
        %v4184 = vlaneseq
        %v4185 = vshrl.u32 %v4184, 7
        %v4186 = vsub.s32 %v4183, %v4185
        %v4187 = vrot.slane %v4173, %v4186
        %v4188 = vcombine.low %v4180, %v4187
        %v4189 = vcombine.low %v3746, %v3783
        %v4190 = vcombine.low %v3820, %v3857
        %v4192 = vunpack.c.l.s4 1983009808
        %v4193 = vunpack.c.0.s8 %v4192
        %v4194 = vlaneseq
        %v4195 = vshrl.u32 %v4194, 7
        %v4196 = vsub.s32 %v4193, %v4195
        %v4197 = vrot.slane %v4189, %v4196
        %v4199 = vunpack.c.l.s4 1983009808
        %v4200 = vunpack.c.0.s8 %v4199
        %v4201 = vlaneseq
        %v4202 = vshrl.u32 %v4201, 7
        %v4203 = vsub.s32 %v4200, %v4202
        %v4204 = vrot.slane %v4190, %v4203
        %v4205 = vcombine.low %v4197, %v4204
        %v4206 = vcombine.low %v3894, %v3931
        %v4207 = vcombine.low %v3968, %v4005
        %v4209 = vunpack.c.l.s4 1983009808
        %v4210 = vunpack.c.0.s8 %v4209
        %v4211 = vlaneseq
        %v4212 = vshrl.u32 %v4211, 7
        %v4213 = vsub.s32 %v4210, %v4212
        %v4214 = vrot.slane %v4206, %v4213
        %v4216 = vunpack.c.l.s4 1983009808
        %v4217 = vunpack.c.0.s8 %v4216
        %v4218 = vlaneseq
        %v4219 = vshrl.u32 %v4218, 7
        %v4220 = vsub.s32 %v4217, %v4219
        %v4221 = vrot.slane %v4207, %v4220
        %v4222 = vcombine.low %v4214, %v4221
        %v4223 = vcombine.low %v4042, %v4079
        %v4224 = vcombine.low %v4116, %v4153
        %v4226 = vunpack.c.l.s4 1983009808
        %v4227 = vunpack.c.0.s8 %v4226
        %v4228 = vlaneseq
        %v4229 = vshrl.u32 %v4228, 7
        %v4230 = vsub.s32 %v4227, %v4229
        %v4231 = vrot.slane %v4223, %v4230
        %v4233 = vunpack.c.l.s4 1983009808
        %v4234 = vunpack.c.0.s8 %v4233
        %v4235 = vlaneseq
        %v4236 = vshrl.u32 %v4235, 7
        %v4237 = vsub.s32 %v4234, %v4236
        %v4238 = vrot.slane %v4224, %v4237
        %v4239 = vcombine.low %v4231, %v4238
        %vm4240 = vcmask 1044484
        %v4241 = vsel %vm4240, %v4188, %v4188
        %vm4242 = vcmask 1046534
        %v4243 = vsel %vm4242, %v4188, %v4241
        %v4244 = vrot.slane %v4222, 7
        %vm4245 = vcmask 1041409
        %v4246 = vsel %vm4245, %v4244, %v4243
        %vm4247 = vcmask 1043459
        %v4248 = vsel %vm4247, %v4244, %v4246
        %vm4249 = vcmask 1045509
        %v4250 = vsel %vm4249, %v4244, %v4248
        %vm4251 = vcmask 1047559
        %v4252 = vsel %vm4251, %v4244, %v4250
        %v4253 = vsel %vm4240, %v4205, %v4205
        %v4254 = vsel %vm4242, %v4205, %v4253
        %v4255 = vrot.slane %v4239, 7
        %v4256 = vsel %vm4245, %v4255, %v4254
        %v4257 = vsel %vm4247, %v4255, %v4256
        %v4258 = vsel %vm4249, %v4255, %v4257
        %v4259 = vsel %vm4251, %v4255, %v4258
        %v4262 = vmax.f32 %v4154, %v4252
        %v4263 = vmax.f32 %v4155, %v4259
        %4264 = vst [vmem:[#allocation2] sm:$0xff] %v4262
        %4265 = vst [vmem:[#allocation2 + $0x8] sm:$0xff] %v4263
        // Predicated region
        $region89: #{tpu_custom_call.1} parent=71 // pred_check
          %p4266 = pneg %p518
        $region90: #{tpu_custom_call.1} parent=71 // pred_check_branch
          %4268 = sbr.rel (%p4266) target = $region92
        $region91: #{tpu_custom_call.1} parent=71 // pred_region
          %v4269 = vld [vmem:[#allocation2] sm:$0xff]
          %v4270 = vld [vmem:[#allocation2 + $0x8] sm:$0xff]
          %v4271 = vld [vmem:[%s6] sm:$0xff]
          %v4273 = vlaneseq
          %v4274 = vshrl.u32 %v4273, 7
          %v4275 = vsub.s32 0, %v4274
          %v4276 = vrot.slane %v4271, %v4275
          %v4277 = vlaneseq
          %v4278 = vshrl.u32 %v4277, 7
          %v4279 = vsub.s32 1, %v4278
          %v4280 = vrot.slane %v4271, %v4279
          %v4281 = vlaneseq
          %v4282 = vshrl.u32 %v4281, 7
          %v4283 = vsub.s32 2, %v4282
          %v4284 = vrot.slane %v4271, %v4283
          %v4285 = vlaneseq
          %v4286 = vshrl.u32 %v4285, 7
          %v4287 = vsub.s32 3, %v4286
          %v4288 = vrot.slane %v4271, %v4287
          %v4289 = vlaneseq
          %v4290 = vshrl.u32 %v4289, 7
          %v4291 = vsub.s32 4, %v4290
          %v4292 = vrot.slane %v4271, %v4291
          %v4293 = vlaneseq
          %v4294 = vshrl.u32 %v4293, 7
          %v4295 = vsub.s32 5, %v4294
          %v4296 = vrot.slane %v4271, %v4295
          %v4297 = vlaneseq
          %v4298 = vshrl.u32 %v4297, 7
          %v4299 = vsub.s32 6, %v4298
          %v4300 = vrot.slane %v4271, %v4299
          %v4301 = vlaneseq
          %v4302 = vshrl.u32 %v4301, 7
          %v4303 = vsub.s32 7, %v4302
          %v4304 = vrot.slane %v4271, %v4303
          %v4305 = vcombine.low %v4276, %v4280
          %v4306 = vcombine.low %v4284, %v4288
          %v4308 = vunpack.c.l.s4 1983009808
          %v4309 = vunpack.c.0.s8 %v4308
          %v4310 = vlaneseq
          %v4311 = vshrl.u32 %v4310, 7
          %v4312 = vsub.s32 %v4309, %v4311
          %v4313 = vrot.slane %v4305, %v4312
          %v4315 = vunpack.c.l.s4 1983009808
          %v4316 = vunpack.c.0.s8 %v4315
          %v4317 = vlaneseq
          %v4318 = vshrl.u32 %v4317, 7
          %v4319 = vsub.s32 %v4316, %v4318
          %v4320 = vrot.slane %v4306, %v4319
          %v4321 = vcombine.low %v4313, %v4320
          %v4322 = vcombine.low %v4292, %v4296
          %v4323 = vcombine.low %v4300, %v4304
          %v4325 = vunpack.c.l.s4 1983009808
          %v4326 = vunpack.c.0.s8 %v4325
          %v4327 = vlaneseq
          %v4328 = vshrl.u32 %v4327, 7
          %v4329 = vsub.s32 %v4326, %v4328
          %v4330 = vrot.slane %v4322, %v4329
          %v4332 = vunpack.c.l.s4 1983009808
          %v4333 = vunpack.c.0.s8 %v4332
          %v4334 = vlaneseq
          %v4335 = vshrl.u32 %v4334, 7
          %v4336 = vsub.s32 %v4333, %v4335
          %v4337 = vrot.slane %v4323, %v4336
          %v4338 = vcombine.low %v4330, %v4337
          %v4341 = vadd.f32 %v4269, %v4321
          %v4342 = vadd.f32 %v4270, %v4338
          %v4343 = vmax.f32 %v4341, 0.0
          %v4344 = vmax.f32 %v4342, 0.0
          %v4347 = vcombine.high %v4343, %v4343
          %v4349 = vunpack.c.l.s4 1983009808
          %v4350 = vunpack.c.0.s8 %v4349
          %v4351 = vlaneseq
          %v4352 = vshrl.u32 %v4351, 7
          %v4353 = vsub.s32 %v4350, %v4352
          %v4354 = vrot.slane %v4343, %v4353
          %v4356 = vunpack.c.l.s4 1983009808
          %v4357 = vunpack.c.0.s8 %v4356
          %v4358 = vlaneseq
          %v4359 = vshrl.u32 %v4358, 7
          %v4360 = vsub.s32 %v4357, %v4359
          %v4361 = vrot.slane %v4347, %v4360
          %v4362 = vcombine.high %v4354, %v4354
          %v4363 = vcombine.high %v4361, %v4361
          %v4364 = vcombine.high %v4344, %v4344
          %v4366 = vunpack.c.l.s4 1983009808
          %v4367 = vunpack.c.0.s8 %v4366
          %v4368 = vlaneseq
          %v4369 = vshrl.u32 %v4368, 7
          %v4370 = vsub.s32 %v4367, %v4369
          %v4371 = vrot.slane %v4344, %v4370
          %v4373 = vunpack.c.l.s4 1983009808
          %v4374 = vunpack.c.0.s8 %v4373
          %v4375 = vlaneseq
          %v4376 = vshrl.u32 %v4375, 7
          %v4377 = vsub.s32 %v4374, %v4376
          %v4378 = vrot.slane %v4364, %v4377
          %v4379 = vcombine.high %v4371, %v4371
          %v4380 = vcombine.high %v4378, %v4378
          %v4389 = vpack.c.bf16 %v4354, %v4354
          %v4390 = vpack.c.bf16 %v4362, %v4362
          %v4391 = vpack.c.bf16 %v4361, %v4361
          %v4392 = vpack.c.bf16 %v4363, %v4363
          %v4393 = vpack.c.bf16 %v4371, %v4371
          %v4394 = vpack.c.bf16 %v4379, %v4379
          %v4395 = vpack.c.bf16 %v4378, %v4378
          %v4396 = vpack.c.bf16 %v4380, %v4380
          %v4397 = vld [vmem:[#allocation3] sm:$0xff]
          %v4398 = vld [vmem:[#allocation3 + $0x8] sm:$0xff]
          %v4399 = vld [vmem:[#allocation3 + $0x10] sm:$0xff]
          %v4400 = vld [vmem:[#allocation3 + $0x18] sm:$0xff]
          %v4401 = vld [vmem:[#allocation3 + $0x20] sm:$0xff]
          %v4402 = vld [vmem:[#allocation3 + $0x28] sm:$0xff]
          %v4403 = vld [vmem:[#allocation3 + $0x30] sm:$0xff]
          %v4404 = vld [vmem:[#allocation3 + $0x38] sm:$0xff]
          %v4405 = vld [vmem:[#allocation3 + $0x40] sm:$0xff]
          %v4406 = vld [vmem:[#allocation3 + $0x48] sm:$0xff]
          %v4407 = vld [vmem:[#allocation3 + $0x50] sm:$0xff]
          %v4408 = vld [vmem:[#allocation3 + $0x58] sm:$0xff]
          %v4409 = vld [vmem:[#allocation3 + $0x60] sm:$0xff]
          %v4410 = vld [vmem:[#allocation3 + $0x68] sm:$0xff]
          %v4411 = vld [vmem:[#allocation3 + $0x70] sm:$0xff]
          %v4412 = vld [vmem:[#allocation3 + $0x78] sm:$0xff]
          %v4413 = vld [vmem:[#allocation3 + $0x80] sm:$0xff]
          %v4414 = vld [vmem:[#allocation3 + $0x88] sm:$0xff]
          %v4415 = vld [vmem:[#allocation3 + $0x90] sm:$0xff]
          %v4416 = vld [vmem:[#allocation3 + $0x98] sm:$0xff]
          %v4417 = vld [vmem:[#allocation3 + $0xa0] sm:$0xff]
          %v4418 = vld [vmem:[#allocation3 + $0xa8] sm:$0xff]
          %v4419 = vld [vmem:[#allocation3 + $0xb0] sm:$0xff]
          %v4420 = vld [vmem:[#allocation3 + $0xb8] sm:$0xff]
          %v4421 = vld [vmem:[#allocation3 + $0xc0] sm:$0xff]
          %v4422 = vld [vmem:[#allocation3 + $0xc8] sm:$0xff]
          %v4423 = vld [vmem:[#allocation3 + $0xd0] sm:$0xff]
          %v4424 = vld [vmem:[#allocation3 + $0xd8] sm:$0xff]
          %v4425 = vld [vmem:[#allocation3 + $0xe0] sm:$0xff]
          %v4426 = vld [vmem:[#allocation3 + $0xe8] sm:$0xff]
          %v4427 = vld [vmem:[#allocation3 + $0xf0] sm:$0xff]
          %v4428 = vld [vmem:[#allocation3 + $0xf8] sm:$0xff]
          %v4429 = vld [vmem:[#allocation3 + $0x100] sm:$0xff]
          %v4430 = vld [vmem:[#allocation3 + $0x108] sm:$0xff]
          %v4431 = vld [vmem:[#allocation3 + $0x110] sm:$0xff]
          %v4432 = vld [vmem:[#allocation3 + $0x118] sm:$0xff]
          %v4433 = vld [vmem:[#allocation3 + $0x120] sm:$0xff]
          %v4434 = vld [vmem:[#allocation3 + $0x128] sm:$0xff]
          %v4435 = vld [vmem:[#allocation3 + $0x130] sm:$0xff]
          %v4436 = vld [vmem:[#allocation3 + $0x138] sm:$0xff]
          %v4437 = vld [vmem:[#allocation3 + $0x140] sm:$0xff]
          %v4438 = vld [vmem:[#allocation3 + $0x148] sm:$0xff]
          %v4439 = vld [vmem:[#allocation3 + $0x150] sm:$0xff]
          %v4440 = vld [vmem:[#allocation3 + $0x158] sm:$0xff]
          %v4441 = vld [vmem:[#allocation3 + $0x160] sm:$0xff]
          %v4442 = vld [vmem:[#allocation3 + $0x168] sm:$0xff]
          %v4443 = vld [vmem:[#allocation3 + $0x170] sm:$0xff]
          %v4444 = vld [vmem:[#allocation3 + $0x178] sm:$0xff]
          %v4445 = vld [vmem:[#allocation3 + $0x180] sm:$0xff]
          %v4446 = vld [vmem:[#allocation3 + $0x188] sm:$0xff]
          %v4447 = vld [vmem:[#allocation3 + $0x190] sm:$0xff]
          %v4448 = vld [vmem:[#allocation3 + $0x198] sm:$0xff]
          %v4449 = vld [vmem:[#allocation3 + $0x1a0] sm:$0xff]
          %v4450 = vld [vmem:[#allocation3 + $0x1a8] sm:$0xff]
          %v4451 = vld [vmem:[#allocation3 + $0x1b0] sm:$0xff]
          %v4452 = vld [vmem:[#allocation3 + $0x1b8] sm:$0xff]
          %v4453 = vld [vmem:[#allocation3 + $0x1c0] sm:$0xff]
          %v4454 = vld [vmem:[#allocation3 + $0x1c8] sm:$0xff]
          %v4455 = vld [vmem:[#allocation3 + $0x1d0] sm:$0xff]
          %v4456 = vld [vmem:[#allocation3 + $0x1d8] sm:$0xff]
          %v4457 = vld [vmem:[#allocation3 + $0x1e0] sm:$0xff]
          %v4458 = vld [vmem:[#allocation3 + $0x1e8] sm:$0xff]
          %v4459 = vld [vmem:[#allocation3 + $0x1f0] sm:$0xff]
          %v4460 = vld [vmem:[#allocation3 + $0x1f8] sm:$0xff]
          %v4461 = vld [vmem:[#allocation3 + $0x200] sm:$0xff]
          %v4462 = vld [vmem:[#allocation3 + $0x208] sm:$0xff]
          %v4463 = vld [vmem:[#allocation3 + $0x210] sm:$0xff]
          %v4464 = vld [vmem:[#allocation3 + $0x218] sm:$0xff]
          %v4465 = vld [vmem:[#allocation3 + $0x220] sm:$0xff]
          %v4466 = vld [vmem:[#allocation3 + $0x228] sm:$0xff]
          %v4467 = vld [vmem:[#allocation3 + $0x230] sm:$0xff]
          %v4468 = vld [vmem:[#allocation3 + $0x238] sm:$0xff]
          %v4469 = vld [vmem:[#allocation3 + $0x240] sm:$0xff]
          %v4470 = vld [vmem:[#allocation3 + $0x248] sm:$0xff]
          %v4471 = vld [vmem:[#allocation3 + $0x250] sm:$0xff]
          %v4472 = vld [vmem:[#allocation3 + $0x258] sm:$0xff]
          %v4473 = vld [vmem:[#allocation3 + $0x260] sm:$0xff]
          %v4474 = vld [vmem:[#allocation3 + $0x268] sm:$0xff]
          %v4475 = vld [vmem:[#allocation3 + $0x270] sm:$0xff]
          %v4476 = vld [vmem:[#allocation3 + $0x278] sm:$0xff]
          %v4477 = vld [vmem:[#allocation3 + $0x280] sm:$0xff]
          %v4478 = vld [vmem:[#allocation3 + $0x288] sm:$0xff]
          %v4479 = vld [vmem:[#allocation3 + $0x290] sm:$0xff]
          %v4480 = vld [vmem:[#allocation3 + $0x298] sm:$0xff]
          %v4481 = vld [vmem:[#allocation3 + $0x2a0] sm:$0xff]
          %v4482 = vld [vmem:[#allocation3 + $0x2a8] sm:$0xff]
          %v4483 = vld [vmem:[#allocation3 + $0x2b0] sm:$0xff]
          %v4484 = vld [vmem:[#allocation3 + $0x2b8] sm:$0xff]
          %v4485 = vld [vmem:[#allocation3 + $0x2c0] sm:$0xff]
          %v4486 = vld [vmem:[#allocation3 + $0x2c8] sm:$0xff]
          %v4487 = vld [vmem:[#allocation3 + $0x2d0] sm:$0xff]
          %v4488 = vld [vmem:[#allocation3 + $0x2d8] sm:$0xff]
          %v4489 = vld [vmem:[#allocation3 + $0x2e0] sm:$0xff]
          %v4490 = vld [vmem:[#allocation3 + $0x2e8] sm:$0xff]
          %v4491 = vld [vmem:[#allocation3 + $0x2f0] sm:$0xff]
          %v4492 = vld [vmem:[#allocation3 + $0x2f8] sm:$0xff]
          %v4493 = vld [vmem:[#allocation3 + $0x300] sm:$0xff]
          %v4494 = vld [vmem:[#allocation3 + $0x308] sm:$0xff]
          %v4495 = vld [vmem:[#allocation3 + $0x310] sm:$0xff]
          %v4496 = vld [vmem:[#allocation3 + $0x318] sm:$0xff]
          %v4497 = vld [vmem:[#allocation3 + $0x320] sm:$0xff]
          %v4498 = vld [vmem:[#allocation3 + $0x328] sm:$0xff]
          %v4499 = vld [vmem:[#allocation3 + $0x330] sm:$0xff]
          %v4500 = vld [vmem:[#allocation3 + $0x338] sm:$0xff]
          %v4501 = vld [vmem:[#allocation3 + $0x340] sm:$0xff]
          %v4502 = vld [vmem:[#allocation3 + $0x348] sm:$0xff]
          %v4503 = vld [vmem:[#allocation3 + $0x350] sm:$0xff]
          %v4504 = vld [vmem:[#allocation3 + $0x358] sm:$0xff]
          %v4505 = vld [vmem:[#allocation3 + $0x360] sm:$0xff]
          %v4506 = vld [vmem:[#allocation3 + $0x368] sm:$0xff]
          %v4507 = vld [vmem:[#allocation3 + $0x370] sm:$0xff]
          %v4508 = vld [vmem:[#allocation3 + $0x378] sm:$0xff]
          %v4509 = vld [vmem:[#allocation3 + $0x380] sm:$0xff]
          %v4510 = vld [vmem:[#allocation3 + $0x388] sm:$0xff]
          %v4511 = vld [vmem:[#allocation3 + $0x390] sm:$0xff]
          %v4512 = vld [vmem:[#allocation3 + $0x398] sm:$0xff]
          %v4513 = vld [vmem:[#allocation3 + $0x3a0] sm:$0xff]
          %v4514 = vld [vmem:[#allocation3 + $0x3a8] sm:$0xff]
          %v4515 = vld [vmem:[#allocation3 + $0x3b0] sm:$0xff]
          %v4516 = vld [vmem:[#allocation3 + $0x3b8] sm:$0xff]
          %v4517 = vld [vmem:[#allocation3 + $0x3c0] sm:$0xff]
          %v4518 = vld [vmem:[#allocation3 + $0x3c8] sm:$0xff]
          %v4519 = vld [vmem:[#allocation3 + $0x3d0] sm:$0xff]
          %v4520 = vld [vmem:[#allocation3 + $0x3d8] sm:$0xff]
          %v4521 = vld [vmem:[#allocation3 + $0x3e0] sm:$0xff]
          %v4522 = vld [vmem:[#allocation3 + $0x3e8] sm:$0xff]
          %v4523 = vld [vmem:[#allocation3 + $0x3f0] sm:$0xff]
          %v4524 = vld [vmem:[#allocation3 + $0x3f8] sm:$0xff]
          %v4525 = vld [vmem:[#allocation3 + $0x400] sm:$0xff]
          %v4526 = vld [vmem:[#allocation3 + $0x408] sm:$0xff]
          %v4527 = vld [vmem:[#allocation3 + $0x410] sm:$0xff]
          %v4528 = vld [vmem:[#allocation3 + $0x418] sm:$0xff]
          %v4529 = vld [vmem:[#allocation3 + $0x420] sm:$0xff]
          %v4530 = vld [vmem:[#allocation3 + $0x428] sm:$0xff]
          %v4531 = vld [vmem:[#allocation3 + $0x430] sm:$0xff]
          %v4532 = vld [vmem:[#allocation3 + $0x438] sm:$0xff]
          %v4533 = vld [vmem:[#allocation3 + $0x440] sm:$0xff]
          %v4534 = vld [vmem:[#allocation3 + $0x448] sm:$0xff]
          %v4535 = vld [vmem:[#allocation3 + $0x450] sm:$0xff]
          %v4536 = vld [vmem:[#allocation3 + $0x458] sm:$0xff]
          %v4537 = vld [vmem:[#allocation3 + $0x460] sm:$0xff]
          %v4538 = vld [vmem:[#allocation3 + $0x468] sm:$0xff]
          %v4539 = vld [vmem:[#allocation3 + $0x470] sm:$0xff]
          %v4540 = vld [vmem:[#allocation3 + $0x478] sm:$0xff]
          %v4541 = vld [vmem:[#allocation3 + $0x480] sm:$0xff]
          %v4542 = vld [vmem:[#allocation3 + $0x488] sm:$0xff]
          %v4543 = vld [vmem:[#allocation3 + $0x490] sm:$0xff]
          %v4544 = vld [vmem:[#allocation3 + $0x498] sm:$0xff]
          %v4545 = vld [vmem:[#allocation3 + $0x4a0] sm:$0xff]
          %v4546 = vld [vmem:[#allocation3 + $0x4a8] sm:$0xff]
          %v4547 = vld [vmem:[#allocation3 + $0x4b0] sm:$0xff]
          %v4548 = vld [vmem:[#allocation3 + $0x4b8] sm:$0xff]
          %v4549 = vld [vmem:[#allocation3 + $0x4c0] sm:$0xff]
          %v4550 = vld [vmem:[#allocation3 + $0x4c8] sm:$0xff]
          %v4551 = vld [vmem:[#allocation3 + $0x4d0] sm:$0xff]
          %v4552 = vld [vmem:[#allocation3 + $0x4d8] sm:$0xff]
          %v4553 = vld [vmem:[#allocation3 + $0x4e0] sm:$0xff]
          %v4554 = vld [vmem:[#allocation3 + $0x4e8] sm:$0xff]
          %v4555 = vld [vmem:[#allocation3 + $0x4f0] sm:$0xff]
          %v4556 = vld [vmem:[#allocation3 + $0x4f8] sm:$0xff]
          %v4557 = vld [vmem:[#allocation3 + $0x500] sm:$0xff]
          %v4558 = vld [vmem:[#allocation3 + $0x508] sm:$0xff]
          %v4559 = vld [vmem:[#allocation3 + $0x510] sm:$0xff]
          %v4560 = vld [vmem:[#allocation3 + $0x518] sm:$0xff]
          %v4561 = vld [vmem:[#allocation3 + $0x520] sm:$0xff]
          %v4562 = vld [vmem:[#allocation3 + $0x528] sm:$0xff]
          %v4563 = vld [vmem:[#allocation3 + $0x530] sm:$0xff]
          %v4564 = vld [vmem:[#allocation3 + $0x538] sm:$0xff]
          %v4565 = vld [vmem:[#allocation3 + $0x540] sm:$0xff]
          %v4566 = vld [vmem:[#allocation3 + $0x548] sm:$0xff]
          %v4567 = vld [vmem:[#allocation3 + $0x550] sm:$0xff]
          %v4568 = vld [vmem:[#allocation3 + $0x558] sm:$0xff]
          %v4569 = vld [vmem:[#allocation3 + $0x560] sm:$0xff]
          %v4570 = vld [vmem:[#allocation3 + $0x568] sm:$0xff]
          %v4571 = vld [vmem:[#allocation3 + $0x570] sm:$0xff]
          %v4572 = vld [vmem:[#allocation3 + $0x578] sm:$0xff]
          %v4573 = vld [vmem:[#allocation3 + $0x580] sm:$0xff]
          %v4574 = vld [vmem:[#allocation3 + $0x588] sm:$0xff]
          %v4575 = vld [vmem:[#allocation3 + $0x590] sm:$0xff]
          %v4576 = vld [vmem:[#allocation3 + $0x598] sm:$0xff]
          %v4577 = vld [vmem:[#allocation3 + $0x5a0] sm:$0xff]
          %v4578 = vld [vmem:[#allocation3 + $0x5a8] sm:$0xff]
          %v4579 = vld [vmem:[#allocation3 + $0x5b0] sm:$0xff]
          %v4580 = vld [vmem:[#allocation3 + $0x5b8] sm:$0xff]
          %v4581 = vld [vmem:[#allocation3 + $0x5c0] sm:$0xff]
          %v4582 = vld [vmem:[#allocation3 + $0x5c8] sm:$0xff]
          %v4583 = vld [vmem:[#allocation3 + $0x5d0] sm:$0xff]
          %v4584 = vld [vmem:[#allocation3 + $0x5d8] sm:$0xff]
          %v4585 = vld [vmem:[#allocation3 + $0x5e0] sm:$0xff]
          %v4586 = vld [vmem:[#allocation3 + $0x5e8] sm:$0xff]
          %v4587 = vld [vmem:[#allocation3 + $0x5f0] sm:$0xff]
          %v4588 = vld [vmem:[#allocation3 + $0x5f8] sm:$0xff]
          %v4589 = vld [vmem:[#allocation3 + $0x600] sm:$0xff]
          %v4590 = vld [vmem:[#allocation3 + $0x608] sm:$0xff]
          %v4591 = vld [vmem:[#allocation3 + $0x610] sm:$0xff]
          %v4592 = vld [vmem:[#allocation3 + $0x618] sm:$0xff]
          %v4593 = vld [vmem:[#allocation3 + $0x620] sm:$0xff]
          %v4594 = vld [vmem:[#allocation3 + $0x628] sm:$0xff]
          %v4595 = vld [vmem:[#allocation3 + $0x630] sm:$0xff]
          %v4596 = vld [vmem:[#allocation3 + $0x638] sm:$0xff]
          %v4597 = vld [vmem:[#allocation3 + $0x640] sm:$0xff]
          %v4598 = vld [vmem:[#allocation3 + $0x648] sm:$0xff]
          %v4599 = vld [vmem:[#allocation3 + $0x650] sm:$0xff]
          %v4600 = vld [vmem:[#allocation3 + $0x658] sm:$0xff]
          %v4601 = vld [vmem:[#allocation3 + $0x660] sm:$0xff]
          %v4602 = vld [vmem:[#allocation3 + $0x668] sm:$0xff]
          %v4603 = vld [vmem:[#allocation3 + $0x670] sm:$0xff]
          %v4604 = vld [vmem:[#allocation3 + $0x678] sm:$0xff]
          %v4605 = vld [vmem:[#allocation3 + $0x680] sm:$0xff]
          %v4606 = vld [vmem:[#allocation3 + $0x688] sm:$0xff]
          %v4607 = vld [vmem:[#allocation3 + $0x690] sm:$0xff]
          %v4608 = vld [vmem:[#allocation3 + $0x698] sm:$0xff]
          %v4609 = vld [vmem:[#allocation3 + $0x6a0] sm:$0xff]
          %v4610 = vld [vmem:[#allocation3 + $0x6a8] sm:$0xff]
          %v4611 = vld [vmem:[#allocation3 + $0x6b0] sm:$0xff]
          %v4612 = vld [vmem:[#allocation3 + $0x6b8] sm:$0xff]
          %v4613 = vld [vmem:[#allocation3 + $0x6c0] sm:$0xff]
          %v4614 = vld [vmem:[#allocation3 + $0x6c8] sm:$0xff]
          %v4615 = vld [vmem:[#allocation3 + $0x6d0] sm:$0xff]
          %v4616 = vld [vmem:[#allocation3 + $0x6d8] sm:$0xff]
          %v4617 = vld [vmem:[#allocation3 + $0x6e0] sm:$0xff]
          %v4618 = vld [vmem:[#allocation3 + $0x6e8] sm:$0xff]
          %v4619 = vld [vmem:[#allocation3 + $0x6f0] sm:$0xff]
          %v4620 = vld [vmem:[#allocation3 + $0x6f8] sm:$0xff]
          %v4621 = vld [vmem:[#allocation3 + $0x700] sm:$0xff]
          %v4622 = vld [vmem:[#allocation3 + $0x708] sm:$0xff]
          %v4623 = vld [vmem:[#allocation3 + $0x710] sm:$0xff]
          %v4624 = vld [vmem:[#allocation3 + $0x718] sm:$0xff]
          %v4625 = vld [vmem:[#allocation3 + $0x720] sm:$0xff]
          %v4626 = vld [vmem:[#allocation3 + $0x728] sm:$0xff]
          %v4627 = vld [vmem:[#allocation3 + $0x730] sm:$0xff]
          %v4628 = vld [vmem:[#allocation3 + $0x738] sm:$0xff]
          %v4629 = vld [vmem:[#allocation3 + $0x740] sm:$0xff]
          %v4630 = vld [vmem:[#allocation3 + $0x748] sm:$0xff]
          %v4631 = vld [vmem:[#allocation3 + $0x750] sm:$0xff]
          %v4632 = vld [vmem:[#allocation3 + $0x758] sm:$0xff]
          %v4633 = vld [vmem:[#allocation3 + $0x760] sm:$0xff]
          %v4634 = vld [vmem:[#allocation3 + $0x768] sm:$0xff]
          %v4635 = vld [vmem:[#allocation3 + $0x770] sm:$0xff]
          %v4636 = vld [vmem:[#allocation3 + $0x778] sm:$0xff]
          %v4637 = vld [vmem:[#allocation3 + $0x780] sm:$0xff]
          %v4638 = vld [vmem:[#allocation3 + $0x788] sm:$0xff]
          %v4639 = vld [vmem:[#allocation3 + $0x790] sm:$0xff]
          %v4640 = vld [vmem:[#allocation3 + $0x798] sm:$0xff]
          %v4641 = vld [vmem:[#allocation3 + $0x7a0] sm:$0xff]
          %v4642 = vld [vmem:[#allocation3 + $0x7a8] sm:$0xff]
          %v4643 = vld [vmem:[#allocation3 + $0x7b0] sm:$0xff]
          %v4644 = vld [vmem:[#allocation3 + $0x7b8] sm:$0xff]
          %v4645 = vld [vmem:[#allocation3 + $0x7c0] sm:$0xff]
          %v4646 = vld [vmem:[#allocation3 + $0x7c8] sm:$0xff]
          %v4647 = vld [vmem:[#allocation3 + $0x7d0] sm:$0xff]
          %v4648 = vld [vmem:[#allocation3 + $0x7d8] sm:$0xff]
          %v4649 = vld [vmem:[#allocation3 + $0x7e0] sm:$0xff]
          %v4650 = vld [vmem:[#allocation3 + $0x7e8] sm:$0xff]
          %v4651 = vld [vmem:[#allocation3 + $0x7f0] sm:$0xff]
          %v4652 = vld [vmem:[#allocation3 + $0x7f8] sm:$0xff]
          %v4653 = vld [vmem:[%s8] sm:$0xf]
          %v4655 = vlaneseq
          %v4656 = vshrl.u32 %v4655, 7
          %v4657 = vsub.s32 0, %v4656
          %v4658 = vrot.slane %v4653, %v4657
          %v4659 = vlaneseq
          %v4660 = vshrl.u32 %v4659, 7
          %v4661 = vsub.s32 1, %v4660
          %v4662 = vrot.slane %v4653, %v4661
          %v4663 = vlaneseq
          %v4664 = vshrl.u32 %v4663, 7
          %v4665 = vsub.s32 2, %v4664
          %v4666 = vrot.slane %v4653, %v4665
          %v4667 = vlaneseq
          %v4668 = vshrl.u32 %v4667, 7
          %v4669 = vsub.s32 3, %v4668
          %v4670 = vrot.slane %v4653, %v4669
          %v4931 = vunpack.c.l.b16 %v4397
          %v4932 = vunpack.c.h.b16 %v4397
          %v4933 = vunpack.c.l.b16 %v4398
          %v4934 = vunpack.c.h.b16 %v4398
          %v4935 = vunpack.c.l.b16 %v4399
          %v4936 = vunpack.c.h.b16 %v4399
          %v4937 = vunpack.c.l.b16 %v4400
          %v4938 = vunpack.c.h.b16 %v4400
          %v4939 = vunpack.c.l.b16 %v4401
          %v4940 = vunpack.c.h.b16 %v4401
          %v4941 = vunpack.c.l.b16 %v4402
          %v4942 = vunpack.c.h.b16 %v4402
          %v4943 = vunpack.c.l.b16 %v4403
          %v4944 = vunpack.c.h.b16 %v4403
          %v4945 = vunpack.c.l.b16 %v4404
          %v4946 = vunpack.c.h.b16 %v4404
          %v4947 = vunpack.c.l.b16 %v4405
          %v4948 = vunpack.c.h.b16 %v4405
          %v4949 = vunpack.c.l.b16 %v4406
          %v4950 = vunpack.c.h.b16 %v4406
          %v4951 = vunpack.c.l.b16 %v4407
          %v4952 = vunpack.c.h.b16 %v4407
          %v4953 = vunpack.c.l.b16 %v4408
          %v4954 = vunpack.c.h.b16 %v4408
          %v4955 = vunpack.c.l.b16 %v4409
          %v4956 = vunpack.c.h.b16 %v4409
          %v4957 = vunpack.c.l.b16 %v4410
          %v4958 = vunpack.c.h.b16 %v4410
          %v4959 = vunpack.c.l.b16 %v4411
          %v4960 = vunpack.c.h.b16 %v4411
          %v4961 = vunpack.c.l.b16 %v4412
          %v4962 = vunpack.c.h.b16 %v4412
          %v4963 = vunpack.c.l.b16 %v4413
          %v4964 = vunpack.c.h.b16 %v4413
          %v4965 = vunpack.c.l.b16 %v4414
          %v4966 = vunpack.c.h.b16 %v4414
          %v4967 = vunpack.c.l.b16 %v4415
          %v4968 = vunpack.c.h.b16 %v4415
          %v4969 = vunpack.c.l.b16 %v4416
          %v4970 = vunpack.c.h.b16 %v4416
          %v4971 = vunpack.c.l.b16 %v4417
          %v4972 = vunpack.c.h.b16 %v4417
          %v4973 = vunpack.c.l.b16 %v4418
          %v4974 = vunpack.c.h.b16 %v4418
          %v4975 = vunpack.c.l.b16 %v4419
          %v4976 = vunpack.c.h.b16 %v4419
          %v4977 = vunpack.c.l.b16 %v4420
          %v4978 = vunpack.c.h.b16 %v4420
          %v4979 = vunpack.c.l.b16 %v4421
          %v4980 = vunpack.c.h.b16 %v4421
          %v4981 = vunpack.c.l.b16 %v4422
          %v4982 = vunpack.c.h.b16 %v4422
          %v4983 = vunpack.c.l.b16 %v4423
          %v4984 = vunpack.c.h.b16 %v4423
          %v4985 = vunpack.c.l.b16 %v4424
          %v4986 = vunpack.c.h.b16 %v4424
          %v4987 = vunpack.c.l.b16 %v4425
          %v4988 = vunpack.c.h.b16 %v4425
          %v4989 = vunpack.c.l.b16 %v4426
          %v4990 = vunpack.c.h.b16 %v4426
          %v4991 = vunpack.c.l.b16 %v4427
          %v4992 = vunpack.c.h.b16 %v4427
          %v4993 = vunpack.c.l.b16 %v4428
          %v4994 = vunpack.c.h.b16 %v4428
          %v4995 = vunpack.c.l.b16 %v4429
          %v4996 = vunpack.c.h.b16 %v4429
          %v4997 = vunpack.c.l.b16 %v4430
          %v4998 = vunpack.c.h.b16 %v4430
          %v4999 = vunpack.c.l.b16 %v4431
          %v5000 = vunpack.c.h.b16 %v4431
          %v5001 = vunpack.c.l.b16 %v4432
          %v5002 = vunpack.c.h.b16 %v4432
          %v5003 = vunpack.c.l.b16 %v4433
          %v5004 = vunpack.c.h.b16 %v4433
          %v5005 = vunpack.c.l.b16 %v4434
          %v5006 = vunpack.c.h.b16 %v4434
          %v5007 = vunpack.c.l.b16 %v4435
          %v5008 = vunpack.c.h.b16 %v4435
          %v5009 = vunpack.c.l.b16 %v4436
          %v5010 = vunpack.c.h.b16 %v4436
          %v5011 = vunpack.c.l.b16 %v4437
          %v5012 = vunpack.c.h.b16 %v4437
          %v5013 = vunpack.c.l.b16 %v4438
          %v5014 = vunpack.c.h.b16 %v4438
          %v5015 = vunpack.c.l.b16 %v4439
          %v5016 = vunpack.c.h.b16 %v4439
          %v5017 = vunpack.c.l.b16 %v4440
          %v5018 = vunpack.c.h.b16 %v4440
          %v5019 = vunpack.c.l.b16 %v4441
          %v5020 = vunpack.c.h.b16 %v4441
          %v5021 = vunpack.c.l.b16 %v4442
          %v5022 = vunpack.c.h.b16 %v4442
          %v5023 = vunpack.c.l.b16 %v4443
          %v5024 = vunpack.c.h.b16 %v4443
          %v5025 = vunpack.c.l.b16 %v4444
          %v5026 = vunpack.c.h.b16 %v4444
          %v5027 = vunpack.c.l.b16 %v4445
          %v5028 = vunpack.c.h.b16 %v4445
          %v5029 = vunpack.c.l.b16 %v4446
          %v5030 = vunpack.c.h.b16 %v4446
          %v5031 = vunpack.c.l.b16 %v4447
          %v5032 = vunpack.c.h.b16 %v4447
          %v5033 = vunpack.c.l.b16 %v4448
          %v5034 = vunpack.c.h.b16 %v4448
          %v5035 = vunpack.c.l.b16 %v4449
          %v5036 = vunpack.c.h.b16 %v4449
          %v5037 = vunpack.c.l.b16 %v4450
          %v5038 = vunpack.c.h.b16 %v4450
          %v5039 = vunpack.c.l.b16 %v4451
          %v5040 = vunpack.c.h.b16 %v4451
          %v5041 = vunpack.c.l.b16 %v4452
          %v5042 = vunpack.c.h.b16 %v4452
          %v5043 = vunpack.c.l.b16 %v4453
          %v5044 = vunpack.c.h.b16 %v4453
          %v5045 = vunpack.c.l.b16 %v4454
          %v5046 = vunpack.c.h.b16 %v4454
          %v5047 = vunpack.c.l.b16 %v4455
          %v5048 = vunpack.c.h.b16 %v4455
          %v5049 = vunpack.c.l.b16 %v4456
          %v5050 = vunpack.c.h.b16 %v4456
          %v5051 = vunpack.c.l.b16 %v4457
          %v5052 = vunpack.c.h.b16 %v4457
          %v5053 = vunpack.c.l.b16 %v4458
          %v5054 = vunpack.c.h.b16 %v4458
          %v5055 = vunpack.c.l.b16 %v4459
          %v5056 = vunpack.c.h.b16 %v4459
          %v5057 = vunpack.c.l.b16 %v4460
          %v5058 = vunpack.c.h.b16 %v4460
          %v5059 = vunpack.c.l.b16 %v4461
          %v5060 = vunpack.c.h.b16 %v4461
          %v5061 = vunpack.c.l.b16 %v4462
          %v5062 = vunpack.c.h.b16 %v4462
          %v5063 = vunpack.c.l.b16 %v4463
          %v5064 = vunpack.c.h.b16 %v4463
          %v5065 = vunpack.c.l.b16 %v4464
          %v5066 = vunpack.c.h.b16 %v4464
          %v5067 = vunpack.c.l.b16 %v4465
          %v5068 = vunpack.c.h.b16 %v4465
          %v5069 = vunpack.c.l.b16 %v4466
          %v5070 = vunpack.c.h.b16 %v4466
          %v5071 = vunpack.c.l.b16 %v4467
          %v5072 = vunpack.c.h.b16 %v4467
          %v5073 = vunpack.c.l.b16 %v4468
          %v5074 = vunpack.c.h.b16 %v4468
          %v5075 = vunpack.c.l.b16 %v4469
          %v5076 = vunpack.c.h.b16 %v4469
          %v5077 = vunpack.c.l.b16 %v4470
          %v5078 = vunpack.c.h.b16 %v4470
          %v5079 = vunpack.c.l.b16 %v4471
          %v5080 = vunpack.c.h.b16 %v4471
          %v5081 = vunpack.c.l.b16 %v4472
          %v5082 = vunpack.c.h.b16 %v4472
          %v5083 = vunpack.c.l.b16 %v4473
          %v5084 = vunpack.c.h.b16 %v4473
          %v5085 = vunpack.c.l.b16 %v4474
          %v5086 = vunpack.c.h.b16 %v4474
          %v5087 = vunpack.c.l.b16 %v4475
          %v5088 = vunpack.c.h.b16 %v4475
          %v5089 = vunpack.c.l.b16 %v4476
          %v5090 = vunpack.c.h.b16 %v4476
          %v5091 = vunpack.c.l.b16 %v4477
          %v5092 = vunpack.c.h.b16 %v4477
          %v5093 = vunpack.c.l.b16 %v4478
          %v5094 = vunpack.c.h.b16 %v4478
          %v5095 = vunpack.c.l.b16 %v4479
          %v5096 = vunpack.c.h.b16 %v4479
          %v5097 = vunpack.c.l.b16 %v4480
          %v5098 = vunpack.c.h.b16 %v4480
          %v5099 = vunpack.c.l.b16 %v4481
          %v5100 = vunpack.c.h.b16 %v4481
          %v5101 = vunpack.c.l.b16 %v4482
          %v5102 = vunpack.c.h.b16 %v4482
          %v5103 = vunpack.c.l.b16 %v4483
          %v5104 = vunpack.c.h.b16 %v4483
          %v5105 = vunpack.c.l.b16 %v4484
          %v5106 = vunpack.c.h.b16 %v4484
          %v5107 = vunpack.c.l.b16 %v4485
          %v5108 = vunpack.c.h.b16 %v4485
          %v5109 = vunpack.c.l.b16 %v4486
          %v5110 = vunpack.c.h.b16 %v4486
          %v5111 = vunpack.c.l.b16 %v4487
          %v5112 = vunpack.c.h.b16 %v4487
          %v5113 = vunpack.c.l.b16 %v4488
          %v5114 = vunpack.c.h.b16 %v4488
          %v5115 = vunpack.c.l.b16 %v4489
          %v5116 = vunpack.c.h.b16 %v4489
          %v5117 = vunpack.c.l.b16 %v4490
          %v5118 = vunpack.c.h.b16 %v4490
          %v5119 = vunpack.c.l.b16 %v4491
          %v5120 = vunpack.c.h.b16 %v4491
          %v5121 = vunpack.c.l.b16 %v4492
          %v5122 = vunpack.c.h.b16 %v4492
          %v5123 = vunpack.c.l.b16 %v4493
          %v5124 = vunpack.c.h.b16 %v4493
          %v5125 = vunpack.c.l.b16 %v4494
          %v5126 = vunpack.c.h.b16 %v4494
          %v5127 = vunpack.c.l.b16 %v4495
          %v5128 = vunpack.c.h.b16 %v4495
          %v5129 = vunpack.c.l.b16 %v4496
          %v5130 = vunpack.c.h.b16 %v4496
          %v5131 = vunpack.c.l.b16 %v4497
          %v5132 = vunpack.c.h.b16 %v4497
          %v5133 = vunpack.c.l.b16 %v4498
          %v5134 = vunpack.c.h.b16 %v4498
          %v5135 = vunpack.c.l.b16 %v4499
          %v5136 = vunpack.c.h.b16 %v4499
          %v5137 = vunpack.c.l.b16 %v4500
          %v5138 = vunpack.c.h.b16 %v4500
          %v5139 = vunpack.c.l.b16 %v4501
          %v5140 = vunpack.c.h.b16 %v4501
          %v5141 = vunpack.c.l.b16 %v4502
          %v5142 = vunpack.c.h.b16 %v4502
          %v5143 = vunpack.c.l.b16 %v4503
          %v5144 = vunpack.c.h.b16 %v4503
          %v5145 = vunpack.c.l.b16 %v4504
          %v5146 = vunpack.c.h.b16 %v4504
          %v5147 = vunpack.c.l.b16 %v4505
          %v5148 = vunpack.c.h.b16 %v4505
          %v5149 = vunpack.c.l.b16 %v4506
          %v5150 = vunpack.c.h.b16 %v4506
          %v5151 = vunpack.c.l.b16 %v4507
          %v5152 = vunpack.c.h.b16 %v4507
          %v5153 = vunpack.c.l.b16 %v4508
          %v5154 = vunpack.c.h.b16 %v4508
          %v5155 = vunpack.c.l.b16 %v4509
          %v5156 = vunpack.c.h.b16 %v4509
          %v5157 = vunpack.c.l.b16 %v4510
          %v5158 = vunpack.c.h.b16 %v4510
          %v5159 = vunpack.c.l.b16 %v4511
          %v5160 = vunpack.c.h.b16 %v4511
          %v5161 = vunpack.c.l.b16 %v4512
          %v5162 = vunpack.c.h.b16 %v4512
          %v5163 = vunpack.c.l.b16 %v4513
          %v5164 = vunpack.c.h.b16 %v4513
          %v5165 = vunpack.c.l.b16 %v4514
          %v5166 = vunpack.c.h.b16 %v4514
          %v5167 = vunpack.c.l.b16 %v4515
          %v5168 = vunpack.c.h.b16 %v4515
          %v5169 = vunpack.c.l.b16 %v4516
          %v5170 = vunpack.c.h.b16 %v4516
          %v5171 = vunpack.c.l.b16 %v4517
          %v5172 = vunpack.c.h.b16 %v4517
          %v5173 = vunpack.c.l.b16 %v4518
          %v5174 = vunpack.c.h.b16 %v4518
          %v5175 = vunpack.c.l.b16 %v4519
          %v5176 = vunpack.c.h.b16 %v4519
          %v5177 = vunpack.c.l.b16 %v4520
          %v5178 = vunpack.c.h.b16 %v4520
          %v5179 = vunpack.c.l.b16 %v4521
          %v5180 = vunpack.c.h.b16 %v4521
          %v5181 = vunpack.c.l.b16 %v4522
          %v5182 = vunpack.c.h.b16 %v4522
          %v5183 = vunpack.c.l.b16 %v4523
          %v5184 = vunpack.c.h.b16 %v4523
          %v5185 = vunpack.c.l.b16 %v4524
          %v5186 = vunpack.c.h.b16 %v4524
          %v5187 = vunpack.c.l.b16 %v4525
          %v5188 = vunpack.c.h.b16 %v4525
          %v5189 = vunpack.c.l.b16 %v4526
          %v5190 = vunpack.c.h.b16 %v4526
          %v5191 = vunpack.c.l.b16 %v4527
          %v5192 = vunpack.c.h.b16 %v4527
          %v5193 = vunpack.c.l.b16 %v4528
          %v5194 = vunpack.c.h.b16 %v4528
          %v5195 = vunpack.c.l.b16 %v4529
          %v5196 = vunpack.c.h.b16 %v4529
          %v5197 = vunpack.c.l.b16 %v4530
          %v5198 = vunpack.c.h.b16 %v4530
          %v5199 = vunpack.c.l.b16 %v4531
          %v5200 = vunpack.c.h.b16 %v4531
          %v5201 = vunpack.c.l.b16 %v4532
          %v5202 = vunpack.c.h.b16 %v4532
          %v5203 = vunpack.c.l.b16 %v4533
          %v5204 = vunpack.c.h.b16 %v4533
          %v5205 = vunpack.c.l.b16 %v4534
          %v5206 = vunpack.c.h.b16 %v4534
          %v5207 = vunpack.c.l.b16 %v4535
          %v5208 = vunpack.c.h.b16 %v4535
          %v5209 = vunpack.c.l.b16 %v4536
          %v5210 = vunpack.c.h.b16 %v4536
          %v5211 = vunpack.c.l.b16 %v4537
          %v5212 = vunpack.c.h.b16 %v4537
          %v5213 = vunpack.c.l.b16 %v4538
          %v5214 = vunpack.c.h.b16 %v4538
          %v5215 = vunpack.c.l.b16 %v4539
          %v5216 = vunpack.c.h.b16 %v4539
          %v5217 = vunpack.c.l.b16 %v4540
          %v5218 = vunpack.c.h.b16 %v4540
          %v5219 = vunpack.c.l.b16 %v4541
          %v5220 = vunpack.c.h.b16 %v4541
          %v5221 = vunpack.c.l.b16 %v4542
          %v5222 = vunpack.c.h.b16 %v4542
          %v5223 = vunpack.c.l.b16 %v4543
          %v5224 = vunpack.c.h.b16 %v4543
          %v5225 = vunpack.c.l.b16 %v4544
          %v5226 = vunpack.c.h.b16 %v4544
          %v5227 = vunpack.c.l.b16 %v4545
          %v5228 = vunpack.c.h.b16 %v4545
          %v5229 = vunpack.c.l.b16 %v4546
          %v5230 = vunpack.c.h.b16 %v4546
          %v5231 = vunpack.c.l.b16 %v4547
          %v5232 = vunpack.c.h.b16 %v4547
          %v5233 = vunpack.c.l.b16 %v4548
          %v5234 = vunpack.c.h.b16 %v4548
          %v5235 = vunpack.c.l.b16 %v4549
          %v5236 = vunpack.c.h.b16 %v4549
          %v5237 = vunpack.c.l.b16 %v4550
          %v5238 = vunpack.c.h.b16 %v4550
          %v5239 = vunpack.c.l.b16 %v4551
          %v5240 = vunpack.c.h.b16 %v4551
          %v5241 = vunpack.c.l.b16 %v4552
          %v5242 = vunpack.c.h.b16 %v4552
          %v5243 = vunpack.c.l.b16 %v4553
          %v5244 = vunpack.c.h.b16 %v4553
          %v5245 = vunpack.c.l.b16 %v4554
          %v5246 = vunpack.c.h.b16 %v4554
          %v5247 = vunpack.c.l.b16 %v4555
          %v5248 = vunpack.c.h.b16 %v4555
          %v5249 = vunpack.c.l.b16 %v4556
          %v5250 = vunpack.c.h.b16 %v4556
          %v5251 = vunpack.c.l.b16 %v4557
          %v5252 = vunpack.c.h.b16 %v4557
          %v5253 = vunpack.c.l.b16 %v4558
          %v5254 = vunpack.c.h.b16 %v4558
          %v5255 = vunpack.c.l.b16 %v4559
          %v5256 = vunpack.c.h.b16 %v4559
          %v5257 = vunpack.c.l.b16 %v4560
          %v5258 = vunpack.c.h.b16 %v4560
          %v5259 = vunpack.c.l.b16 %v4561
          %v5260 = vunpack.c.h.b16 %v4561
          %v5261 = vunpack.c.l.b16 %v4562
          %v5262 = vunpack.c.h.b16 %v4562
          %v5263 = vunpack.c.l.b16 %v4563
          %v5264 = vunpack.c.h.b16 %v4563
          %v5265 = vunpack.c.l.b16 %v4564
          %v5266 = vunpack.c.h.b16 %v4564
          %v5267 = vunpack.c.l.b16 %v4565
          %v5268 = vunpack.c.h.b16 %v4565
          %v5269 = vunpack.c.l.b16 %v4566
          %v5270 = vunpack.c.h.b16 %v4566
          %v5271 = vunpack.c.l.b16 %v4567
          %v5272 = vunpack.c.h.b16 %v4567
          %v5273 = vunpack.c.l.b16 %v4568
          %v5274 = vunpack.c.h.b16 %v4568
          %v5275 = vunpack.c.l.b16 %v4569
          %v5276 = vunpack.c.h.b16 %v4569
          %v5277 = vunpack.c.l.b16 %v4570
          %v5278 = vunpack.c.h.b16 %v4570
          %v5279 = vunpack.c.l.b16 %v4571
          %v5280 = vunpack.c.h.b16 %v4571
          %v5281 = vunpack.c.l.b16 %v4572
          %v5282 = vunpack.c.h.b16 %v4572
          %v5283 = vunpack.c.l.b16 %v4573
          %v5284 = vunpack.c.h.b16 %v4573
          %v5285 = vunpack.c.l.b16 %v4574
          %v5286 = vunpack.c.h.b16 %v4574
          %v5287 = vunpack.c.l.b16 %v4575
          %v5288 = vunpack.c.h.b16 %v4575
          %v5289 = vunpack.c.l.b16 %v4576
          %v5290 = vunpack.c.h.b16 %v4576
          %v5291 = vunpack.c.l.b16 %v4577
          %v5292 = vunpack.c.h.b16 %v4577
          %v5293 = vunpack.c.l.b16 %v4578
          %v5294 = vunpack.c.h.b16 %v4578
          %v5295 = vunpack.c.l.b16 %v4579
          %v5296 = vunpack.c.h.b16 %v4579
          %v5297 = vunpack.c.l.b16 %v4580
          %v5298 = vunpack.c.h.b16 %v4580
          %v5299 = vunpack.c.l.b16 %v4581
          %v5300 = vunpack.c.h.b16 %v4581
          %v5301 = vunpack.c.l.b16 %v4582
          %v5302 = vunpack.c.h.b16 %v4582
          %v5303 = vunpack.c.l.b16 %v4583
          %v5304 = vunpack.c.h.b16 %v4583
          %v5305 = vunpack.c.l.b16 %v4584
          %v5306 = vunpack.c.h.b16 %v4584
          %v5307 = vunpack.c.l.b16 %v4585
          %v5308 = vunpack.c.h.b16 %v4585
          %v5309 = vunpack.c.l.b16 %v4586
          %v5310 = vunpack.c.h.b16 %v4586
          %v5311 = vunpack.c.l.b16 %v4587
          %v5312 = vunpack.c.h.b16 %v4587
          %v5313 = vunpack.c.l.b16 %v4588
          %v5314 = vunpack.c.h.b16 %v4588
          %v5315 = vunpack.c.l.b16 %v4589
          %v5316 = vunpack.c.h.b16 %v4589
          %v5317 = vunpack.c.l.b16 %v4590
          %v5318 = vunpack.c.h.b16 %v4590
          %v5319 = vunpack.c.l.b16 %v4591
          %v5320 = vunpack.c.h.b16 %v4591
          %v5321 = vunpack.c.l.b16 %v4592
          %v5322 = vunpack.c.h.b16 %v4592
          %v5323 = vunpack.c.l.b16 %v4593
          %v5324 = vunpack.c.h.b16 %v4593
          %v5325 = vunpack.c.l.b16 %v4594
          %v5326 = vunpack.c.h.b16 %v4594
          %v5327 = vunpack.c.l.b16 %v4595
          %v5328 = vunpack.c.h.b16 %v4595
          %v5329 = vunpack.c.l.b16 %v4596
          %v5330 = vunpack.c.h.b16 %v4596
          %v5331 = vunpack.c.l.b16 %v4597
          %v5332 = vunpack.c.h.b16 %v4597
          %v5333 = vunpack.c.l.b16 %v4598
          %v5334 = vunpack.c.h.b16 %v4598
          %v5335 = vunpack.c.l.b16 %v4599
          %v5336 = vunpack.c.h.b16 %v4599
          %v5337 = vunpack.c.l.b16 %v4600
          %v5338 = vunpack.c.h.b16 %v4600
          %v5339 = vunpack.c.l.b16 %v4601
          %v5340 = vunpack.c.h.b16 %v4601
          %v5341 = vunpack.c.l.b16 %v4602
          %v5342 = vunpack.c.h.b16 %v4602
          %v5343 = vunpack.c.l.b16 %v4603
          %v5344 = vunpack.c.h.b16 %v4603
          %v5345 = vunpack.c.l.b16 %v4604
          %v5346 = vunpack.c.h.b16 %v4604
          %v5347 = vunpack.c.l.b16 %v4605
          %v5348 = vunpack.c.h.b16 %v4605
          %v5349 = vunpack.c.l.b16 %v4606
          %v5350 = vunpack.c.h.b16 %v4606
          %v5351 = vunpack.c.l.b16 %v4607
          %v5352 = vunpack.c.h.b16 %v4607
          %v5353 = vunpack.c.l.b16 %v4608
          %v5354 = vunpack.c.h.b16 %v4608
          %v5355 = vunpack.c.l.b16 %v4609
          %v5356 = vunpack.c.h.b16 %v4609
          %v5357 = vunpack.c.l.b16 %v4610
          %v5358 = vunpack.c.h.b16 %v4610
          %v5359 = vunpack.c.l.b16 %v4611
          %v5360 = vunpack.c.h.b16 %v4611
          %v5361 = vunpack.c.l.b16 %v4612
          %v5362 = vunpack.c.h.b16 %v4612
          %v5363 = vunpack.c.l.b16 %v4613
          %v5364 = vunpack.c.h.b16 %v4613
          %v5365 = vunpack.c.l.b16 %v4614
          %v5366 = vunpack.c.h.b16 %v4614
          %v5367 = vunpack.c.l.b16 %v4615
          %v5368 = vunpack.c.h.b16 %v4615
          %v5369 = vunpack.c.l.b16 %v4616
          %v5370 = vunpack.c.h.b16 %v4616
          %v5371 = vunpack.c.l.b16 %v4617
          %v5372 = vunpack.c.h.b16 %v4617
          %v5373 = vunpack.c.l.b16 %v4618
          %v5374 = vunpack.c.h.b16 %v4618
          %v5375 = vunpack.c.l.b16 %v4619
          %v5376 = vunpack.c.h.b16 %v4619
          %v5377 = vunpack.c.l.b16 %v4620
          %v5378 = vunpack.c.h.b16 %v4620
          %v5379 = vunpack.c.l.b16 %v4621
          %v5380 = vunpack.c.h.b16 %v4621
          %v5381 = vunpack.c.l.b16 %v4622
          %v5382 = vunpack.c.h.b16 %v4622
          %v5383 = vunpack.c.l.b16 %v4623
          %v5384 = vunpack.c.h.b16 %v4623
          %v5385 = vunpack.c.l.b16 %v4624
          %v5386 = vunpack.c.h.b16 %v4624
          %v5387 = vunpack.c.l.b16 %v4625
          %v5388 = vunpack.c.h.b16 %v4625
          %v5389 = vunpack.c.l.b16 %v4626
          %v5390 = vunpack.c.h.b16 %v4626
          %v5391 = vunpack.c.l.b16 %v4627
          %v5392 = vunpack.c.h.b16 %v4627
          %v5393 = vunpack.c.l.b16 %v4628
          %v5394 = vunpack.c.h.b16 %v4628
          %v5395 = vunpack.c.l.b16 %v4629
          %v5396 = vunpack.c.h.b16 %v4629
          %v5397 = vunpack.c.l.b16 %v4630
          %v5398 = vunpack.c.h.b16 %v4630
          %v5399 = vunpack.c.l.b16 %v4631
          %v5400 = vunpack.c.h.b16 %v4631
          %v5401 = vunpack.c.l.b16 %v4632
          %v5402 = vunpack.c.h.b16 %v4632
          %v5403 = vunpack.c.l.b16 %v4633
          %v5404 = vunpack.c.h.b16 %v4633
          %v5405 = vunpack.c.l.b16 %v4634
          %v5406 = vunpack.c.h.b16 %v4634
          %v5407 = vunpack.c.l.b16 %v4635
          %v5408 = vunpack.c.h.b16 %v4635
          %v5409 = vunpack.c.l.b16 %v4636
          %v5410 = vunpack.c.h.b16 %v4636
          %v5411 = vunpack.c.l.b16 %v4637
          %v5412 = vunpack.c.h.b16 %v4637
          %v5413 = vunpack.c.l.b16 %v4638
          %v5414 = vunpack.c.h.b16 %v4638
          %v5415 = vunpack.c.l.b16 %v4639
          %v5416 = vunpack.c.h.b16 %v4639
          %v5417 = vunpack.c.l.b16 %v4640
          %v5418 = vunpack.c.h.b16 %v4640
          %v5419 = vunpack.c.l.b16 %v4641
          %v5420 = vunpack.c.h.b16 %v4641
          %v5421 = vunpack.c.l.b16 %v4642
          %v5422 = vunpack.c.h.b16 %v4642
          %v5423 = vunpack.c.l.b16 %v4643
          %v5424 = vunpack.c.h.b16 %v4643
          %v5425 = vunpack.c.l.b16 %v4644
          %v5426 = vunpack.c.h.b16 %v4644
          %v5427 = vunpack.c.l.b16 %v4645
          %v5428 = vunpack.c.h.b16 %v4645
          %v5429 = vunpack.c.l.b16 %v4646
          %v5430 = vunpack.c.h.b16 %v4646
          %v5431 = vunpack.c.l.b16 %v4647
          %v5432 = vunpack.c.h.b16 %v4647
          %v5433 = vunpack.c.l.b16 %v4648
          %v5434 = vunpack.c.h.b16 %v4648
          %v5435 = vunpack.c.l.b16 %v4649
          %v5436 = vunpack.c.h.b16 %v4649
          %v5437 = vunpack.c.l.b16 %v4650
          %v5438 = vunpack.c.h.b16 %v4650
          %v5439 = vunpack.c.l.b16 %v4651
          %v5440 = vunpack.c.h.b16 %v4651
          %v5441 = vunpack.c.l.b16 %v4652
          %v5442 = vunpack.c.h.b16 %v4652
          %v5443 = vpack.c.b16 %v4935, %v4931
          %v5444 = vpack.c.b16 %v4936, %v4932
          %v5445 = vpack.c.b16 %v4937, %v4933
          %v5446 = vpack.c.b16 %v4938, %v4934
          %v5447 = vpack.c.b16 %v4943, %v4939
          %v5448 = vpack.c.b16 %v4944, %v4940
          %v5449 = vpack.c.b16 %v4945, %v4941
          %v5450 = vpack.c.b16 %v4946, %v4942
          %v5451 = vpack.c.b16 %v4951, %v4947
          %v5452 = vpack.c.b16 %v4952, %v4948
          %v5453 = vpack.c.b16 %v4953, %v4949
          %v5454 = vpack.c.b16 %v4954, %v4950
          %v5455 = vpack.c.b16 %v4959, %v4955
          %v5456 = vpack.c.b16 %v4960, %v4956
          %v5457 = vpack.c.b16 %v4961, %v4957
          %v5458 = vpack.c.b16 %v4962, %v4958
          %v5459 = vpack.c.b16 %v4967, %v4963
          %v5460 = vpack.c.b16 %v4968, %v4964
          %v5461 = vpack.c.b16 %v4969, %v4965
          %v5462 = vpack.c.b16 %v4970, %v4966
          %v5463 = vpack.c.b16 %v4975, %v4971
          %v5464 = vpack.c.b16 %v4976, %v4972
          %v5465 = vpack.c.b16 %v4977, %v4973
          %v5466 = vpack.c.b16 %v4978, %v4974
          %v5467 = vpack.c.b16 %v4983, %v4979
          %v5468 = vpack.c.b16 %v4984, %v4980
          %v5469 = vpack.c.b16 %v4985, %v4981
          %v5470 = vpack.c.b16 %v4986, %v4982
          %v5471 = vpack.c.b16 %v4991, %v4987
          %v5472 = vpack.c.b16 %v4992, %v4988
          %v5473 = vpack.c.b16 %v4993, %v4989
          %v5474 = vpack.c.b16 %v4994, %v4990
          %v5475 = vpack.c.b16 %v4999, %v4995
          %v5476 = vpack.c.b16 %v5000, %v4996
          %v5477 = vpack.c.b16 %v5001, %v4997
          %v5478 = vpack.c.b16 %v5002, %v4998
          %v5479 = vpack.c.b16 %v5007, %v5003
          %v5480 = vpack.c.b16 %v5008, %v5004
          %v5481 = vpack.c.b16 %v5009, %v5005
          %v5482 = vpack.c.b16 %v5010, %v5006
          %v5483 = vpack.c.b16 %v5015, %v5011
          %v5484 = vpack.c.b16 %v5016, %v5012
          %v5485 = vpack.c.b16 %v5017, %v5013
          %v5486 = vpack.c.b16 %v5018, %v5014
          %v5487 = vpack.c.b16 %v5023, %v5019
          %v5488 = vpack.c.b16 %v5024, %v5020
          %v5489 = vpack.c.b16 %v5025, %v5021
          %v5490 = vpack.c.b16 %v5026, %v5022
          %v5491 = vpack.c.b16 %v5031, %v5027
          %v5492 = vpack.c.b16 %v5032, %v5028
          %v5493 = vpack.c.b16 %v5033, %v5029
          %v5494 = vpack.c.b16 %v5034, %v5030
          %v5495 = vpack.c.b16 %v5039, %v5035
          %v5496 = vpack.c.b16 %v5040, %v5036
          %v5497 = vpack.c.b16 %v5041, %v5037
          %v5498 = vpack.c.b16 %v5042, %v5038
          %v5499 = vpack.c.b16 %v5047, %v5043
          %v5500 = vpack.c.b16 %v5048, %v5044
          %v5501 = vpack.c.b16 %v5049, %v5045
          %v5502 = vpack.c.b16 %v5050, %v5046
          %v5503 = vpack.c.b16 %v5055, %v5051
          %v5504 = vpack.c.b16 %v5056, %v5052
          %v5505 = vpack.c.b16 %v5057, %v5053
          %v5506 = vpack.c.b16 %v5058, %v5054
          %v5507 = vpack.c.b16 %v5063, %v5059
          %v5508 = vpack.c.b16 %v5064, %v5060
          %v5509 = vpack.c.b16 %v5065, %v5061
          %v5510 = vpack.c.b16 %v5066, %v5062
          %v5511 = vpack.c.b16 %v5071, %v5067
          %v5512 = vpack.c.b16 %v5072, %v5068
          %v5513 = vpack.c.b16 %v5073, %v5069
          %v5514 = vpack.c.b16 %v5074, %v5070
          %v5515 = vpack.c.b16 %v5079, %v5075
          %v5516 = vpack.c.b16 %v5080, %v5076
          %v5517 = vpack.c.b16 %v5081, %v5077
          %v5518 = vpack.c.b16 %v5082, %v5078
          %v5519 = vpack.c.b16 %v5087, %v5083
          %v5520 = vpack.c.b16 %v5088, %v5084
          %v5521 = vpack.c.b16 %v5089, %v5085
          %v5522 = vpack.c.b16 %v5090, %v5086
          %v5523 = vpack.c.b16 %v5095, %v5091
          %v5524 = vpack.c.b16 %v5096, %v5092
          %v5525 = vpack.c.b16 %v5097, %v5093
          %v5526 = vpack.c.b16 %v5098, %v5094
          %v5527 = vpack.c.b16 %v5103, %v5099
          %v5528 = vpack.c.b16 %v5104, %v5100
          %v5529 = vpack.c.b16 %v5105, %v5101
          %v5530 = vpack.c.b16 %v5106, %v5102
          %v5531 = vpack.c.b16 %v5111, %v5107
          %v5532 = vpack.c.b16 %v5112, %v5108
          %v5533 = vpack.c.b16 %v5113, %v5109
          %v5534 = vpack.c.b16 %v5114, %v5110
          %v5535 = vpack.c.b16 %v5119, %v5115
          %v5536 = vpack.c.b16 %v5120, %v5116
          %v5537 = vpack.c.b16 %v5121, %v5117
          %v5538 = vpack.c.b16 %v5122, %v5118
          %v5539 = vpack.c.b16 %v5127, %v5123
          %v5540 = vpack.c.b16 %v5128, %v5124
          %v5541 = vpack.c.b16 %v5129, %v5125
          %v5542 = vpack.c.b16 %v5130, %v5126
          %v5543 = vpack.c.b16 %v5135, %v5131
          %v5544 = vpack.c.b16 %v5136, %v5132
          %v5545 = vpack.c.b16 %v5137, %v5133
          %v5546 = vpack.c.b16 %v5138, %v5134
          %v5547 = vpack.c.b16 %v5143, %v5139
          %v5548 = vpack.c.b16 %v5144, %v5140
          %v5549 = vpack.c.b16 %v5145, %v5141
          %v5550 = vpack.c.b16 %v5146, %v5142
          %v5551 = vpack.c.b16 %v5151, %v5147
          %v5552 = vpack.c.b16 %v5152, %v5148
          %v5553 = vpack.c.b16 %v5153, %v5149
          %v5554 = vpack.c.b16 %v5154, %v5150
          %v5555 = vpack.c.b16 %v5159, %v5155
          %v5556 = vpack.c.b16 %v5160, %v5156
          %v5557 = vpack.c.b16 %v5161, %v5157
          %v5558 = vpack.c.b16 %v5162, %v5158
          %v5559 = vpack.c.b16 %v5167, %v5163
          %v5560 = vpack.c.b16 %v5168, %v5164
          %v5561 = vpack.c.b16 %v5169, %v5165
          %v5562 = vpack.c.b16 %v5170, %v5166
          %v5563 = vpack.c.b16 %v5175, %v5171
          %v5564 = vpack.c.b16 %v5176, %v5172
          %v5565 = vpack.c.b16 %v5177, %v5173
          %v5566 = vpack.c.b16 %v5178, %v5174
          %v5567 = vpack.c.b16 %v5183, %v5179
          %v5568 = vpack.c.b16 %v5184, %v5180
          %v5569 = vpack.c.b16 %v5185, %v5181
          %v5570 = vpack.c.b16 %v5186, %v5182
          %v5571 = vpack.c.b16 %v5191, %v5187
          %v5572 = vpack.c.b16 %v5192, %v5188
          %v5573 = vpack.c.b16 %v5193, %v5189
          %v5574 = vpack.c.b16 %v5194, %v5190
          %v5575 = vpack.c.b16 %v5199, %v5195
          %v5576 = vpack.c.b16 %v5200, %v5196
          %v5577 = vpack.c.b16 %v5201, %v5197
          %v5578 = vpack.c.b16 %v5202, %v5198
          %v5579 = vpack.c.b16 %v5207, %v5203
          %v5580 = vpack.c.b16 %v5208, %v5204
          %v5581 = vpack.c.b16 %v5209, %v5205
          %v5582 = vpack.c.b16 %v5210, %v5206
          %v5583 = vpack.c.b16 %v5215, %v5211
          %v5584 = vpack.c.b16 %v5216, %v5212
          %v5585 = vpack.c.b16 %v5217, %v5213
          %v5586 = vpack.c.b16 %v5218, %v5214
          %v5587 = vpack.c.b16 %v5223, %v5219
          %v5588 = vpack.c.b16 %v5224, %v5220
          %v5589 = vpack.c.b16 %v5225, %v5221
          %v5590 = vpack.c.b16 %v5226, %v5222
          %v5591 = vpack.c.b16 %v5231, %v5227
          %v5592 = vpack.c.b16 %v5232, %v5228
          %v5593 = vpack.c.b16 %v5233, %v5229
          %v5594 = vpack.c.b16 %v5234, %v5230
          %v5595 = vpack.c.b16 %v5239, %v5235
          %v5596 = vpack.c.b16 %v5240, %v5236
          %v5597 = vpack.c.b16 %v5241, %v5237
          %v5598 = vpack.c.b16 %v5242, %v5238
          %v5599 = vpack.c.b16 %v5247, %v5243
          %v5600 = vpack.c.b16 %v5248, %v5244
          %v5601 = vpack.c.b16 %v5249, %v5245
          %v5602 = vpack.c.b16 %v5250, %v5246
          %v5603 = vpack.c.b16 %v5255, %v5251
          %v5604 = vpack.c.b16 %v5256, %v5252
          %v5605 = vpack.c.b16 %v5257, %v5253
          %v5606 = vpack.c.b16 %v5258, %v5254
          %v5607 = vpack.c.b16 %v5263, %v5259
          %v5608 = vpack.c.b16 %v5264, %v5260
          %v5609 = vpack.c.b16 %v5265, %v5261
          %v5610 = vpack.c.b16 %v5266, %v5262
          %v5611 = vpack.c.b16 %v5271, %v5267
          %v5612 = vpack.c.b16 %v5272, %v5268
          %v5613 = vpack.c.b16 %v5273, %v5269
          %v5614 = vpack.c.b16 %v5274, %v5270
          %v5615 = vpack.c.b16 %v5279, %v5275
          %v5616 = vpack.c.b16 %v5280, %v5276
          %v5617 = vpack.c.b16 %v5281, %v5277
          %v5618 = vpack.c.b16 %v5282, %v5278
          %v5619 = vpack.c.b16 %v5287, %v5283
          %v5620 = vpack.c.b16 %v5288, %v5284
          %v5621 = vpack.c.b16 %v5289, %v5285
          %v5622 = vpack.c.b16 %v5290, %v5286
          %v5623 = vpack.c.b16 %v5295, %v5291
          %v5624 = vpack.c.b16 %v5296, %v5292
          %v5625 = vpack.c.b16 %v5297, %v5293
          %v5626 = vpack.c.b16 %v5298, %v5294
          %v5627 = vpack.c.b16 %v5303, %v5299
          %v5628 = vpack.c.b16 %v5304, %v5300
          %v5629 = vpack.c.b16 %v5305, %v5301
          %v5630 = vpack.c.b16 %v5306, %v5302
          %v5631 = vpack.c.b16 %v5311, %v5307
          %v5632 = vpack.c.b16 %v5312, %v5308
          %v5633 = vpack.c.b16 %v5313, %v5309
          %v5634 = vpack.c.b16 %v5314, %v5310
          %v5635 = vpack.c.b16 %v5319, %v5315
          %v5636 = vpack.c.b16 %v5320, %v5316
          %v5637 = vpack.c.b16 %v5321, %v5317
          %v5638 = vpack.c.b16 %v5322, %v5318
          %v5639 = vpack.c.b16 %v5327, %v5323
          %v5640 = vpack.c.b16 %v5328, %v5324
          %v5641 = vpack.c.b16 %v5329, %v5325
          %v5642 = vpack.c.b16 %v5330, %v5326
          %v5643 = vpack.c.b16 %v5335, %v5331
          %v5644 = vpack.c.b16 %v5336, %v5332
          %v5645 = vpack.c.b16 %v5337, %v5333
          %v5646 = vpack.c.b16 %v5338, %v5334
          %v5647 = vpack.c.b16 %v5343, %v5339
          %v5648 = vpack.c.b16 %v5344, %v5340
          %v5649 = vpack.c.b16 %v5345, %v5341
          %v5650 = vpack.c.b16 %v5346, %v5342
          %v5651 = vpack.c.b16 %v5351, %v5347
          %v5652 = vpack.c.b16 %v5352, %v5348
          %v5653 = vpack.c.b16 %v5353, %v5349
          %v5654 = vpack.c.b16 %v5354, %v5350
          %v5655 = vpack.c.b16 %v5359, %v5355
          %v5656 = vpack.c.b16 %v5360, %v5356
          %v5657 = vpack.c.b16 %v5361, %v5357
          %v5658 = vpack.c.b16 %v5362, %v5358
          %v5659 = vpack.c.b16 %v5367, %v5363
          %v5660 = vpack.c.b16 %v5368, %v5364
          %v5661 = vpack.c.b16 %v5369, %v5365
          %v5662 = vpack.c.b16 %v5370, %v5366
          %v5663 = vpack.c.b16 %v5375, %v5371
          %v5664 = vpack.c.b16 %v5376, %v5372
          %v5665 = vpack.c.b16 %v5377, %v5373
          %v5666 = vpack.c.b16 %v5378, %v5374
          %v5667 = vpack.c.b16 %v5383, %v5379
          %v5668 = vpack.c.b16 %v5384, %v5380
          %v5669 = vpack.c.b16 %v5385, %v5381
          %v5670 = vpack.c.b16 %v5386, %v5382
          %v5671 = vpack.c.b16 %v5391, %v5387
          %v5672 = vpack.c.b16 %v5392, %v5388
          %v5673 = vpack.c.b16 %v5393, %v5389
          %v5674 = vpack.c.b16 %v5394, %v5390
          %v5675 = vpack.c.b16 %v5399, %v5395
          %v5676 = vpack.c.b16 %v5400, %v5396
          %v5677 = vpack.c.b16 %v5401, %v5397
          %v5678 = vpack.c.b16 %v5402, %v5398
          %v5679 = vpack.c.b16 %v5407, %v5403
          %v5680 = vpack.c.b16 %v5408, %v5404
          %v5681 = vpack.c.b16 %v5409, %v5405
          %v5682 = vpack.c.b16 %v5410, %v5406
          %v5683 = vpack.c.b16 %v5415, %v5411
          %v5684 = vpack.c.b16 %v5416, %v5412
          %v5685 = vpack.c.b16 %v5417, %v5413
          %v5686 = vpack.c.b16 %v5418, %v5414
          %v5687 = vpack.c.b16 %v5423, %v5419
          %v5688 = vpack.c.b16 %v5424, %v5420
          %v5689 = vpack.c.b16 %v5425, %v5421
          %v5690 = vpack.c.b16 %v5426, %v5422
          %v5691 = vpack.c.b16 %v5431, %v5427
          %v5692 = vpack.c.b16 %v5432, %v5428
          %v5693 = vpack.c.b16 %v5433, %v5429
          %v5694 = vpack.c.b16 %v5434, %v5430
          %v5695 = vpack.c.b16 %v5439, %v5435
          %v5696 = vpack.c.b16 %v5440, %v5436
          %v5697 = vpack.c.b16 %v5441, %v5437
          %v5698 = vpack.c.b16 %v5442, %v5438
          %5955 = vmatprep.subr.bf16.mxu0 %v5472
          %5956 = vmatpush1.bf16.msra.mxu0 %v5471
          %5957 = vmatprep.subr.bf16.mxu0 %v5468
          %5958 = vmatpush1.bf16.msra.mxu0 %v5467
          %5959 = vmatprep.subr.bf16.mxu0 %v5464
          %5960 = vmatpush1.bf16.msra.mxu0 %v5463
          %5961 = vmatprep.subr.bf16.mxu0 %v5460
          %5962 = vmatpush1.bf16.msra.mxu0 %v5459
          %5963 = vmatprep.subr.bf16.mxu0 %v5456
          %5964 = vmatpush1.bf16.msra.mxu0 %v5455
          %5965 = vmatprep.subr.bf16.mxu0 %v5452
          %5966 = vmatpush1.bf16.msra.mxu0 %v5451
          %5967 = vmatprep.subr.bf16.mxu0 %v5448
          %5968 = vmatpush1.bf16.msra.mxu0 %v5447
          %5969 = vmatprep.subr.bf16.mxu0 %v5444
          %5970 = vmatpush1.bf16.msra.mxu0 %v5443
          %5971 = vmatprep.subr.bf16.mxu0 %v5504
          %5972 = vmatpush2.bf16.msra.mxu0 %v5503
          %5973 = vmatprep.subr.bf16.mxu0 %v5500
          %5974 = vmatpush2.bf16.msra.mxu0 %v5499
          %5975 = vmatprep.subr.bf16.mxu0 %v5496
          %5976 = vmatpush2.bf16.msra.mxu0 %v5495
          %5977 = vmatprep.subr.bf16.mxu0 %v5492
          %5978 = vmatpush2.bf16.msra.mxu0 %v5491
          %5979 = vmatprep.subr.bf16.mxu0 %v5488
          %5980 = vmatpush2.bf16.msra.mxu0 %v5487
          %5981 = vmatprep.subr.bf16.mxu0 %v5484
          %5982 = vmatpush2.bf16.msra.mxu0 %v5483
          %5983 = vmatprep.subr.bf16.mxu0 %v5480
          %5984 = vmatpush2.bf16.msra.mxu0 %v5479
          %5985 = vmatprep.subr.bf16.mxu0 %v5476
          %5986 = vmatpush2.bf16.msra.mxu0 %v5475
          %5987 = vmatprep.mubr.bf16.mxu0 %v4390
          %5988 = vmatmul.mubr.bf16.gmra.mxu0 %v4389
          %v5989 = vpop.f32.mrf.mxu0
          %v5990 = vadd.f32 %v4658, %v5989
          %v5991 = vpop.f32.mrf.mxu0
          %v5992 = vadd.f32 %v4662, %v5991
          %v5993 = vpop.f32.mrf.mxu0
          %v5994 = vpop.f32.mrf.mxu0
          %5995 = vdwg.mxu0
          %5996 = vmatprep.subr.bf16.mxu0 %v5536
          %5997 = vmatpush1.bf16.msra.mxu0 %v5535
          %5998 = vmatprep.subr.bf16.mxu0 %v5532
          %5999 = vmatpush1.bf16.msra.mxu0 %v5531
          %6000 = vmatprep.subr.bf16.mxu0 %v5528
          %6001 = vmatpush1.bf16.msra.mxu0 %v5527
          %6002 = vmatprep.subr.bf16.mxu0 %v5524
          %6003 = vmatpush1.bf16.msra.mxu0 %v5523
          %6004 = vmatprep.subr.bf16.mxu0 %v5520
          %6005 = vmatpush1.bf16.msra.mxu0 %v5519
          %6006 = vmatprep.subr.bf16.mxu0 %v5516
          %6007 = vmatpush1.bf16.msra.mxu0 %v5515
          %6008 = vmatprep.subr.bf16.mxu0 %v5512
          %6009 = vmatpush1.bf16.msra.mxu0 %v5511
          %6010 = vmatprep.subr.bf16.mxu0 %v5508
          %6011 = vmatpush1.bf16.msra.mxu0 %v5507
          %6012 = vmatprep.subr.bf16.mxu0 %v5568
          %6013 = vmatpush2.bf16.msra.mxu0 %v5567
          %6014 = vmatprep.subr.bf16.mxu0 %v5564
          %6015 = vmatpush2.bf16.msra.mxu0 %v5563
          %6016 = vmatprep.subr.bf16.mxu0 %v5560
          %6017 = vmatpush2.bf16.msra.mxu0 %v5559
          %6018 = vmatprep.subr.bf16.mxu0 %v5556
          %6019 = vmatpush2.bf16.msra.mxu0 %v5555
          %6020 = vmatprep.subr.bf16.mxu0 %v5552
          %6021 = vmatpush2.bf16.msra.mxu0 %v5551
          %6022 = vmatprep.subr.bf16.mxu0 %v5548
          %6023 = vmatpush2.bf16.msra.mxu0 %v5547
          %6024 = vmatprep.subr.bf16.mxu0 %v5544
          %6025 = vmatpush2.bf16.msra.mxu0 %v5543
          %6026 = vmatprep.subr.bf16.mxu0 %v5540
          %6027 = vmatpush2.bf16.msra.mxu0 %v5539
          %6028 = vmatprep.mubr.bf16.mxu0 %v4392
          %6029 = vmatmul.mubr.bf16.gmra.mxu0 %v4391
          %v6030 = vpop.f32.mrf.mxu0
          %v6031 = vadd.f32 %v5990, %v6030
          %v6032 = vpop.f32.mrf.mxu0
          %v6033 = vadd.f32 %v5992, %v6032
          %v6034 = vpop.f32.mrf.mxu0
          %v6035 = vpop.f32.mrf.mxu0
          %6036 = vdwg.mxu0
          %6037 = vmatprep.subr.bf16.mxu0 %v5600
          %6038 = vmatpush1.bf16.msra.mxu0 %v5599
          %6039 = vmatprep.subr.bf16.mxu0 %v5596
          %6040 = vmatpush1.bf16.msra.mxu0 %v5595
          %6041 = vmatprep.subr.bf16.mxu0 %v5592
          %6042 = vmatpush1.bf16.msra.mxu0 %v5591
          %6043 = vmatprep.subr.bf16.mxu0 %v5588
          %6044 = vmatpush1.bf16.msra.mxu0 %v5587
          %6045 = vmatprep.subr.bf16.mxu0 %v5584
          %6046 = vmatpush1.bf16.msra.mxu0 %v5583
          %6047 = vmatprep.subr.bf16.mxu0 %v5580
          %6048 = vmatpush1.bf16.msra.mxu0 %v5579
          %6049 = vmatprep.subr.bf16.mxu0 %v5576
          %6050 = vmatpush1.bf16.msra.mxu0 %v5575
          %6051 = vmatprep.subr.bf16.mxu0 %v5572
          %6052 = vmatpush1.bf16.msra.mxu0 %v5571
          %6053 = vmatprep.subr.bf16.mxu0 %v5632
          %6054 = vmatpush2.bf16.msra.mxu0 %v5631
          %6055 = vmatprep.subr.bf16.mxu0 %v5628
          %6056 = vmatpush2.bf16.msra.mxu0 %v5627
          %6057 = vmatprep.subr.bf16.mxu0 %v5624
          %6058 = vmatpush2.bf16.msra.mxu0 %v5623
          %6059 = vmatprep.subr.bf16.mxu0 %v5620
          %6060 = vmatpush2.bf16.msra.mxu0 %v5619
          %6061 = vmatprep.subr.bf16.mxu0 %v5616
          %6062 = vmatpush2.bf16.msra.mxu0 %v5615
          %6063 = vmatprep.subr.bf16.mxu0 %v5612
          %6064 = vmatpush2.bf16.msra.mxu0 %v5611
          %6065 = vmatprep.subr.bf16.mxu0 %v5608
          %6066 = vmatpush2.bf16.msra.mxu0 %v5607
          %6067 = vmatprep.subr.bf16.mxu0 %v5604
          %6068 = vmatpush2.bf16.msra.mxu0 %v5603
          %6069 = vmatprep.mubr.bf16.mxu0 %v4394
          %6070 = vmatmul.mubr.bf16.gmra.mxu0 %v4393
          %v6071 = vpop.f32.mrf.mxu0
          %v6072 = vadd.f32 %v6031, %v6071
          %v6073 = vpop.f32.mrf.mxu0
          %v6074 = vadd.f32 %v6033, %v6073
          %v6075 = vpop.f32.mrf.mxu0
          %v6076 = vpop.f32.mrf.mxu0
          %6077 = vdwg.mxu0
          %6078 = vmatprep.subr.bf16.mxu0 %v5664
          %6079 = vmatpush1.bf16.msra.mxu0 %v5663
          %6080 = vmatprep.subr.bf16.mxu0 %v5660
          %6081 = vmatpush1.bf16.msra.mxu0 %v5659
          %6082 = vmatprep.subr.bf16.mxu0 %v5656
          %6083 = vmatpush1.bf16.msra.mxu0 %v5655
          %6084 = vmatprep.subr.bf16.mxu0 %v5652
          %6085 = vmatpush1.bf16.msra.mxu0 %v5651
          %6086 = vmatprep.subr.bf16.mxu0 %v5648
          %6087 = vmatpush1.bf16.msra.mxu0 %v5647
          %6088 = vmatprep.subr.bf16.mxu0 %v5644
          %6089 = vmatpush1.bf16.msra.mxu0 %v5643
          %6090 = vmatprep.subr.bf16.mxu0 %v5640
          %6091 = vmatpush1.bf16.msra.mxu0 %v5639
          %6092 = vmatprep.subr.bf16.mxu0 %v5636
          %6093 = vmatpush1.bf16.msra.mxu0 %v5635
          %6094 = vmatprep.subr.bf16.mxu0 %v5696
          %6095 = vmatpush2.bf16.msra.mxu0 %v5695
          %6096 = vmatprep.subr.bf16.mxu0 %v5692
          %6097 = vmatpush2.bf16.msra.mxu0 %v5691
          %6098 = vmatprep.subr.bf16.mxu0 %v5688
          %6099 = vmatpush2.bf16.msra.mxu0 %v5687
          %6100 = vmatprep.subr.bf16.mxu0 %v5684
          %6101 = vmatpush2.bf16.msra.mxu0 %v5683
          %6102 = vmatprep.subr.bf16.mxu0 %v5680
          %6103 = vmatpush2.bf16.msra.mxu0 %v5679
          %6104 = vmatprep.subr.bf16.mxu0 %v5676
          %6105 = vmatpush2.bf16.msra.mxu0 %v5675
          %6106 = vmatprep.subr.bf16.mxu0 %v5672
          %6107 = vmatpush2.bf16.msra.mxu0 %v5671
          %6108 = vmatprep.subr.bf16.mxu0 %v5668
          %6109 = vmatpush2.bf16.msra.mxu0 %v5667
          %6110 = vmatprep.mubr.bf16.mxu0 %v4396
          %6111 = vmatmul.mubr.bf16.gmra.mxu0 %v4395
          %v6112 = vpop.f32.mrf.mxu0
          %v6113 = vadd.f32 %v6072, %v6112
          %v6114 = vpop.f32.mrf.mxu0
          %v6115 = vadd.f32 %v6074, %v6114
          %v6116 = vpop.f32.mrf.mxu0
          %v6117 = vpop.f32.mrf.mxu0
          %6118 = vdwg.mxu0
          %6119 = vmatprep.subr.bf16.mxu0 %v5474
          %6120 = vmatpush1.bf16.msra.mxu0 %v5473
          %6121 = vmatprep.subr.bf16.mxu0 %v5470
          %6122 = vmatpush1.bf16.msra.mxu0 %v5469
          %6123 = vmatprep.subr.bf16.mxu0 %v5466
          %6124 = vmatpush1.bf16.msra.mxu0 %v5465
          %6125 = vmatprep.subr.bf16.mxu0 %v5462
          %6126 = vmatpush1.bf16.msra.mxu0 %v5461
          %6127 = vmatprep.subr.bf16.mxu0 %v5458
          %6128 = vmatpush1.bf16.msra.mxu0 %v5457
          %6129 = vmatprep.subr.bf16.mxu0 %v5454
          %6130 = vmatpush1.bf16.msra.mxu0 %v5453
          %6131 = vmatprep.subr.bf16.mxu0 %v5450
          %6132 = vmatpush1.bf16.msra.mxu0 %v5449
          %6133 = vmatprep.subr.bf16.mxu0 %v5446
          %6134 = vmatpush1.bf16.msra.mxu0 %v5445
          %6135 = vmatprep.subr.bf16.mxu0 %v5506
          %6136 = vmatpush2.bf16.msra.mxu0 %v5505
          %6137 = vmatprep.subr.bf16.mxu0 %v5502
          %6138 = vmatpush2.bf16.msra.mxu0 %v5501
          %6139 = vmatprep.subr.bf16.mxu0 %v5498
          %6140 = vmatpush2.bf16.msra.mxu0 %v5497
          %6141 = vmatprep.subr.bf16.mxu0 %v5494
          %6142 = vmatpush2.bf16.msra.mxu0 %v5493
          %6143 = vmatprep.subr.bf16.mxu0 %v5490
          %6144 = vmatpush2.bf16.msra.mxu0 %v5489
          %6145 = vmatprep.subr.bf16.mxu0 %v5486
          %6146 = vmatpush2.bf16.msra.mxu0 %v5485
          %6147 = vmatprep.subr.bf16.mxu0 %v5482
          %6148 = vmatpush2.bf16.msra.mxu0 %v5481
          %6149 = vmatprep.subr.bf16.mxu0 %v5478
          %6150 = vmatpush2.bf16.msra.mxu0 %v5477
          %6151 = vmatprep.mubr.bf16.mxu0 %v4390
          %6152 = vmatmul.mubr.bf16.gmra.mxu0 %v4389
          %v6153 = vpop.f32.mrf.mxu0
          %v6154 = vadd.f32 %v4666, %v6153
          %v6155 = vpop.f32.mrf.mxu0
          %v6156 = vadd.f32 %v4670, %v6155
          %v6157 = vpop.f32.mrf.mxu0
          %v6158 = vpop.f32.mrf.mxu0
          %6159 = vdwg.mxu0
          %6160 = vmatprep.subr.bf16.mxu0 %v5538
          %6161 = vmatpush1.bf16.msra.mxu0 %v5537
          %6162 = vmatprep.subr.bf16.mxu0 %v5534
          %6163 = vmatpush1.bf16.msra.mxu0 %v5533
          %6164 = vmatprep.subr.bf16.mxu0 %v5530
          %6165 = vmatpush1.bf16.msra.mxu0 %v5529
          %6166 = vmatprep.subr.bf16.mxu0 %v5526
          %6167 = vmatpush1.bf16.msra.mxu0 %v5525
          %6168 = vmatprep.subr.bf16.mxu0 %v5522
          %6169 = vmatpush1.bf16.msra.mxu0 %v5521
          %6170 = vmatprep.subr.bf16.mxu0 %v5518
          %6171 = vmatpush1.bf16.msra.mxu0 %v5517
          %6172 = vmatprep.subr.bf16.mxu0 %v5514
          %6173 = vmatpush1.bf16.msra.mxu0 %v5513
          %6174 = vmatprep.subr.bf16.mxu0 %v5510
          %6175 = vmatpush1.bf16.msra.mxu0 %v5509
          %6176 = vmatprep.subr.bf16.mxu0 %v5570
          %6177 = vmatpush2.bf16.msra.mxu0 %v5569
          %6178 = vmatprep.subr.bf16.mxu0 %v5566
          %6179 = vmatpush2.bf16.msra.mxu0 %v5565
          %6180 = vmatprep.subr.bf16.mxu0 %v5562
          %6181 = vmatpush2.bf16.msra.mxu0 %v5561
          %6182 = vmatprep.subr.bf16.mxu0 %v5558
          %6183 = vmatpush2.bf16.msra.mxu0 %v5557
          %6184 = vmatprep.subr.bf16.mxu0 %v5554
          %6185 = vmatpush2.bf16.msra.mxu0 %v5553
          %6186 = vmatprep.subr.bf16.mxu0 %v5550
          %6187 = vmatpush2.bf16.msra.mxu0 %v5549
          %6188 = vmatprep.subr.bf16.mxu0 %v5546
          %6189 = vmatpush2.bf16.msra.mxu0 %v5545
          %6190 = vmatprep.subr.bf16.mxu0 %v5542
          %6191 = vmatpush2.bf16.msra.mxu0 %v5541
          %6192 = vmatprep.mubr.bf16.mxu0 %v4392
          %6193 = vmatmul.mubr.bf16.gmra.mxu0 %v4391
          %v6194 = vpop.f32.mrf.mxu0
          %v6195 = vadd.f32 %v6154, %v6194
          %v6196 = vpop.f32.mrf.mxu0
          %v6197 = vadd.f32 %v6156, %v6196
          %v6198 = vpop.f32.mrf.mxu0
          %v6199 = vpop.f32.mrf.mxu0
          %6200 = vdwg.mxu0
          %6201 = vmatprep.subr.bf16.mxu0 %v5602
          %6202 = vmatpush1.bf16.msra.mxu0 %v5601
          %6203 = vmatprep.subr.bf16.mxu0 %v5598
          %6204 = vmatpush1.bf16.msra.mxu0 %v5597
          %6205 = vmatprep.subr.bf16.mxu0 %v5594
          %6206 = vmatpush1.bf16.msra.mxu0 %v5593
          %6207 = vmatprep.subr.bf16.mxu0 %v5590
          %6208 = vmatpush1.bf16.msra.mxu0 %v5589
          %6209 = vmatprep.subr.bf16.mxu0 %v5586
          %6210 = vmatpush1.bf16.msra.mxu0 %v5585
          %6211 = vmatprep.subr.bf16.mxu0 %v5582
          %6212 = vmatpush1.bf16.msra.mxu0 %v5581
          %6213 = vmatprep.subr.bf16.mxu0 %v5578
          %6214 = vmatpush1.bf16.msra.mxu0 %v5577
          %6215 = vmatprep.subr.bf16.mxu0 %v5574
          %6216 = vmatpush1.bf16.msra.mxu0 %v5573
          %6217 = vmatprep.subr.bf16.mxu0 %v5634
          %6218 = vmatpush2.bf16.msra.mxu0 %v5633
          %6219 = vmatprep.subr.bf16.mxu0 %v5630
          %6220 = vmatpush2.bf16.msra.mxu0 %v5629
          %6221 = vmatprep.subr.bf16.mxu0 %v5626
          %6222 = vmatpush2.bf16.msra.mxu0 %v5625
          %6223 = vmatprep.subr.bf16.mxu0 %v5622
          %6224 = vmatpush2.bf16.msra.mxu0 %v5621
          %6225 = vmatprep.subr.bf16.mxu0 %v5618
          %6226 = vmatpush2.bf16.msra.mxu0 %v5617
          %6227 = vmatprep.subr.bf16.mxu0 %v5614
          %6228 = vmatpush2.bf16.msra.mxu0 %v5613
          %6229 = vmatprep.subr.bf16.mxu0 %v5610
          %6230 = vmatpush2.bf16.msra.mxu0 %v5609
          %6231 = vmatprep.subr.bf16.mxu0 %v5606
          %6232 = vmatpush2.bf16.msra.mxu0 %v5605
          %6233 = vmatprep.mubr.bf16.mxu0 %v4394
          %6234 = vmatmul.mubr.bf16.gmra.mxu0 %v4393
          %v6235 = vpop.f32.mrf.mxu0
          %v6236 = vadd.f32 %v6195, %v6235
          %v6237 = vpop.f32.mrf.mxu0
          %v6238 = vadd.f32 %v6197, %v6237
          %v6239 = vpop.f32.mrf.mxu0
          %v6240 = vpop.f32.mrf.mxu0
          %6241 = vdwg.mxu0
          %6242 = vmatprep.subr.bf16.mxu0 %v5666
          %6243 = vmatpush1.bf16.msra.mxu0 %v5665
          %6244 = vmatprep.subr.bf16.mxu0 %v5662
          %6245 = vmatpush1.bf16.msra.mxu0 %v5661
          %6246 = vmatprep.subr.bf16.mxu0 %v5658
          %6247 = vmatpush1.bf16.msra.mxu0 %v5657
          %6248 = vmatprep.subr.bf16.mxu0 %v5654
          %6249 = vmatpush1.bf16.msra.mxu0 %v5653
          %6250 = vmatprep.subr.bf16.mxu0 %v5650
          %6251 = vmatpush1.bf16.msra.mxu0 %v5649
          %6252 = vmatprep.subr.bf16.mxu0 %v5646
          %6253 = vmatpush1.bf16.msra.mxu0 %v5645
          %6254 = vmatprep.subr.bf16.mxu0 %v5642
          %6255 = vmatpush1.bf16.msra.mxu0 %v5641
          %6256 = vmatprep.subr.bf16.mxu0 %v5638
          %6257 = vmatpush1.bf16.msra.mxu0 %v5637
          %6258 = vmatprep.subr.bf16.mxu0 %v5698
          %6259 = vmatpush2.bf16.msra.mxu0 %v5697
          %6260 = vmatprep.subr.bf16.mxu0 %v5694
          %6261 = vmatpush2.bf16.msra.mxu0 %v5693
          %6262 = vmatprep.subr.bf16.mxu0 %v5690
          %6263 = vmatpush2.bf16.msra.mxu0 %v5689
          %6264 = vmatprep.subr.bf16.mxu0 %v5686
          %6265 = vmatpush2.bf16.msra.mxu0 %v5685
          %6266 = vmatprep.subr.bf16.mxu0 %v5682
          %6267 = vmatpush2.bf16.msra.mxu0 %v5681
          %6268 = vmatprep.subr.bf16.mxu0 %v5678
          %6269 = vmatpush2.bf16.msra.mxu0 %v5677
          %6270 = vmatprep.subr.bf16.mxu0 %v5674
          %6271 = vmatpush2.bf16.msra.mxu0 %v5673
          %6272 = vmatprep.subr.bf16.mxu0 %v5670
          %6273 = vmatpush2.bf16.msra.mxu0 %v5669
          %6274 = vmatprep.mubr.bf16.mxu0 %v4396
          %6275 = vmatmul.mubr.bf16.gmra.mxu0 %v4395
          %v6276 = vpop.f32.mrf.mxu0
          %v6277 = vadd.f32 %v6236, %v6276
          %v6278 = vpop.f32.mrf.mxu0
          %v6279 = vadd.f32 %v6238, %v6278
          %v6280 = vpop.f32.mrf.mxu0
          %v6281 = vpop.f32.mrf.mxu0
          %6282 = vdwg.mxu0
          %v6283 = vmax.f32 %v6113, 0.0
          %v6284 = vmax.f32 %v6115, 0.0
          %v6285 = vmax.f32 %v6277, 0.0
          %v6286 = vmax.f32 %v6279, 0.0
          %v6287 = vpack.c.bf16 %v6283, %v6283
          %v6288 = vpack.c.bf16 %v6284, %v6284
          %v6289 = vpack.c.bf16 %v6285, %v6285
          %v6290 = vpack.c.bf16 %v6286, %v6286
          %v6291 = vld [vmem:[#allocation6] sm:$0xff]
          %v6292 = vld [vmem:[#allocation6 + $0x8] sm:$0xff]
          %v6293 = vld [vmem:[#allocation6 + $0x10] sm:$0xff]
          %v6294 = vld [vmem:[#allocation6 + $0x18] sm:$0xff]
          %v6295 = vld [vmem:[#allocation6 + $0x20] sm:$0xff]
          %v6296 = vld [vmem:[#allocation6 + $0x28] sm:$0xff]
          %v6297 = vld [vmem:[#allocation6 + $0x30] sm:$0xff]
          %v6298 = vld [vmem:[#allocation6 + $0x38] sm:$0xff]
          %v6299 = vld [vmem:[#allocation6 + $0x40] sm:$0xff]
          %v6300 = vld [vmem:[#allocation6 + $0x48] sm:$0xff]
          %v6301 = vld [vmem:[#allocation6 + $0x50] sm:$0xff]
          %v6302 = vld [vmem:[#allocation6 + $0x58] sm:$0xff]
          %v6303 = vld [vmem:[#allocation6 + $0x60] sm:$0xff]
          %v6304 = vld [vmem:[#allocation6 + $0x68] sm:$0xff]
          %v6305 = vld [vmem:[#allocation6 + $0x70] sm:$0xff]
          %v6306 = vld [vmem:[#allocation6 + $0x78] sm:$0xff]
          %v6307 = vld [vmem:[#allocation6 + $0x80] sm:$0xff]
          %v6308 = vld [vmem:[#allocation6 + $0x88] sm:$0xff]
          %v6309 = vld [vmem:[#allocation6 + $0x90] sm:$0xff]
          %v6310 = vld [vmem:[#allocation6 + $0x98] sm:$0xff]
          %v6311 = vld [vmem:[#allocation6 + $0xa0] sm:$0xff]
          %v6312 = vld [vmem:[#allocation6 + $0xa8] sm:$0xff]
          %v6313 = vld [vmem:[#allocation6 + $0xb0] sm:$0xff]
          %v6314 = vld [vmem:[#allocation6 + $0xb8] sm:$0xff]
          %v6315 = vld [vmem:[#allocation6 + $0xc0] sm:$0xff]
          %v6316 = vld [vmem:[#allocation6 + $0xc8] sm:$0xff]
          %v6317 = vld [vmem:[#allocation6 + $0xd0] sm:$0xff]
          %v6318 = vld [vmem:[#allocation6 + $0xd8] sm:$0xff]
          %v6319 = vld [vmem:[#allocation6 + $0xe0] sm:$0xff]
          %v6320 = vld [vmem:[#allocation6 + $0xe8] sm:$0xff]
          %v6321 = vld [vmem:[#allocation6 + $0xf0] sm:$0xff]
          %v6322 = vld [vmem:[#allocation6 + $0xf8] sm:$0xff]
          %v6323 = vld [vmem:[#allocation6 + $0x100] sm:$0xff]
          %v6324 = vld [vmem:[#allocation6 + $0x108] sm:$0xff]
          %v6325 = vld [vmem:[#allocation6 + $0x110] sm:$0xff]
          %v6326 = vld [vmem:[#allocation6 + $0x118] sm:$0xff]
          %v6327 = vld [vmem:[#allocation6 + $0x120] sm:$0xff]
          %v6328 = vld [vmem:[#allocation6 + $0x128] sm:$0xff]
          %v6329 = vld [vmem:[#allocation6 + $0x130] sm:$0xff]
          %v6330 = vld [vmem:[#allocation6 + $0x138] sm:$0xff]
          %v6331 = vld [vmem:[#allocation6 + $0x140] sm:$0xff]
          %v6332 = vld [vmem:[#allocation6 + $0x148] sm:$0xff]
          %v6333 = vld [vmem:[#allocation6 + $0x150] sm:$0xff]
          %v6334 = vld [vmem:[#allocation6 + $0x158] sm:$0xff]
          %v6335 = vld [vmem:[#allocation6 + $0x160] sm:$0xff]
          %v6336 = vld [vmem:[#allocation6 + $0x168] sm:$0xff]
          %v6337 = vld [vmem:[#allocation6 + $0x170] sm:$0xff]
          %v6338 = vld [vmem:[#allocation6 + $0x178] sm:$0xff]
          %v6339 = vld [vmem:[#allocation6 + $0x180] sm:$0xff]
          %v6340 = vld [vmem:[#allocation6 + $0x188] sm:$0xff]
          %v6341 = vld [vmem:[#allocation6 + $0x190] sm:$0xff]
          %v6342 = vld [vmem:[#allocation6 + $0x198] sm:$0xff]
          %v6343 = vld [vmem:[#allocation6 + $0x1a0] sm:$0xff]
          %v6344 = vld [vmem:[#allocation6 + $0x1a8] sm:$0xff]
          %v6345 = vld [vmem:[#allocation6 + $0x1b0] sm:$0xff]
          %v6346 = vld [vmem:[#allocation6 + $0x1b8] sm:$0xff]
          %v6347 = vld [vmem:[#allocation6 + $0x1c0] sm:$0xff]
          %v6348 = vld [vmem:[#allocation6 + $0x1c8] sm:$0xff]
          %v6349 = vld [vmem:[#allocation6 + $0x1d0] sm:$0xff]
          %v6350 = vld [vmem:[#allocation6 + $0x1d8] sm:$0xff]
          %v6351 = vld [vmem:[#allocation6 + $0x1e0] sm:$0xff]
          %v6352 = vld [vmem:[#allocation6 + $0x1e8] sm:$0xff]
          %v6353 = vld [vmem:[#allocation6 + $0x1f0] sm:$0xff]
          %v6354 = vld [vmem:[#allocation6 + $0x1f8] sm:$0xff]
          %v6355 = vld [vmem:[%s10] sm:$0x3]
          %v6357 = vlaneseq
          %v6358 = vshrl.u32 %v6357, 7
          %v6359 = vsub.s32 0, %v6358
          %v6360 = vrot.slane %v6355, %v6359
          %v6361 = vlaneseq
          %v6362 = vshrl.u32 %v6361, 7
          %v6363 = vsub.s32 1, %v6362
          %v6364 = vrot.slane %v6355, %v6363
          %v6431 = vunpack.c.l.b16 %v6291
          %v6432 = vunpack.c.h.b16 %v6291
          %v6433 = vunpack.c.l.b16 %v6292
          %v6434 = vunpack.c.h.b16 %v6292
          %v6435 = vunpack.c.l.b16 %v6293
          %v6436 = vunpack.c.h.b16 %v6293
          %v6437 = vunpack.c.l.b16 %v6294
          %v6438 = vunpack.c.h.b16 %v6294
          %v6439 = vunpack.c.l.b16 %v6295
          %v6440 = vunpack.c.h.b16 %v6295
          %v6441 = vunpack.c.l.b16 %v6296
          %v6442 = vunpack.c.h.b16 %v6296
          %v6443 = vunpack.c.l.b16 %v6297
          %v6444 = vunpack.c.h.b16 %v6297
          %v6445 = vunpack.c.l.b16 %v6298
          %v6446 = vunpack.c.h.b16 %v6298
          %v6447 = vunpack.c.l.b16 %v6299
          %v6448 = vunpack.c.h.b16 %v6299
          %v6449 = vunpack.c.l.b16 %v6300
          %v6450 = vunpack.c.h.b16 %v6300
          %v6451 = vunpack.c.l.b16 %v6301
          %v6452 = vunpack.c.h.b16 %v6301
          %v6453 = vunpack.c.l.b16 %v6302
          %v6454 = vunpack.c.h.b16 %v6302
          %v6455 = vunpack.c.l.b16 %v6303
          %v6456 = vunpack.c.h.b16 %v6303
          %v6457 = vunpack.c.l.b16 %v6304
          %v6458 = vunpack.c.h.b16 %v6304
          %v6459 = vunpack.c.l.b16 %v6305
          %v6460 = vunpack.c.h.b16 %v6305
          %v6461 = vunpack.c.l.b16 %v6306
          %v6462 = vunpack.c.h.b16 %v6306
          %v6463 = vunpack.c.l.b16 %v6307
          %v6464 = vunpack.c.h.b16 %v6307
          %v6465 = vunpack.c.l.b16 %v6308
          %v6466 = vunpack.c.h.b16 %v6308
          %v6467 = vunpack.c.l.b16 %v6309
          %v6468 = vunpack.c.h.b16 %v6309
          %v6469 = vunpack.c.l.b16 %v6310
          %v6470 = vunpack.c.h.b16 %v6310
          %v6471 = vunpack.c.l.b16 %v6311
          %v6472 = vunpack.c.h.b16 %v6311
          %v6473 = vunpack.c.l.b16 %v6312
          %v6474 = vunpack.c.h.b16 %v6312
          %v6475 = vunpack.c.l.b16 %v6313
          %v6476 = vunpack.c.h.b16 %v6313
          %v6477 = vunpack.c.l.b16 %v6314
          %v6478 = vunpack.c.h.b16 %v6314
          %v6479 = vunpack.c.l.b16 %v6315
          %v6480 = vunpack.c.h.b16 %v6315
          %v6481 = vunpack.c.l.b16 %v6316
          %v6482 = vunpack.c.h.b16 %v6316
          %v6483 = vunpack.c.l.b16 %v6317
          %v6484 = vunpack.c.h.b16 %v6317
          %v6485 = vunpack.c.l.b16 %v6318
          %v6486 = vunpack.c.h.b16 %v6318
          %v6487 = vunpack.c.l.b16 %v6319
          %v6488 = vunpack.c.h.b16 %v6319
          %v6489 = vunpack.c.l.b16 %v6320
          %v6490 = vunpack.c.h.b16 %v6320
          %v6491 = vunpack.c.l.b16 %v6321
          %v6492 = vunpack.c.h.b16 %v6321
          %v6493 = vunpack.c.l.b16 %v6322
          %v6494 = vunpack.c.h.b16 %v6322
          %v6495 = vunpack.c.l.b16 %v6323
          %v6496 = vunpack.c.h.b16 %v6323
          %v6497 = vunpack.c.l.b16 %v6324
          %v6498 = vunpack.c.h.b16 %v6324
          %v6499 = vunpack.c.l.b16 %v6325
          %v6500 = vunpack.c.h.b16 %v6325
          %v6501 = vunpack.c.l.b16 %v6326
          %v6502 = vunpack.c.h.b16 %v6326
          %v6503 = vunpack.c.l.b16 %v6327
          %v6504 = vunpack.c.h.b16 %v6327
          %v6505 = vunpack.c.l.b16 %v6328
          %v6506 = vunpack.c.h.b16 %v6328
          %v6507 = vunpack.c.l.b16 %v6329
          %v6508 = vunpack.c.h.b16 %v6329
          %v6509 = vunpack.c.l.b16 %v6330
          %v6510 = vunpack.c.h.b16 %v6330
          %v6511 = vunpack.c.l.b16 %v6331
          %v6512 = vunpack.c.h.b16 %v6331
          %v6513 = vunpack.c.l.b16 %v6332
          %v6514 = vunpack.c.h.b16 %v6332
          %v6515 = vunpack.c.l.b16 %v6333
          %v6516 = vunpack.c.h.b16 %v6333
          %v6517 = vunpack.c.l.b16 %v6334
          %v6518 = vunpack.c.h.b16 %v6334
          %v6519 = vunpack.c.l.b16 %v6335
          %v6520 = vunpack.c.h.b16 %v6335
          %v6521 = vunpack.c.l.b16 %v6336
          %v6522 = vunpack.c.h.b16 %v6336
          %v6523 = vunpack.c.l.b16 %v6337
          %v6524 = vunpack.c.h.b16 %v6337
          %v6525 = vunpack.c.l.b16 %v6338
          %v6526 = vunpack.c.h.b16 %v6338
          %v6527 = vunpack.c.l.b16 %v6339
          %v6528 = vunpack.c.h.b16 %v6339
          %v6529 = vunpack.c.l.b16 %v6340
          %v6530 = vunpack.c.h.b16 %v6340
          %v6531 = vunpack.c.l.b16 %v6341
          %v6532 = vunpack.c.h.b16 %v6341
          %v6533 = vunpack.c.l.b16 %v6342
          %v6534 = vunpack.c.h.b16 %v6342
          %v6535 = vunpack.c.l.b16 %v6343
          %v6536 = vunpack.c.h.b16 %v6343
          %v6537 = vunpack.c.l.b16 %v6344
          %v6538 = vunpack.c.h.b16 %v6344
          %v6539 = vunpack.c.l.b16 %v6345
          %v6540 = vunpack.c.h.b16 %v6345
          %v6541 = vunpack.c.l.b16 %v6346
          %v6542 = vunpack.c.h.b16 %v6346
          %v6543 = vunpack.c.l.b16 %v6347
          %v6544 = vunpack.c.h.b16 %v6347
          %v6545 = vunpack.c.l.b16 %v6348
          %v6546 = vunpack.c.h.b16 %v6348
          %v6547 = vunpack.c.l.b16 %v6349
          %v6548 = vunpack.c.h.b16 %v6349
          %v6549 = vunpack.c.l.b16 %v6350
          %v6550 = vunpack.c.h.b16 %v6350
          %v6551 = vunpack.c.l.b16 %v6351
          %v6552 = vunpack.c.h.b16 %v6351
          %v6553 = vunpack.c.l.b16 %v6352
          %v6554 = vunpack.c.h.b16 %v6352
          %v6555 = vunpack.c.l.b16 %v6353
          %v6556 = vunpack.c.h.b16 %v6353
          %v6557 = vunpack.c.l.b16 %v6354
          %v6558 = vunpack.c.h.b16 %v6354
          %v6559 = vpack.c.b16 %v6433, %v6431
          %v6560 = vpack.c.b16 %v6434, %v6432
          %v6561 = vpack.c.b16 %v6437, %v6435
          %v6562 = vpack.c.b16 %v6438, %v6436
          %v6563 = vpack.c.b16 %v6441, %v6439
          %v6564 = vpack.c.b16 %v6442, %v6440
          %v6565 = vpack.c.b16 %v6445, %v6443
          %v6566 = vpack.c.b16 %v6446, %v6444
          %v6567 = vpack.c.b16 %v6449, %v6447
          %v6568 = vpack.c.b16 %v6450, %v6448
          %v6569 = vpack.c.b16 %v6453, %v6451
          %v6570 = vpack.c.b16 %v6454, %v6452
          %v6571 = vpack.c.b16 %v6457, %v6455
          %v6572 = vpack.c.b16 %v6458, %v6456
          %v6573 = vpack.c.b16 %v6461, %v6459
          %v6574 = vpack.c.b16 %v6462, %v6460
          %v6575 = vpack.c.b16 %v6465, %v6463
          %v6576 = vpack.c.b16 %v6466, %v6464
          %v6577 = vpack.c.b16 %v6469, %v6467
          %v6578 = vpack.c.b16 %v6470, %v6468
          %v6579 = vpack.c.b16 %v6473, %v6471
          %v6580 = vpack.c.b16 %v6474, %v6472
          %v6581 = vpack.c.b16 %v6477, %v6475
          %v6582 = vpack.c.b16 %v6478, %v6476
          %v6583 = vpack.c.b16 %v6481, %v6479
          %v6584 = vpack.c.b16 %v6482, %v6480
          %v6585 = vpack.c.b16 %v6485, %v6483
          %v6586 = vpack.c.b16 %v6486, %v6484
          %v6587 = vpack.c.b16 %v6489, %v6487
          %v6588 = vpack.c.b16 %v6490, %v6488
          %v6589 = vpack.c.b16 %v6493, %v6491
          %v6590 = vpack.c.b16 %v6494, %v6492
          %v6591 = vpack.c.b16 %v6497, %v6495
          %v6592 = vpack.c.b16 %v6498, %v6496
          %v6593 = vpack.c.b16 %v6501, %v6499
          %v6594 = vpack.c.b16 %v6502, %v6500
          %v6595 = vpack.c.b16 %v6505, %v6503
          %v6596 = vpack.c.b16 %v6506, %v6504
          %v6597 = vpack.c.b16 %v6509, %v6507
          %v6598 = vpack.c.b16 %v6510, %v6508
          %v6599 = vpack.c.b16 %v6513, %v6511
          %v6600 = vpack.c.b16 %v6514, %v6512
          %v6601 = vpack.c.b16 %v6517, %v6515
          %v6602 = vpack.c.b16 %v6518, %v6516
          %v6603 = vpack.c.b16 %v6521, %v6519
          %v6604 = vpack.c.b16 %v6522, %v6520
          %v6605 = vpack.c.b16 %v6525, %v6523
          %v6606 = vpack.c.b16 %v6526, %v6524
          %v6607 = vpack.c.b16 %v6529, %v6527
          %v6608 = vpack.c.b16 %v6530, %v6528
          %v6609 = vpack.c.b16 %v6533, %v6531
          %v6610 = vpack.c.b16 %v6534, %v6532
          %v6611 = vpack.c.b16 %v6537, %v6535
          %v6612 = vpack.c.b16 %v6538, %v6536
          %v6613 = vpack.c.b16 %v6541, %v6539
          %v6614 = vpack.c.b16 %v6542, %v6540
          %v6615 = vpack.c.b16 %v6545, %v6543
          %v6616 = vpack.c.b16 %v6546, %v6544
          %v6617 = vpack.c.b16 %v6549, %v6547
          %v6618 = vpack.c.b16 %v6550, %v6548
          %v6619 = vpack.c.b16 %v6553, %v6551
          %v6620 = vpack.c.b16 %v6554, %v6552
          %v6621 = vpack.c.b16 %v6557, %v6555
          %v6622 = vpack.c.b16 %v6558, %v6556
          %6687 = vmatprep.subr.bf16.mxu0 %v6574
          %6688 = vmatpush1.bf16.msra.mxu0 %v6573
          %6689 = vmatprep.subr.bf16.mxu0 %v6572
          %6690 = vmatpush1.bf16.msra.mxu0 %v6571
          %6691 = vmatprep.subr.bf16.mxu0 %v6570
          %6692 = vmatpush1.bf16.msra.mxu0 %v6569
          %6693 = vmatprep.subr.bf16.mxu0 %v6568
          %6694 = vmatpush1.bf16.msra.mxu0 %v6567
          %6695 = vmatprep.subr.bf16.mxu0 %v6566
          %6696 = vmatpush1.bf16.msra.mxu0 %v6565
          %6697 = vmatprep.subr.bf16.mxu0 %v6564
          %6698 = vmatpush1.bf16.msra.mxu0 %v6563
          %6699 = vmatprep.subr.bf16.mxu0 %v6562
          %6700 = vmatpush1.bf16.msra.mxu0 %v6561
          %6701 = vmatprep.subr.bf16.mxu0 %v6560
          %6702 = vmatpush1.bf16.msra.mxu0 %v6559
          %6703 = vmatprep.subr.bf16.mxu0 %v6590
          %6704 = vmatpush2.bf16.msra.mxu0 %v6589
          %6705 = vmatprep.subr.bf16.mxu0 %v6588
          %6706 = vmatpush2.bf16.msra.mxu0 %v6587
          %6707 = vmatprep.subr.bf16.mxu0 %v6586
          %6708 = vmatpush2.bf16.msra.mxu0 %v6585
          %6709 = vmatprep.subr.bf16.mxu0 %v6584
          %6710 = vmatpush2.bf16.msra.mxu0 %v6583
          %6711 = vmatprep.subr.bf16.mxu0 %v6582
          %6712 = vmatpush2.bf16.msra.mxu0 %v6581
          %6713 = vmatprep.subr.bf16.mxu0 %v6580
          %6714 = vmatpush2.bf16.msra.mxu0 %v6579
          %6715 = vmatprep.subr.bf16.mxu0 %v6578
          %6716 = vmatpush2.bf16.msra.mxu0 %v6577
          %6717 = vmatprep.subr.bf16.mxu0 %v6576
          %6718 = vmatpush2.bf16.msra.mxu0 %v6575
          %6719 = vmatprep.mubr.bf16.mxu0 %v6288
          %6720 = vmatmul.mubr.bf16.gmra.mxu0 %v6287
          %v6721 = vpop.f32.mrf.mxu0
          %v6722 = vadd.f32 %v6360, %v6721
          %v6723 = vpop.f32.mrf.mxu0
          %v6724 = vadd.f32 %v6364, %v6723
          %v6725 = vpop.f32.mrf.mxu0
          %v6726 = vpop.f32.mrf.mxu0
          %6727 = vdwg.mxu0
          %6728 = vmatprep.subr.bf16.mxu0 %v6606
          %6729 = vmatpush1.bf16.msra.mxu0 %v6605
          %6730 = vmatprep.subr.bf16.mxu0 %v6604
          %6731 = vmatpush1.bf16.msra.mxu0 %v6603
          %6732 = vmatprep.subr.bf16.mxu0 %v6602
          %6733 = vmatpush1.bf16.msra.mxu0 %v6601
          %6734 = vmatprep.subr.bf16.mxu0 %v6600
          %6735 = vmatpush1.bf16.msra.mxu0 %v6599
          %6736 = vmatprep.subr.bf16.mxu0 %v6598
          %6737 = vmatpush1.bf16.msra.mxu0 %v6597
          %6738 = vmatprep.subr.bf16.mxu0 %v6596
          %6739 = vmatpush1.bf16.msra.mxu0 %v6595
          %6740 = vmatprep.subr.bf16.mxu0 %v6594
          %6741 = vmatpush1.bf16.msra.mxu0 %v6593
          %6742 = vmatprep.subr.bf16.mxu0 %v6592
          %6743 = vmatpush1.bf16.msra.mxu0 %v6591
          %6744 = vmatprep.subr.bf16.mxu0 %v6622
          %6745 = vmatpush2.bf16.msra.mxu0 %v6621
          %6746 = vmatprep.subr.bf16.mxu0 %v6620
          %6747 = vmatpush2.bf16.msra.mxu0 %v6619
          %6748 = vmatprep.subr.bf16.mxu0 %v6618
          %6749 = vmatpush2.bf16.msra.mxu0 %v6617
          %6750 = vmatprep.subr.bf16.mxu0 %v6616
          %6751 = vmatpush2.bf16.msra.mxu0 %v6615
          %6752 = vmatprep.subr.bf16.mxu0 %v6614
          %6753 = vmatpush2.bf16.msra.mxu0 %v6613
          %6754 = vmatprep.subr.bf16.mxu0 %v6612
          %6755 = vmatpush2.bf16.msra.mxu0 %v6611
          %6756 = vmatprep.subr.bf16.mxu0 %v6610
          %6757 = vmatpush2.bf16.msra.mxu0 %v6609
          %6758 = vmatprep.subr.bf16.mxu0 %v6608
          %6759 = vmatpush2.bf16.msra.mxu0 %v6607
          %6760 = vmatprep.mubr.bf16.mxu0 %v6290
          %6761 = vmatmul.mubr.bf16.gmra.mxu0 %v6289
          %v6762 = vpop.f32.mrf.mxu0
          %v6763 = vadd.f32 %v6722, %v6762
          %v6764 = vpop.f32.mrf.mxu0
          %v6765 = vadd.f32 %v6724, %v6764
          %v6766 = vpop.f32.mrf.mxu0
          %v6767 = vpop.f32.mrf.mxu0
          %6768 = vdwg.mxu0
          %v6769 = vmax.f32 %v6763, 0.0
          %v6770 = vmax.f32 %v6765, 0.0
          %v6771 = vpack.c.bf16 %v6769, %v6769
          %v6772 = vpack.c.bf16 %v6770, %v6770
          %v6773 = vld [vmem:[#allocation8] sm:$0xff]
          %v6774 = vld [vmem:[#allocation8 + $0x8] sm:$0xff]
          %v6775 = vld [vmem:[#allocation8 + $0x10] sm:$0xff]
          %v6776 = vld [vmem:[#allocation8 + $0x18] sm:$0xff]
          %v6777 = vld [vmem:[#allocation8 + $0x20] sm:$0xff]
          %v6778 = vld [vmem:[#allocation8 + $0x28] sm:$0xff]
          %v6779 = vld [vmem:[#allocation8 + $0x30] sm:$0xff]
          %v6780 = vld [vmem:[#allocation8 + $0x38] sm:$0xff]
          %v6781 = vld [vmem:[#allocation8 + $0x40] sm:$0xff]
          %v6782 = vld [vmem:[#allocation8 + $0x48] sm:$0xff]
          %v6783 = vld [vmem:[#allocation8 + $0x50] sm:$0xff]
          %v6784 = vld [vmem:[#allocation8 + $0x58] sm:$0xff]
          %v6785 = vld [vmem:[#allocation8 + $0x60] sm:$0xff]
          %v6786 = vld [vmem:[#allocation8 + $0x68] sm:$0xff]
          %v6787 = vld [vmem:[#allocation8 + $0x70] sm:$0xff]
          %v6788 = vld [vmem:[#allocation8 + $0x78] sm:$0xff]
          %v6789 = vld [vmem:[#allocation8 + $0x80] sm:$0xff]
          %v6790 = vld [vmem:[#allocation8 + $0x88] sm:$0xff]
          %v6791 = vld [vmem:[#allocation8 + $0x90] sm:$0xff]
          %v6792 = vld [vmem:[#allocation8 + $0x98] sm:$0xff]
          %v6793 = vld [vmem:[#allocation8 + $0xa0] sm:$0xff]
          %v6794 = vld [vmem:[#allocation8 + $0xa8] sm:$0xff]
          %v6795 = vld [vmem:[#allocation8 + $0xb0] sm:$0xff]
          %v6796 = vld [vmem:[#allocation8 + $0xb8] sm:$0xff]
          %v6797 = vld [vmem:[#allocation8 + $0xc0] sm:$0xff]
          %v6798 = vld [vmem:[#allocation8 + $0xc8] sm:$0xff]
          %v6799 = vld [vmem:[#allocation8 + $0xd0] sm:$0xff]
          %v6800 = vld [vmem:[#allocation8 + $0xd8] sm:$0xff]
          %v6801 = vld [vmem:[#allocation8 + $0xe0] sm:$0xff]
          %v6802 = vld [vmem:[#allocation8 + $0xe8] sm:$0xff]
          %v6803 = vld [vmem:[#allocation8 + $0xf0] sm:$0xff]
          %v6804 = vld [vmem:[#allocation8 + $0xf8] sm:$0xff]
          %v6805 = vld [vmem:[%s12] sm:$0x3]
          %v6807 = vlaneseq
          %v6808 = vshrl.u32 %v6807, 7
          %v6809 = vsub.s32 0, %v6808
          %v6810 = vrot.slane %v6805, %v6809
          %v6811 = vlaneseq
          %v6812 = vshrl.u32 %v6811, 7
          %v6813 = vsub.s32 1, %v6812
          %v6814 = vrot.slane %v6805, %v6813
          %v6849 = vunpack.c.l.b16 %v6773
          %v6850 = vunpack.c.h.b16 %v6773
          %v6851 = vunpack.c.l.b16 %v6774
          %v6852 = vunpack.c.h.b16 %v6774
          %v6853 = vunpack.c.l.b16 %v6775
          %v6854 = vunpack.c.h.b16 %v6775
          %v6855 = vunpack.c.l.b16 %v6776
          %v6856 = vunpack.c.h.b16 %v6776
          %v6857 = vunpack.c.l.b16 %v6777
          %v6858 = vunpack.c.h.b16 %v6777
          %v6859 = vunpack.c.l.b16 %v6778
          %v6860 = vunpack.c.h.b16 %v6778
          %v6861 = vunpack.c.l.b16 %v6779
          %v6862 = vunpack.c.h.b16 %v6779
          %v6863 = vunpack.c.l.b16 %v6780
          %v6864 = vunpack.c.h.b16 %v6780
          %v6865 = vunpack.c.l.b16 %v6781
          %v6866 = vunpack.c.h.b16 %v6781
          %v6867 = vunpack.c.l.b16 %v6782
          %v6868 = vunpack.c.h.b16 %v6782
          %v6869 = vunpack.c.l.b16 %v6783
          %v6870 = vunpack.c.h.b16 %v6783
          %v6871 = vunpack.c.l.b16 %v6784
          %v6872 = vunpack.c.h.b16 %v6784
          %v6873 = vunpack.c.l.b16 %v6785
          %v6874 = vunpack.c.h.b16 %v6785
          %v6875 = vunpack.c.l.b16 %v6786
          %v6876 = vunpack.c.h.b16 %v6786
          %v6877 = vunpack.c.l.b16 %v6787
          %v6878 = vunpack.c.h.b16 %v6787
          %v6879 = vunpack.c.l.b16 %v6788
          %v6880 = vunpack.c.h.b16 %v6788
          %v6881 = vunpack.c.l.b16 %v6789
          %v6882 = vunpack.c.h.b16 %v6789
          %v6883 = vunpack.c.l.b16 %v6790
          %v6884 = vunpack.c.h.b16 %v6790
          %v6885 = vunpack.c.l.b16 %v6791
          %v6886 = vunpack.c.h.b16 %v6791
          %v6887 = vunpack.c.l.b16 %v6792
          %v6888 = vunpack.c.h.b16 %v6792
          %v6889 = vunpack.c.l.b16 %v6793
          %v6890 = vunpack.c.h.b16 %v6793
          %v6891 = vunpack.c.l.b16 %v6794
          %v6892 = vunpack.c.h.b16 %v6794
          %v6893 = vunpack.c.l.b16 %v6795
          %v6894 = vunpack.c.h.b16 %v6795
          %v6895 = vunpack.c.l.b16 %v6796
          %v6896 = vunpack.c.h.b16 %v6796
          %v6897 = vunpack.c.l.b16 %v6797
          %v6898 = vunpack.c.h.b16 %v6797
          %v6899 = vunpack.c.l.b16 %v6798
          %v6900 = vunpack.c.h.b16 %v6798
          %v6901 = vunpack.c.l.b16 %v6799
          %v6902 = vunpack.c.h.b16 %v6799
          %v6903 = vunpack.c.l.b16 %v6800
          %v6904 = vunpack.c.h.b16 %v6800
          %v6905 = vunpack.c.l.b16 %v6801
          %v6906 = vunpack.c.h.b16 %v6801
          %v6907 = vunpack.c.l.b16 %v6802
          %v6908 = vunpack.c.h.b16 %v6802
          %v6909 = vunpack.c.l.b16 %v6803
          %v6910 = vunpack.c.h.b16 %v6803
          %v6911 = vunpack.c.l.b16 %v6804
          %v6912 = vunpack.c.h.b16 %v6804
          %v6913 = vpack.c.b16 %v6851, %v6849
          %v6914 = vpack.c.b16 %v6852, %v6850
          %v6915 = vpack.c.b16 %v6855, %v6853
          %v6916 = vpack.c.b16 %v6856, %v6854
          %v6917 = vpack.c.b16 %v6859, %v6857
          %v6918 = vpack.c.b16 %v6860, %v6858
          %v6919 = vpack.c.b16 %v6863, %v6861
          %v6920 = vpack.c.b16 %v6864, %v6862
          %v6921 = vpack.c.b16 %v6867, %v6865
          %v6922 = vpack.c.b16 %v6868, %v6866
          %v6923 = vpack.c.b16 %v6871, %v6869
          %v6924 = vpack.c.b16 %v6872, %v6870
          %v6925 = vpack.c.b16 %v6875, %v6873
          %v6926 = vpack.c.b16 %v6876, %v6874
          %v6927 = vpack.c.b16 %v6879, %v6877
          %v6928 = vpack.c.b16 %v6880, %v6878
          %v6929 = vpack.c.b16 %v6883, %v6881
          %v6930 = vpack.c.b16 %v6884, %v6882
          %v6931 = vpack.c.b16 %v6887, %v6885
          %v6932 = vpack.c.b16 %v6888, %v6886
          %v6933 = vpack.c.b16 %v6891, %v6889
          %v6934 = vpack.c.b16 %v6892, %v6890
          %v6935 = vpack.c.b16 %v6895, %v6893
          %v6936 = vpack.c.b16 %v6896, %v6894
          %v6937 = vpack.c.b16 %v6899, %v6897
          %v6938 = vpack.c.b16 %v6900, %v6898
          %v6939 = vpack.c.b16 %v6903, %v6901
          %v6940 = vpack.c.b16 %v6904, %v6902
          %v6941 = vpack.c.b16 %v6907, %v6905
          %v6942 = vpack.c.b16 %v6908, %v6906
          %v6943 = vpack.c.b16 %v6911, %v6909
          %v6944 = vpack.c.b16 %v6912, %v6910
          %6977 = vmatprep.subr.bf16.mxu0 %v6928
          %6978 = vmatpush1.bf16.msra.mxu0 %v6927
          %6979 = vmatprep.subr.bf16.mxu0 %v6926
          %6980 = vmatpush1.bf16.msra.mxu0 %v6925
          %6981 = vmatprep.subr.bf16.mxu0 %v6924
          %6982 = vmatpush1.bf16.msra.mxu0 %v6923
          %6983 = vmatprep.subr.bf16.mxu0 %v6922
          %6984 = vmatpush1.bf16.msra.mxu0 %v6921
          %6985 = vmatprep.subr.bf16.mxu0 %v6920
          %6986 = vmatpush1.bf16.msra.mxu0 %v6919
          %6987 = vmatprep.subr.bf16.mxu0 %v6918
          %6988 = vmatpush1.bf16.msra.mxu0 %v6917
          %6989 = vmatprep.subr.bf16.mxu0 %v6916
          %6990 = vmatpush1.bf16.msra.mxu0 %v6915
          %6991 = vmatprep.subr.bf16.mxu0 %v6914
          %6992 = vmatpush1.bf16.msra.mxu0 %v6913
          %6993 = vmatprep.subr.bf16.mxu0 %v6944
          %6994 = vmatpush2.bf16.msra.mxu0 %v6943
          %6995 = vmatprep.subr.bf16.mxu0 %v6942
          %6996 = vmatpush2.bf16.msra.mxu0 %v6941
          %6997 = vmatprep.subr.bf16.mxu0 %v6940
          %6998 = vmatpush2.bf16.msra.mxu0 %v6939
          %6999 = vmatprep.subr.bf16.mxu0 %v6938
          %7000 = vmatpush2.bf16.msra.mxu0 %v6937
          %7001 = vmatprep.subr.bf16.mxu0 %v6936
          %7002 = vmatpush2.bf16.msra.mxu0 %v6935
          %7003 = vmatprep.subr.bf16.mxu0 %v6934
          %7004 = vmatpush2.bf16.msra.mxu0 %v6933
          %7005 = vmatprep.subr.bf16.mxu0 %v6932
          %7006 = vmatpush2.bf16.msra.mxu0 %v6931
          %7007 = vmatprep.subr.bf16.mxu0 %v6930
          %7008 = vmatpush2.bf16.msra.mxu0 %v6929
          %7009 = vmatprep.mubr.bf16.mxu0 %v6772
          %7010 = vmatmul.mubr.bf16.gmra.mxu0 %v6771
          %v7011 = vpop.f32.mrf.mxu0
          %v7012 = vadd.f32 %v6810, %v7011
          %v7013 = vpop.f32.mrf.mxu0
          %v7014 = vadd.f32 %v6814, %v7013
          %v7015 = vpop.f32.mrf.mxu0
          %v7016 = vpop.f32.mrf.mxu0
          %7017 = vdwg.mxu0
          %v7020 = vcombine.low %v7012, %v7014
          %v7022 = vunpack.c.l.s4 1966171168
          %v7023 = vunpack.c.0.s8 %v7022
          %v7024 = vlaneseq
          %v7025 = vshrl.u32 %v7024, 7
          %v7026 = vsub.s32 %v7023, %v7025
          %v7027 = vrot.slane %v7020, %v7026
          %v7028 = vcombine.high %v7027, %v7027
          %v7030 = vunpack.c.l.s4 1966171168
          %v7031 = vunpack.c.0.s8 %v7030
          %v7032 = vlaneseq
          %v7033 = vshrl.u32 %v7032, 7
          %v7034 = vsub.s32 %v7031, %v7033
          %v7035 = vrot.slane %v7027, %v7034
          %v7037 = vunpack.c.l.s4 1966171168
          %v7038 = vunpack.c.0.s8 %v7037
          %v7039 = vlaneseq
          %v7040 = vshrl.u32 %v7039, 7
          %v7041 = vsub.s32 %v7038, %v7040
          %v7042 = vrot.slane %v7028, %v7041
          %v7045 = vlaneseq
          %vm7046 = vcmp.ge.s32.totalorder %v7045, 0
          %vm7047 = vcmp.lt.s32.totalorder %v7045, 256
          %vm7048 = vmand %vm7046, %vm7047
          %7049 = vst.msk [vmem:[%s503] sm:$0x3] %vm7048, %v7035
          %7050 = vst.msk [vmem:[%s503 + $0x2] sm:$0x3] %vm7048, %v7042
        $region92: #{tpu_custom_call.1} parent=71 // pred_fallthru
          _
        %s7051 = sand.u32 %s329, 1
        %s7052 = scalar_lea.sflag [#allocation5], %s7051
        %s7053 = sand.u32 %s329, 1
        %s7054 = smul.addr %s7053, 4
        %s7055 = scalar_lea.vmem [#allocation9], %s7054
        // Predicated region
        $region93: #{tpu_custom_call.1} parent=71 // pred_check
          %p7056 = pneg %p339
        $region94: #{tpu_custom_call.1} parent=71 // pred_check_branch
          %7058 = sbr.rel (%p7056) target = $region96
        $region95: #{tpu_custom_call.1} parent=71 // pred_region
          %s7059 = smul.u32 2, %s33
          %s7061 = ssub.s32 64, 64
          %7062 = vsyncadd %s7052, %s7061
          %s7063 = smul.addr %s7059, 2
          %s7064 = smul.addr %s7063, 16
          %s7065 = scalar_lea.hbm %s13, %s7064
          %s7066 = sshll.u32 %s7055, 4
          %s7067 = int_to_ptr.vmem [resolvable:$true] %s7066
          %7072 = dma.vmem_to_hbm [thread:$0]  %s7067, 64, %s7065, %s7052, 32, 32, 2
        $region96: #{tpu_custom_call.1} parent=71 // pred_fallthru
          _
      $region72: #{tpu_custom_call.1} parent=5 // pred_fallthru
        _
      %p7073 = scmp.le.s32.totalorder 2, %s24
      // Predicated region
      $region97: #{tpu_custom_call.1} parent=5 // pred_check
        %p7074 = pneg %p7073
      $region98: #{tpu_custom_call.1} parent=5 // pred_check_branch
        %7076 = sbr.rel (%p7074) target = $region100
      $region99: #{tpu_custom_call.1} parent=5 // pred_region
        %s7077 = ssub.s32 %s24, 2
        // Predicated region
        $region101: #{tpu_custom_call.1} parent=99 // pred_check
          %p7078 = pneg %p345
        $region102: #{tpu_custom_call.1} parent=99 // pred_check_branch
          %7080 = sbr.rel (%p7078) target = $region104
        $region103: #{tpu_custom_call.1} parent=99 // pred_region
          %s7081 = sand.u32 %s330, 1
          %s7082 = scalar_lea.sflag [#allocation5], %s7081
          %s7083 = sand.u32 %s330, 1
          %s7084 = smul.addr %s7083, 4
          %s7085 = scalar_lea.vmem [#allocation9], %s7084
          %7086 = dma.done %s7082, 64
        $region104: #{tpu_custom_call.1} parent=99 // pred_fallthru
          _
      $region100: #{tpu_custom_call.1} parent=5 // pred_fallthru
        _
    $region6: #{tpu_custom_call.1} parent=1 // loop_footer
      %s28 = sadd.s32 1, %s24
    $region7: #{tpu_custom_call.1} parent=1 // loop_footer_branch
      %23 = sbr.rel target = $region3
    $region8: #{tpu_custom_call.1} parent=1 // loop_exit
      _
    %7087 = vsyncpa [#allocation4], 1
    %s7088 = scalar_lea.sflag [#allocation4], 1
    %7089 = vsyncpa %s7088, 1
    %7090 = vsyncpa [#allocation7], 1
    %7091 = vsyncpa [#allocation5], 1
    %s7092 = scalar_lea.sflag [#allocation5], 1
    %7093 = vsyncpa %s7092, 1

</llo_original>
